<compile_context>
chip_gen: v5e
topology: v5e:2x2
jax: 0.10.0
libtpu: 0.0.40
codegen_flags: <defaults>
</compile_context>

<pallas_src>
import functools

import jax
import jax.numpy as jnp
from jax.experimental import pallas as pl
from jax.experimental.pallas import tpu as pltpu

_NEG_INF = -1e30  # pad-lane bias: exp(-1e30 - m) == 0, never produces NaN


def mlp_kernel(x_ref, w1_ref, b1_ref, w2_ref, b2_ref, o_ref, *, compute_dtype):
    # layer1 = relu(x @ W1 + b1)   (MXU matmul, f32 accumulate; VPU bias+ReLU)
    x = x_ref[...].astype(compute_dtype)
    w1 = w1_ref[...].astype(compute_dtype)
    h = jnp.dot(x, w1, preferred_element_type=jnp.float32)
    h = jnp.maximum(h + b1_ref[...], 0.0)

    # layer2 = h @ W2p + b2p   (W2/b2 are lane-padded to 128; pad bias = -1e30)
    w2 = w2_ref[...].astype(compute_dtype)
    logits = jnp.dot(h.astype(compute_dtype), w2, preferred_element_type=jnp.float32)
    logits = logits + b2_ref[...]

    # softmax over dim=1; padded lanes contribute exp(-1e30 - m) == 0 to the sum.
    m = jnp.max(logits, axis=1, keepdims=True)
    e = jnp.exp(logits - m)
    denom = jnp.sum(e, axis=1, keepdims=True)
    o_ref[...] = (e * pl.reciprocal(denom, approx=False)).astype(o_ref.dtype)


def mymodel_forward(x, w1, b1, w2, b2, *, tm=512, compute_dtype=jnp.float32):
    B, D_in = x.shape
    H = w1.shape[1]
    D_out = w2.shape[1]

    # Batch tile: multiple of 8, no larger than (rounded-up) B; pad B up to a multiple.
    tm_eff = min(int(tm), pl.cdiv(B, 8) * 8)
    tm_eff = max(8, (tm_eff // 8) * 8)
    B_pad = pl.cdiv(B, tm_eff) * tm_eff

    # Lane-dense output: pad the output-feature axis to 128 lanes.
    DO_pad = pl.cdiv(D_out, 128) * 128

    x_p = x if B_pad == B else jnp.pad(x, ((0, B_pad - B), (0, 0)))
    b1_2d = b1.reshape(1, H).astype(jnp.float32)
    w2_p = jnp.pad(w2, ((0, 0), (0, DO_pad - D_out)))
    b2_p = jnp.pad(b2.reshape(1, D_out).astype(jnp.float32),
                   ((0, 0), (0, DO_pad - D_out)), constant_values=_NEG_INF)

    grid = (B_pad // tm_eff,)

    itemsize = 4
    cost = pl.CostEstimate(
        flops=2 * B_pad * (D_in * H + H * DO_pad),
        transcendentals=B_pad * (DO_pad + 1),  # exp lanes + reciprocal
        bytes_accessed=itemsize * (B_pad * D_in + D_in * H + H
                                   + H * DO_pad + DO_pad + B_pad * DO_pad),
    )

    out = pl.pallas_call(
        functools.partial(mlp_kernel, compute_dtype=compute_dtype),
        out_shape=jax.ShapeDtypeStruct((B_pad, DO_pad), jnp.float32),
        grid_spec=pltpu.PrefetchScalarGridSpec(
            num_scalar_prefetch=0,
            grid=grid,
            in_specs=[
                pl.BlockSpec((tm_eff, D_in), lambda i: (i, 0)),   # x row tile
                pl.BlockSpec((D_in, H), lambda i: (0, 0)),        # W1 resident
                pl.BlockSpec((1, H), lambda i: (0, 0)),           # b1 resident
                pl.BlockSpec((H, DO_pad), lambda i: (0, 0)),      # W2 (lane-padded)
                pl.BlockSpec((1, DO_pad), lambda i: (0, 0)),      # b2 (lane-padded)
            ],
            out_specs=pl.BlockSpec((tm_eff, DO_pad), lambda i: (i, 0)),
        ),
        compiler_params=pltpu.CompilerParams(
            dimension_semantics=("parallel",),
            vmem_limit_bytes=64 * 1024 * 1024,
        ),
        cost_estimate=cost,
    )(x_p, w1, b1_2d, w2_p, b2_p)

    return out[:B, :D_out]


if __name__ == "__main__":
    # Small shapes consistent with the module (input_dims x hidden_dims x output_dims),
    # deliberately unaligned (B=1000, D_in=400, H=30, D_out=5) to exercise the
    # tail-row padding and the lane-padded output path. 2 grid steps (v7x: both TCs busy).
    B, D_in, H, D_out = 1000, 400, 30, 5

    key = jax.random.PRNGKey(0)
    kx, kw1, kw2 = jax.random.split(key, 3)
    x = jax.random.normal(kx, (B, D_in), dtype=jnp.float32)
    W1 = jax.random.normal(kw1, (D_in, H), dtype=jnp.float32) * 0.1
    b1 = jnp.zeros((H,), dtype=jnp.float32)
    W2 = jax.random.normal(kw2, (H, D_out), dtype=jnp.float32) * 0.1
    b2 = jnp.zeros((D_out,), dtype=jnp.float32)

    out = mymodel_forward(x, W1, b1, W2, b2, tm=512)
    out = jax.block_until_ready(out)

    # Reference check against plain-JAX forward (matches the PyTorch module).
    h_ref = jnp.maximum(x @ W1 + b1, 0.0)
    logits_ref = h_ref @ W2 + b2
    e_ref = jnp.exp(logits_ref - logits_ref.max(axis=1, keepdims=True))
    ref = e_ref / e_ref.sum(axis=1, keepdims=True)

    assert out.shape == (B, D_out), out.shape
    assert jnp.allclose(out, ref, atol=1e-5, rtol=1e-5), float(jnp.max(jnp.abs(out - ref)))

    print("KERNEL_OK")
</pallas_src>

<mosaic_0001>
module attributes {stable_mosaic.version = 11 : i64} {
  func.func @mlp_kernel(%arg0: i32, %arg1: memref<512x400xf32, #tpu.memory_space<vmem>>, %arg2: memref<400x30xf32, #tpu.memory_space<vmem>>, %arg3: memref<1x30xf32, #tpu.memory_space<vmem>>, %arg4: memref<30x128xf32, #tpu.memory_space<vmem>>, %arg5: memref<1x128xf32, #tpu.memory_space<vmem>>, %arg6: memref<512x128xf32, #tpu.memory_space<vmem>>) attributes {dimension_semantics = [#tpu.dimension_semantics<parallel>], iteration_bounds = array<i64: 2>, scalar_prefetch = 0 : i64, scratch_operands = 0 : i64, tpu.core_type = #tpu.core_type<tc>, window_params = [{transform_indices = @transform_0, window_bounds = array<i64: 512, 400>}, {pipeline_mode = #tpu.pipeline_mode<synchronous>, transform_indices = @transform_1, window_bounds = array<i64: 400, 30>}, {pipeline_mode = #tpu.pipeline_mode<synchronous>, transform_indices = @transform_2, window_bounds = array<i64: 1, 30>}, {pipeline_mode = #tpu.pipeline_mode<synchronous>, transform_indices = @transform_3, window_bounds = array<i64: 30, 128>}, {pipeline_mode = #tpu.pipeline_mode<synchronous>, transform_indices = @transform_4, window_bounds = array<i64: 1, 128>}, {transform_indices = @transform_5, window_bounds = array<i64: 512, 128>}]} {
    %c0 = arith.constant 0 : index
    %c0_0 = arith.constant 0 : index
    %0 = vector.load %arg1[%c0, %c0_0] : memref<512x400xf32, #tpu.memory_space<vmem>>, vector<512x400xf32>
    %c0_1 = arith.constant 0 : index
    %c0_2 = arith.constant 0 : index
    %1 = vector.load %arg2[%c0_1, %c0_2] : memref<400x30xf32, #tpu.memory_space<vmem>>, vector<400x30xf32>
    %cst = arith.constant dense<0.000000e+00> : vector<512x30xf32>
    %2 = tpu.matmul %0, %1, %cst {dimension_numbers = #tpu.dot_dimension_numbers<[1], [0], [0], [1], [0, 0, 1, 1], [], []>} : vector<512x400xf32>, vector<400x30xf32>, vector<512x30xf32> -> vector<512x30xf32>
    %c0_3 = arith.constant 0 : index
    %c0_4 = arith.constant 0 : index
    %3 = vector.load %arg3[%c0_3, %c0_4] : memref<1x30xf32, #tpu.memory_space<vmem>>, vector<1x30xf32>
    %4 = vector.broadcast %3 : vector<1x30xf32> to vector<512x30xf32>
    %5 = arith.addf %2, %4 : vector<512x30xf32>
    %cst_5 = arith.constant 0.000000e+00 : f32
    %6 = vector.broadcast %cst_5 : f32 to vector<512x30xf32>
    %7 = arith.maximumf %5, %6 : vector<512x30xf32>
    %c0_6 = arith.constant 0 : index
    %c0_7 = arith.constant 0 : index
    %8 = vector.load %arg4[%c0_6, %c0_7] : memref<30x128xf32, #tpu.memory_space<vmem>>, vector<30x128xf32>
    %cst_8 = arith.constant dense<0.000000e+00> : vector<512x128xf32>
    %9 = tpu.matmul %7, %8, %cst_8 {dimension_numbers = #tpu.dot_dimension_numbers<[1], [0], [0], [1], [0, 0, 1, 1], [], []>} : vector<512x30xf32>, vector<30x128xf32>, vector<512x128xf32> -> vector<512x128xf32>
    %c0_9 = arith.constant 0 : index
    %c0_10 = arith.constant 0 : index
    %10 = vector.load %arg5[%c0_9, %c0_10] : memref<1x128xf32, #tpu.memory_space<vmem>>, vector<1x128xf32>
    %11 = vector.broadcast %10 : vector<1x128xf32> to vector<512x128xf32>
    %12 = arith.addf %9, %11 : vector<512x128xf32>
    %cst_11 = arith.constant dense<0xFF800000> : vector<512xf32>
    %13 = vector.multi_reduction <maximumf>, %12, %cst_11 [1] : vector<512x128xf32> to vector<512xf32>
    %14 = vector.shape_cast %13 : vector<512xf32> to vector<512x1xf32>
    %15 = vector.broadcast %14 : vector<512x1xf32> to vector<512x128xf32>
    %16 = arith.subf %12, %15 : vector<512x128xf32>
    %17 = math.exp %16 : vector<512x128xf32>
    %cst_12 = arith.constant dense<0.000000e+00> : vector<512xf32>
    %18 = vector.multi_reduction <add>, %17, %cst_12 [1] : vector<512x128xf32> to vector<512xf32>
    %19 = vector.shape_cast %18 : vector<512xf32> to vector<512x1xf32>
    %20 = tpu.reciprocal %19 : vector<512x1xf32> -> vector<512x1xf32>
    %21 = vector.broadcast %20 : vector<512x1xf32> to vector<512x128xf32>
    %22 = arith.mulf %17, %21 : vector<512x128xf32>
    %c0_13 = arith.constant 0 : index
    %c0_14 = arith.constant 0 : index
    %23 = vector.load %arg6[%c0_13, %c0_14] : memref<512x128xf32, #tpu.memory_space<vmem>>, vector<512x128xf32>
    tpu.vector_store %arg6[%c0_13, %c0_14], %22 {strides = array<i32>} : memref<512x128xf32, #tpu.memory_space<vmem>>, vector<512x128xf32>,
    return
  }
  func.func @transform_0(%arg0: i32) -> (i32, i32) {
    %c0_i32 = arith.constant 0 : i32
    %c0_i32_0 = arith.constant 0 : i32
    return %arg0, %c0_i32 : i32, i32
  }
  func.func @transform_1(%arg0: i32) -> (i32, i32) {
    %c0_i32 = arith.constant 0 : i32
    %c0_i32_0 = arith.constant 0 : i32
    %c0_i32_1 = arith.constant 0 : i32
    return %c0_i32, %c0_i32_0 : i32, i32
  }
  func.func @transform_2(%arg0: i32) -> (i32, i32) {
    %c0_i32 = arith.constant 0 : i32
    %c0_i32_0 = arith.constant 0 : i32
    %c0_i32_1 = arith.constant 0 : i32
    return %c0_i32, %c0_i32_0 : i32, i32
  }
  func.func @transform_3(%arg0: i32) -> (i32, i32) {
    %c0_i32 = arith.constant 0 : i32
    %c0_i32_0 = arith.constant 0 : i32
    %c0_i32_1 = arith.constant 0 : i32
    return %c0_i32, %c0_i32_0 : i32, i32
  }
  func.func @transform_4(%arg0: i32) -> (i32, i32) {
    %c0_i32 = arith.constant 0 : i32
    %c0_i32_0 = arith.constant 0 : i32
    %c0_i32_1 = arith.constant 0 : i32
    return %c0_i32, %c0_i32_0 : i32, i32
  }
  func.func @transform_5(%arg0: i32) -> (i32, i32) {
    %c0_i32 = arith.constant 0 : i32
    %c0_i32_0 = arith.constant 0 : i32
    return %arg0, %c0_i32 : i32, i32
  }
}

</mosaic_0001>

<llo_original>
// kernel: tpu_custom_call.1
$region0: #{tpu_custom_call.1}
  #allocation0 [shape = 'u32[]', space=smem, size = 0x4, offset = 0x4, fixed_abs, tag = 'smem constant byte address 0x4 - core index']
  #allocation1 [shape = 'u32[72,128]{1,0:T(1,128)}', space=vmem, size = 0x9000, scoped, tag = 'internal scratch']
  %s0 = inlined_call_operand.vmem [shape: f32[1024,400], index: 0, kind: input, shape index: {}]
  %s1 = inlined_call_operand.vmem [shape: f32[400,30], index: 1, kind: input, shape index: {}]
  %s2 = inlined_call_operand.vmem [shape: f32[1,30], index: 2, kind: input, shape index: {}]
  %s3 = inlined_call_operand.vmem [shape: f32[30,128], index: 3, kind: input, shape index: {}]
  %s4 = inlined_call_operand.vmem [shape: f32[1,128], index: 4, kind: input, shape index: {}]
  %s5 = inlined_call_operand.hbm [shape: f32[1024,128], index: 5, kind: output, shape index: {}]
  %s6 = sld [smem:[#allocation0]]
  $region53: #{tpu_custom_call.1} parent=0
    _
  %s8 = ssub.s32 1, %s6
  %s9 = scalar_select 0, %s8, %s6
  $region1: #{tpu_custom_call.1} parent=0
    #allocation2 [shape = 'u8[524288]{0}', space=vmem, size = 0x80000, scoped, tag = 'output window, operand 0']
    #allocation3 [shape = 's32[2]{0}', space=sflag, size = 0x8, scoped, tag = 'scoped memory for tpu_custom_call.1']
    %10 = vsyncpa [#allocation3], 0
    %s11 = scalar_lea.sflag [#allocation3], 1
    %12 = vsyncpa %s11, 0
    loop: start=0, step=1, limit=4
    $region2: #{tpu_custom_call.1} parent=1 // loop_pre_header
      _
    $region3: #{tpu_custom_call.1} parent=1 // loop_header
      %s14 = sphi 0, %s18
      %p15 = scmp.ge.s32.totalorder %s14, 4
      %s24 = sphi 0, %s26
      %s27 = sphi 0, %s24
      %s28 = sphi 0, %s27
      %s44 = sphi 0, %s28
      %s48 = sphi 0, %s48
      %s50 = sphi 0, %s48
      %s51 = sphi 0, %s50
      %s65 = sphi 0, %s51
      %s69 = sphi 0, %s69
      %s71 = sphi 0, %s69
      %s72 = sphi 0, %s71
      %s86 = sphi 0, %s72
      %s90 = sphi 0, %s90
      %s92 = sphi 0, %s90
      %s93 = sphi 0, %s92
      %s107 = sphi 0, %s93
      %s111 = sphi 0, %s111
      %s113 = sphi 0, %s111
      %s114 = sphi 0, %s113
      %s128 = sphi 0, %s114
      %s134 = sphi 0, %s136
      %s137 = sphi 0, %s134
      %s138 = sphi 0, %s137
      %s154 = sphi 0, %s138
    $region4: #{tpu_custom_call.1} parent=1 // loop_header_branch
      %17 = sbr.rel (%p15) target = $region8
    $region5: #{tpu_custom_call.1} parent=1 // loop_body
      %s19 = ssub.s32 %s14, 1
      %s20 = ssub.s32 %s14, 2
      %s21 = sadd.s32 %s14, 1
      %s22 = ssub.s32 %s14, %s21
      %p23 = scmp.eq.s32.totalorder %s22, 0
      %s25 = sadd.s32 %s24, 1
      %s26 = scalar_select %p23, %s24, %s25
      %p29 = pneg %p23
      %p30 = scmp.eq.s32.totalorder %s14, 1
      %p31 = por %p29, %p30
      %p32 = scmp.ne.s32.totalorder %s24, %s27
      %p33 = scmp.eq.s32.totalorder %s14, 0
      %p34 = por %p32, %p33
      %p35 = scmp.ne.s32.totalorder %s24, %s27
      %p36 = scmp.eq.s32.totalorder %s19, 1
      %p37 = por %p35, %p36
      %p38 = scmp.ne.s32.totalorder %s27, %s28
      %p39 = scmp.eq.s32.totalorder %s19, 0
      %p40 = por %p38, %p39
      %p41 = scmp.ne.s32.totalorder %s27, %s28
      %p42 = scmp.eq.s32.totalorder %s20, 1
      %p43 = por %p41, %p42
      %p45 = scmp.ne.s32.totalorder %s28, %s44
      %p46 = scmp.eq.s32.totalorder %s20, 0
      %p47 = por %p45, %p46
      %s49 = sadd.s32 %s48, 1
      %p52 = scmp.eq.s32.totalorder %s14, 1
      %p53 = scmp.ne.s32.totalorder %s48, %s50
      %p54 = scmp.eq.s32.totalorder %s14, 0
      %p55 = por %p53, %p54
      %p56 = scmp.ne.s32.totalorder %s48, %s50
      %p57 = scmp.eq.s32.totalorder %s19, 1
      %p58 = por %p56, %p57
      %p59 = scmp.ne.s32.totalorder %s50, %s51
      %p60 = scmp.eq.s32.totalorder %s19, 0
      %p61 = por %p59, %p60
      %p62 = scmp.ne.s32.totalorder %s50, %s51
      %p63 = scmp.eq.s32.totalorder %s20, 1
      %p64 = por %p62, %p63
      %p66 = scmp.ne.s32.totalorder %s51, %s65
      %p67 = scmp.eq.s32.totalorder %s20, 0
      %p68 = por %p66, %p67
      %s70 = sadd.s32 %s69, 1
      %p73 = scmp.eq.s32.totalorder %s14, 1
      %p74 = scmp.ne.s32.totalorder %s69, %s71
      %p75 = scmp.eq.s32.totalorder %s14, 0
      %p76 = por %p74, %p75
      %p77 = scmp.ne.s32.totalorder %s69, %s71
      %p78 = scmp.eq.s32.totalorder %s19, 1
      %p79 = por %p77, %p78
      %p80 = scmp.ne.s32.totalorder %s71, %s72
      %p81 = scmp.eq.s32.totalorder %s19, 0
      %p82 = por %p80, %p81
      %p83 = scmp.ne.s32.totalorder %s71, %s72
      %p84 = scmp.eq.s32.totalorder %s20, 1
      %p85 = por %p83, %p84
      %p87 = scmp.ne.s32.totalorder %s72, %s86
      %p88 = scmp.eq.s32.totalorder %s20, 0
      %p89 = por %p87, %p88
      %s91 = sadd.s32 %s90, 1
      %p94 = scmp.eq.s32.totalorder %s14, 1
      %p95 = scmp.ne.s32.totalorder %s90, %s92
      %p96 = scmp.eq.s32.totalorder %s14, 0
      %p97 = por %p95, %p96
      %p98 = scmp.ne.s32.totalorder %s90, %s92
      %p99 = scmp.eq.s32.totalorder %s19, 1
      %p100 = por %p98, %p99
      %p101 = scmp.ne.s32.totalorder %s92, %s93
      %p102 = scmp.eq.s32.totalorder %s19, 0
      %p103 = por %p101, %p102
      %p104 = scmp.ne.s32.totalorder %s92, %s93
      %p105 = scmp.eq.s32.totalorder %s20, 1
      %p106 = por %p104, %p105
      %p108 = scmp.ne.s32.totalorder %s93, %s107
      %p109 = scmp.eq.s32.totalorder %s20, 0
      %p110 = por %p108, %p109
      %s112 = sadd.s32 %s111, 1
      %p115 = scmp.eq.s32.totalorder %s14, 1
      %p116 = scmp.ne.s32.totalorder %s111, %s113
      %p117 = scmp.eq.s32.totalorder %s14, 0
      %p118 = por %p116, %p117
      %p119 = scmp.ne.s32.totalorder %s111, %s113
      %p120 = scmp.eq.s32.totalorder %s19, 1
      %p121 = por %p119, %p120
      %p122 = scmp.ne.s32.totalorder %s113, %s114
      %p123 = scmp.eq.s32.totalorder %s19, 0
      %p124 = por %p122, %p123
      %p125 = scmp.ne.s32.totalorder %s113, %s114
      %p126 = scmp.eq.s32.totalorder %s20, 1
      %p127 = por %p125, %p126
      %p129 = scmp.ne.s32.totalorder %s114, %s128
      %p130 = scmp.eq.s32.totalorder %s20, 0
      %p131 = por %p129, %p130
      %s132 = ssub.s32 %s14, %s21
      %p133 = scmp.eq.s32.totalorder %s132, 0
      %s135 = sadd.s32 %s134, 1
      %s136 = scalar_select %p133, %s134, %s135
      %p139 = pneg %p133
      %p140 = scmp.eq.s32.totalorder %s14, 1
      %p141 = por %p139, %p140
      %p142 = scmp.ne.s32.totalorder %s134, %s137
      %p143 = scmp.eq.s32.totalorder %s14, 0
      %p144 = por %p142, %p143
      %p145 = scmp.ne.s32.totalorder %s134, %s137
      %p146 = scmp.eq.s32.totalorder %s19, 1
      %p147 = por %p145, %p146
      %p148 = scmp.ne.s32.totalorder %s137, %s138
      %p149 = scmp.eq.s32.totalorder %s19, 0
      %p150 = por %p148, %p149
      %p151 = scmp.ne.s32.totalorder %s137, %s138
      %p152 = scmp.eq.s32.totalorder %s20, 1
      %p153 = por %p151, %p152
      %p155 = scmp.ne.s32.totalorder %s138, %s154
      %p156 = scmp.eq.s32.totalorder %s20, 0
      %p157 = por %p155, %p156
      %p158 = scmp.le.s32.totalorder 1, %s14
      %p159 = scmp.lt.s32.totalorder %s14, 3
      %p160 = pnand %p158, %p159
      %p161 = pneg %p160
      // Predicated region
      $region9: #{tpu_custom_call.1} parent=5 // pred_check
        _
      $region10: #{tpu_custom_call.1} parent=5 // pred_check_branch
        %163 = sbr.rel (%p160) target = $region12
      $region11: #{tpu_custom_call.1} parent=5 // pred_region
        %s164 = ssub.s32 %s14, 1
        // Predicated region
        $region13: #{tpu_custom_call.1} parent=11 // pred_check
          %p165 = pneg %p61
        $region14: #{tpu_custom_call.1} parent=11 // pred_check_branch
          %167 = sbr.rel (%p165) target = $region16
        $region15: #{tpu_custom_call.1} parent=11 // pred_region
          _
        $region16: #{tpu_custom_call.1} parent=11 // pred_fallthru
          _
        // Predicated region
        $region17: #{tpu_custom_call.1} parent=11 // pred_check
          %p168 = pneg %p82
        $region18: #{tpu_custom_call.1} parent=11 // pred_check_branch
          %170 = sbr.rel (%p168) target = $region20
        $region19: #{tpu_custom_call.1} parent=11 // pred_region
          _
        $region20: #{tpu_custom_call.1} parent=11 // pred_fallthru
          _
        // Predicated region
        $region21: #{tpu_custom_call.1} parent=11 // pred_check
          %p171 = pneg %p103
        $region22: #{tpu_custom_call.1} parent=11 // pred_check_branch
          %173 = sbr.rel (%p171) target = $region24
        $region23: #{tpu_custom_call.1} parent=11 // pred_region
          _
        $region24: #{tpu_custom_call.1} parent=11 // pred_fallthru
          _
        // Predicated region
        $region25: #{tpu_custom_call.1} parent=11 // pred_check
          %p174 = pneg %p124
        $region26: #{tpu_custom_call.1} parent=11 // pred_check_branch
          %176 = sbr.rel (%p174) target = $region28
        $region27: #{tpu_custom_call.1} parent=11 // pred_region
          _
        $region28: #{tpu_custom_call.1} parent=11 // pred_fallthru
          _
      $region12: #{tpu_custom_call.1} parent=5 // pred_fallthru
        _
      %p177 = scmp.lt.s32.totalorder %s14, 2
      // Predicated region
      $region29: #{tpu_custom_call.1} parent=5 // pred_check
        %p178 = pneg %p177
      $region30: #{tpu_custom_call.1} parent=5 // pred_check_branch
        %180 = sbr.rel (%p178) target = $region32
      $region31: #{tpu_custom_call.1} parent=5 // pred_region
        // Predicated region
        $region33: #{tpu_custom_call.1} parent=31 // pred_check
          %p181 = pneg %p34
        $region34: #{tpu_custom_call.1} parent=31 // pred_check_branch
          %183 = sbr.rel (%p181) target = $region36
        $region35: #{tpu_custom_call.1} parent=31 // pred_region
          %s184 = smul.u32 64, %s14
          %p185 = scmp.lt.s32.totalorder %s184, 127
          %s186 = scalar_select %p185, %s184, 127
          %s187 = smul.addr %s186, 4
          %s188 = smul.addr %s187, 8
          %s189 = scalar_lea.vmem %s0, %s188
          %s190 = smul.u32 64, %s14
        $region36: #{tpu_custom_call.1} parent=31 // pred_fallthru
          _
      $region32: #{tpu_custom_call.1} parent=5 // pred_fallthru
        _
      %p191 = scmp.le.s32.totalorder 1, %s14
      %p192 = scmp.lt.s32.totalorder %s14, 3
      %p193 = pnand %p191, %p192
      %p194 = pneg %p193
      // Predicated region
      $region37: #{tpu_custom_call.1} parent=5 // pred_check
        _
      $region38: #{tpu_custom_call.1} parent=5 // pred_check_branch
        %196 = sbr.rel (%p193) target = $region40
      $region39: #{tpu_custom_call.1} parent=5 // pred_region
        %s197 = ssub.s32 %s14, 1
        %s198 = smul.u32 64, %s19
        %p199 = scmp.lt.s32.totalorder %s198, 127
        %s200 = scalar_select %p199, %s198, 127
        %s201 = smul.addr %s200, 4
        %s202 = smul.addr %s201, 8
        %s203 = scalar_lea.vmem %s0, %s202
        %p204 = pneg %p40
        %p205 = pneg %p37
        %p206 = pneg %p61
        %p207 = pneg %p58
        %p208 = pneg %p82
        %p209 = pneg %p79
        %p210 = pneg %p103
        %p211 = pneg %p100
        %p212 = pneg %p124
        %p213 = pneg %p121
        %p214 = pneg %p150
        %p215 = pneg %p147
        %s216 = sand.u32 %s137, 1
        %s217 = scalar_lea.sflag [#allocation3], %s216
        %s218 = sand.u32 %s137, 1
        %s219 = smul.addr %s218, 512
        %s220 = scalar_lea.vmem [#allocation2], %s219
        %s221 = smul.u32 64, %s19
        %p222 = scmp.lt.s32.totalorder %s221, 127
        %s223 = scalar_select %p222, %s221, 127
        %s224 = smul.addr %s223, 4
        %s225 = smul.addr %s224, 8
        %s226 = scalar_lea.vmem %s0, %s225
        %s227 = smul.u32 64, %s19
        %s228 = smul.u32 64, %s19
        %v229 = vld [vmem:[%s226] sm:$0xff]
        %v230 = vld [vmem:[%s226 + $0x8] sm:$0xff]
        %v231 = vld [vmem:[%s226 + $0x10] sm:$0xff]
        %v232 = vld [vmem:[%s226 + $0x18] sm:$0xff]
        %v233 = vld [vmem:[%s226 + $0x20] sm:$0xff]
        %v234 = vld [vmem:[%s226 + $0x28] sm:$0xff]
        %v235 = vld [vmem:[%s226 + $0x30] sm:$0xff]
        %v236 = vld [vmem:[%s226 + $0x38] sm:$0xff]
        %v237 = vld [vmem:[%s226 + $0x40] sm:$0xff]
        %v238 = vld [vmem:[%s226 + $0x48] sm:$0xff]
        %v239 = vld [vmem:[%s226 + $0x50] sm:$0xff]
        %v240 = vld [vmem:[%s226 + $0x58] sm:$0xff]
        %v241 = vld [vmem:[%s226 + $0x60] sm:$0xff]
        %v242 = vld [vmem:[%s226 + $0x68] sm:$0xff]
        %v243 = vld [vmem:[%s226 + $0x70] sm:$0xff]
        %v244 = vld [vmem:[%s226 + $0x78] sm:$0xff]
        %v245 = vld [vmem:[%s226 + $0x80] sm:$0xff]
        %v246 = vld [vmem:[%s226 + $0x88] sm:$0xff]
        %v247 = vld [vmem:[%s226 + $0x90] sm:$0xff]
        %v248 = vld [vmem:[%s226 + $0x98] sm:$0xff]
        %v249 = vld [vmem:[%s226 + $0xa0] sm:$0xff]
        %v250 = vld [vmem:[%s226 + $0xa8] sm:$0xff]
        %v251 = vld [vmem:[%s226 + $0xb0] sm:$0xff]
        %v252 = vld [vmem:[%s226 + $0xb8] sm:$0xff]
        %v253 = vld [vmem:[%s226 + $0xc0] sm:$0xff]
        %v254 = vld [vmem:[%s226 + $0xc8] sm:$0xff]
        %v255 = vld [vmem:[%s226 + $0xd0] sm:$0xff]
        %v256 = vld [vmem:[%s226 + $0xd8] sm:$0xff]
        %v257 = vld [vmem:[%s226 + $0xe0] sm:$0xff]
        %v258 = vld [vmem:[%s226 + $0xe8] sm:$0xff]
        %v259 = vld [vmem:[%s226 + $0xf0] sm:$0xff]
        %v260 = vld [vmem:[%s226 + $0xf8] sm:$0xff]
        %v261 = vld [vmem:[%s226 + $0x100] sm:$0xff]
        %v262 = vld [vmem:[%s226 + $0x108] sm:$0xff]
        %v263 = vld [vmem:[%s226 + $0x110] sm:$0xff]
        %v264 = vld [vmem:[%s226 + $0x118] sm:$0xff]
        %v265 = vld [vmem:[%s226 + $0x120] sm:$0xff]
        %v266 = vld [vmem:[%s226 + $0x128] sm:$0xff]
        %v267 = vld [vmem:[%s226 + $0x130] sm:$0xff]
        %v268 = vld [vmem:[%s226 + $0x138] sm:$0xff]
        %v269 = vld [vmem:[%s226 + $0x140] sm:$0xff]
        %v270 = vld [vmem:[%s226 + $0x148] sm:$0xff]
        %v271 = vld [vmem:[%s226 + $0x150] sm:$0xff]
        %v272 = vld [vmem:[%s226 + $0x158] sm:$0xff]
        %v273 = vld [vmem:[%s226 + $0x160] sm:$0xff]
        %v274 = vld [vmem:[%s226 + $0x168] sm:$0xff]
        %v275 = vld [vmem:[%s226 + $0x170] sm:$0xff]
        %v276 = vld [vmem:[%s226 + $0x178] sm:$0xff]
        %v277 = vld [vmem:[%s226 + $0x180] sm:$0xff]
        %v278 = vld [vmem:[%s226 + $0x188] sm:$0xff]
        %v279 = vld [vmem:[%s226 + $0x190] sm:$0xff]
        %v280 = vld [vmem:[%s226 + $0x198] sm:$0xff]
        %v281 = vld [vmem:[%s226 + $0x1a0] sm:$0xff]
        %v282 = vld [vmem:[%s226 + $0x1a8] sm:$0xff]
        %v283 = vld [vmem:[%s226 + $0x1b0] sm:$0xff]
        %v284 = vld [vmem:[%s226 + $0x1b8] sm:$0xff]
        %v285 = vld [vmem:[%s226 + $0x1c0] sm:$0xff]
        %v286 = vld [vmem:[%s226 + $0x1c8] sm:$0xff]
        %v287 = vld [vmem:[%s226 + $0x1d0] sm:$0xff]
        %v288 = vld [vmem:[%s226 + $0x1d8] sm:$0xff]
        %v289 = vld [vmem:[%s226 + $0x1e0] sm:$0xff]
        %v290 = vld [vmem:[%s226 + $0x1e8] sm:$0xff]
        %v291 = vld [vmem:[%s226 + $0x1f0] sm:$0xff]
        %v292 = vld [vmem:[%s226 + $0x1f8] sm:$0xff]
        %v293 = vld [vmem:[%s226 + $0x200] sm:$0xff]
        %v294 = vld [vmem:[%s226 + $0x208] sm:$0xff]
        %v295 = vld [vmem:[%s226 + $0x210] sm:$0xff]
        %v296 = vld [vmem:[%s226 + $0x218] sm:$0xff]
        %v297 = vld [vmem:[%s226 + $0x220] sm:$0xff]
        %v298 = vld [vmem:[%s226 + $0x228] sm:$0xff]
        %v299 = vld [vmem:[%s226 + $0x230] sm:$0xff]
        %v300 = vld [vmem:[%s226 + $0x238] sm:$0xff]
        %v301 = vld [vmem:[%s226 + $0x240] sm:$0xff]
        %v302 = vld [vmem:[%s226 + $0x248] sm:$0xff]
        %v303 = vld [vmem:[%s226 + $0x250] sm:$0xff]
        %v304 = vld [vmem:[%s226 + $0x258] sm:$0xff]
        %v305 = vld [vmem:[%s226 + $0x260] sm:$0xff]
        %v306 = vld [vmem:[%s226 + $0x268] sm:$0xff]
        %v307 = vld [vmem:[%s226 + $0x270] sm:$0xff]
        %v308 = vld [vmem:[%s226 + $0x278] sm:$0xff]
        %v309 = vld [vmem:[%s226 + $0x280] sm:$0xff]
        %v310 = vld [vmem:[%s226 + $0x288] sm:$0xff]
        %v311 = vld [vmem:[%s226 + $0x290] sm:$0xff]
        %v312 = vld [vmem:[%s226 + $0x298] sm:$0xff]
        %v313 = vld [vmem:[%s226 + $0x2a0] sm:$0xff]
        %v314 = vld [vmem:[%s226 + $0x2a8] sm:$0xff]
        %v315 = vld [vmem:[%s226 + $0x2b0] sm:$0xff]
        %v316 = vld [vmem:[%s226 + $0x2b8] sm:$0xff]
        %v317 = vld [vmem:[%s226 + $0x2c0] sm:$0xff]
        %v318 = vld [vmem:[%s226 + $0x2c8] sm:$0xff]
        %v319 = vld [vmem:[%s226 + $0x2d0] sm:$0xff]
        %v320 = vld [vmem:[%s226 + $0x2d8] sm:$0xff]
        %v321 = vld [vmem:[%s226 + $0x2e0] sm:$0xff]
        %v322 = vld [vmem:[%s226 + $0x2e8] sm:$0xff]
        %v323 = vld [vmem:[%s226 + $0x2f0] sm:$0xff]
        %v324 = vld [vmem:[%s226 + $0x2f8] sm:$0xff]
        %v325 = vld [vmem:[%s226 + $0x300] sm:$0xff]
        %v326 = vld [vmem:[%s226 + $0x308] sm:$0xff]
        %v327 = vld [vmem:[%s226 + $0x310] sm:$0xff]
        %v328 = vld [vmem:[%s226 + $0x318] sm:$0xff]
        %v329 = vld [vmem:[%s226 + $0x320] sm:$0xff]
        %v330 = vld [vmem:[%s226 + $0x328] sm:$0xff]
        %v331 = vld [vmem:[%s226 + $0x330] sm:$0xff]
        %v332 = vld [vmem:[%s226 + $0x338] sm:$0xff]
        %v333 = vld [vmem:[%s226 + $0x340] sm:$0xff]
        %v334 = vld [vmem:[%s226 + $0x348] sm:$0xff]
        %v335 = vld [vmem:[%s226 + $0x350] sm:$0xff]
        %v336 = vld [vmem:[%s226 + $0x358] sm:$0xff]
        %v337 = vld [vmem:[%s226 + $0x360] sm:$0xff]
        %v338 = vld [vmem:[%s226 + $0x368] sm:$0xff]
        %v339 = vld [vmem:[%s226 + $0x370] sm:$0xff]
        %v340 = vld [vmem:[%s226 + $0x378] sm:$0xff]
        %v341 = vld [vmem:[%s226 + $0x380] sm:$0xff]
        %v342 = vld [vmem:[%s226 + $0x388] sm:$0xff]
        %v343 = vld [vmem:[%s226 + $0x390] sm:$0xff]
        %v344 = vld [vmem:[%s226 + $0x398] sm:$0xff]
        %v345 = vld [vmem:[%s226 + $0x3a0] sm:$0xff]
        %v346 = vld [vmem:[%s226 + $0x3a8] sm:$0xff]
        %v347 = vld [vmem:[%s226 + $0x3b0] sm:$0xff]
        %v348 = vld [vmem:[%s226 + $0x3b8] sm:$0xff]
        %v349 = vld [vmem:[%s226 + $0x3c0] sm:$0xff]
        %v350 = vld [vmem:[%s226 + $0x3c8] sm:$0xff]
        %v351 = vld [vmem:[%s226 + $0x3d0] sm:$0xff]
        %v352 = vld [vmem:[%s226 + $0x3d8] sm:$0xff]
        %v353 = vld [vmem:[%s226 + $0x3e0] sm:$0xff]
        %v354 = vld [vmem:[%s226 + $0x3e8] sm:$0xff]
        %v355 = vld [vmem:[%s226 + $0x3f0] sm:$0xff]
        %v356 = vld [vmem:[%s226 + $0x3f8] sm:$0xff]
        %v357 = vld [vmem:[%s226 + $0x400] sm:$0xff]
        %v358 = vld [vmem:[%s226 + $0x408] sm:$0xff]
        %v359 = vld [vmem:[%s226 + $0x410] sm:$0xff]
        %v360 = vld [vmem:[%s226 + $0x418] sm:$0xff]
        %v361 = vld [vmem:[%s226 + $0x420] sm:$0xff]
        %v362 = vld [vmem:[%s226 + $0x428] sm:$0xff]
        %v363 = vld [vmem:[%s226 + $0x430] sm:$0xff]
        %v364 = vld [vmem:[%s226 + $0x438] sm:$0xff]
        %v365 = vld [vmem:[%s226 + $0x440] sm:$0xff]
        %v366 = vld [vmem:[%s226 + $0x448] sm:$0xff]
        %v367 = vld [vmem:[%s226 + $0x450] sm:$0xff]
        %v368 = vld [vmem:[%s226 + $0x458] sm:$0xff]
        %v369 = vld [vmem:[%s226 + $0x460] sm:$0xff]
        %v370 = vld [vmem:[%s226 + $0x468] sm:$0xff]
        %v371 = vld [vmem:[%s226 + $0x470] sm:$0xff]
        %v372 = vld [vmem:[%s226 + $0x478] sm:$0xff]
        %v373 = vld [vmem:[%s226 + $0x480] sm:$0xff]
        %v374 = vld [vmem:[%s226 + $0x488] sm:$0xff]
        %v375 = vld [vmem:[%s226 + $0x490] sm:$0xff]
        %v376 = vld [vmem:[%s226 + $0x498] sm:$0xff]
        %v377 = vld [vmem:[%s226 + $0x4a0] sm:$0xff]
        %v378 = vld [vmem:[%s226 + $0x4a8] sm:$0xff]
        %v379 = vld [vmem:[%s226 + $0x4b0] sm:$0xff]
        %v380 = vld [vmem:[%s226 + $0x4b8] sm:$0xff]
        %v381 = vld [vmem:[%s226 + $0x4c0] sm:$0xff]
        %v382 = vld [vmem:[%s226 + $0x4c8] sm:$0xff]
        %v383 = vld [vmem:[%s226 + $0x4d0] sm:$0xff]
        %v384 = vld [vmem:[%s226 + $0x4d8] sm:$0xff]
        %v385 = vld [vmem:[%s226 + $0x4e0] sm:$0xff]
        %v386 = vld [vmem:[%s226 + $0x4e8] sm:$0xff]
        %v387 = vld [vmem:[%s226 + $0x4f0] sm:$0xff]
        %v388 = vld [vmem:[%s226 + $0x4f8] sm:$0xff]
        %v389 = vld [vmem:[%s226 + $0x500] sm:$0xff]
        %v390 = vld [vmem:[%s226 + $0x508] sm:$0xff]
        %v391 = vld [vmem:[%s226 + $0x510] sm:$0xff]
        %v392 = vld [vmem:[%s226 + $0x518] sm:$0xff]
        %v393 = vld [vmem:[%s226 + $0x520] sm:$0xff]
        %v394 = vld [vmem:[%s226 + $0x528] sm:$0xff]
        %v395 = vld [vmem:[%s226 + $0x530] sm:$0xff]
        %v396 = vld [vmem:[%s226 + $0x538] sm:$0xff]
        %v397 = vld [vmem:[%s226 + $0x540] sm:$0xff]
        %v398 = vld [vmem:[%s226 + $0x548] sm:$0xff]
        %v399 = vld [vmem:[%s226 + $0x550] sm:$0xff]
        %v400 = vld [vmem:[%s226 + $0x558] sm:$0xff]
        %v401 = vld [vmem:[%s226 + $0x560] sm:$0xff]
        %v402 = vld [vmem:[%s226 + $0x568] sm:$0xff]
        %v403 = vld [vmem:[%s226 + $0x570] sm:$0xff]
        %v404 = vld [vmem:[%s226 + $0x578] sm:$0xff]
        %v405 = vld [vmem:[%s226 + $0x580] sm:$0xff]
        %v406 = vld [vmem:[%s226 + $0x588] sm:$0xff]
        %v407 = vld [vmem:[%s226 + $0x590] sm:$0xff]
        %v408 = vld [vmem:[%s226 + $0x598] sm:$0xff]
        %v409 = vld [vmem:[%s226 + $0x5a0] sm:$0xff]
        %v410 = vld [vmem:[%s226 + $0x5a8] sm:$0xff]
        %v411 = vld [vmem:[%s226 + $0x5b0] sm:$0xff]
        %v412 = vld [vmem:[%s226 + $0x5b8] sm:$0xff]
        %v413 = vld [vmem:[%s226 + $0x5c0] sm:$0xff]
        %v414 = vld [vmem:[%s226 + $0x5c8] sm:$0xff]
        %v415 = vld [vmem:[%s226 + $0x5d0] sm:$0xff]
        %v416 = vld [vmem:[%s226 + $0x5d8] sm:$0xff]
        %v417 = vld [vmem:[%s226 + $0x5e0] sm:$0xff]
        %v418 = vld [vmem:[%s226 + $0x5e8] sm:$0xff]
        %v419 = vld [vmem:[%s226 + $0x5f0] sm:$0xff]
        %v420 = vld [vmem:[%s226 + $0x5f8] sm:$0xff]
        %v421 = vld [vmem:[%s226 + $0x600] sm:$0xff]
        %v422 = vld [vmem:[%s226 + $0x608] sm:$0xff]
        %v423 = vld [vmem:[%s226 + $0x610] sm:$0xff]
        %v424 = vld [vmem:[%s226 + $0x618] sm:$0xff]
        %v425 = vld [vmem:[%s226 + $0x620] sm:$0xff]
        %v426 = vld [vmem:[%s226 + $0x628] sm:$0xff]
        %v427 = vld [vmem:[%s226 + $0x630] sm:$0xff]
        %v428 = vld [vmem:[%s226 + $0x638] sm:$0xff]
        %v429 = vld [vmem:[%s226 + $0x640] sm:$0xff]
        %v430 = vld [vmem:[%s226 + $0x648] sm:$0xff]
        %v431 = vld [vmem:[%s226 + $0x650] sm:$0xff]
        %v432 = vld [vmem:[%s226 + $0x658] sm:$0xff]
        %v433 = vld [vmem:[%s226 + $0x660] sm:$0xff]
        %v434 = vld [vmem:[%s226 + $0x668] sm:$0xff]
        %v435 = vld [vmem:[%s226 + $0x670] sm:$0xff]
        %v436 = vld [vmem:[%s226 + $0x678] sm:$0xff]
        %v437 = vld [vmem:[%s226 + $0x680] sm:$0xff]
        %v438 = vld [vmem:[%s226 + $0x688] sm:$0xff]
        %v439 = vld [vmem:[%s226 + $0x690] sm:$0xff]
        %v440 = vld [vmem:[%s226 + $0x698] sm:$0xff]
        %v441 = vld [vmem:[%s226 + $0x6a0] sm:$0xff]
        %v442 = vld [vmem:[%s226 + $0x6a8] sm:$0xff]
        %v443 = vld [vmem:[%s226 + $0x6b0] sm:$0xff]
        %v444 = vld [vmem:[%s226 + $0x6b8] sm:$0xff]
        %v445 = vld [vmem:[%s226 + $0x6c0] sm:$0xff]
        %v446 = vld [vmem:[%s226 + $0x6c8] sm:$0xff]
        %v447 = vld [vmem:[%s226 + $0x6d0] sm:$0xff]
        %v448 = vld [vmem:[%s226 + $0x6d8] sm:$0xff]
        %v449 = vld [vmem:[%s226 + $0x6e0] sm:$0xff]
        %v450 = vld [vmem:[%s226 + $0x6e8] sm:$0xff]
        %v451 = vld [vmem:[%s226 + $0x6f0] sm:$0xff]
        %v452 = vld [vmem:[%s226 + $0x6f8] sm:$0xff]
        %v453 = vld [vmem:[%s226 + $0x700] sm:$0xff]
        %v454 = vld [vmem:[%s226 + $0x708] sm:$0xff]
        %v455 = vld [vmem:[%s226 + $0x710] sm:$0xff]
        %v456 = vld [vmem:[%s226 + $0x718] sm:$0xff]
        %v457 = vld [vmem:[%s226 + $0x720] sm:$0xff]
        %v458 = vld [vmem:[%s226 + $0x728] sm:$0xff]
        %v459 = vld [vmem:[%s226 + $0x730] sm:$0xff]
        %v460 = vld [vmem:[%s226 + $0x738] sm:$0xff]
        %v461 = vld [vmem:[%s226 + $0x740] sm:$0xff]
        %v462 = vld [vmem:[%s226 + $0x748] sm:$0xff]
        %v463 = vld [vmem:[%s226 + $0x750] sm:$0xff]
        %v464 = vld [vmem:[%s226 + $0x758] sm:$0xff]
        %v465 = vld [vmem:[%s226 + $0x760] sm:$0xff]
        %v466 = vld [vmem:[%s226 + $0x768] sm:$0xff]
        %v467 = vld [vmem:[%s226 + $0x770] sm:$0xff]
        %v468 = vld [vmem:[%s226 + $0x778] sm:$0xff]
        %v469 = vld [vmem:[%s226 + $0x780] sm:$0xff]
        %v470 = vld [vmem:[%s226 + $0x788] sm:$0xff]
        %v471 = vld [vmem:[%s226 + $0x790] sm:$0xff]
        %v472 = vld [vmem:[%s226 + $0x798] sm:$0xff]
        %v473 = vld [vmem:[%s226 + $0x7a0] sm:$0xff]
        %v474 = vld [vmem:[%s226 + $0x7a8] sm:$0xff]
        %v475 = vld [vmem:[%s226 + $0x7b0] sm:$0xff]
        %v476 = vld [vmem:[%s226 + $0x7b8] sm:$0xff]
        %v477 = vld [vmem:[%s226 + $0x7c0] sm:$0xff]
        %v478 = vld [vmem:[%s226 + $0x7c8] sm:$0xff]
        %v479 = vld [vmem:[%s226 + $0x7d0] sm:$0xff]
        %v480 = vld [vmem:[%s226 + $0x7d8] sm:$0xff]
        %v481 = vld [vmem:[%s226 + $0x7e0] sm:$0xff]
        %v482 = vld [vmem:[%s226 + $0x7e8] sm:$0xff]
        %v483 = vld [vmem:[%s226 + $0x7f0] sm:$0xff]
        %v484 = vld [vmem:[%s226 + $0x7f8] sm:$0xff]
        %v485 = vld [vmem:[%s1] sm:$0xff]
        %v486 = vld [vmem:[%s1 + $0x8] sm:$0xff]
        %v487 = vld [vmem:[%s1 + $0x10] sm:$0xff]
        %v488 = vld [vmem:[%s1 + $0x18] sm:$0xff]
        %v489 = vld [vmem:[%s1 + $0x20] sm:$0xff]
        %v490 = vld [vmem:[%s1 + $0x28] sm:$0xff]
        %v491 = vld [vmem:[%s1 + $0x30] sm:$0xff]
        %v492 = vld [vmem:[%s1 + $0x38] sm:$0xff]
        %v493 = vld [vmem:[%s1 + $0x40] sm:$0xff]
        %v494 = vld [vmem:[%s1 + $0x48] sm:$0xff]
        %v495 = vld [vmem:[%s1 + $0x50] sm:$0xff]
        %v496 = vld [vmem:[%s1 + $0x58] sm:$0xff]
        %v497 = vld [vmem:[%s1 + $0x60] sm:$0xff]
        %v498 = vld [vmem:[%s1 + $0x68] sm:$0xff]
        %v499 = vld [vmem:[%s1 + $0x70] sm:$0xff]
        %v500 = vld [vmem:[%s1 + $0x78] sm:$0xff]
        %v501 = vld [vmem:[%s1 + $0x80] sm:$0xff]
        %v502 = vld [vmem:[%s1 + $0x88] sm:$0xff]
        %v503 = vld [vmem:[%s1 + $0x90] sm:$0xff]
        %v504 = vld [vmem:[%s1 + $0x98] sm:$0xff]
        %v505 = vld [vmem:[%s1 + $0xa0] sm:$0xff]
        %v506 = vld [vmem:[%s1 + $0xa8] sm:$0xff]
        %v507 = vld [vmem:[%s1 + $0xb0] sm:$0xff]
        %v508 = vld [vmem:[%s1 + $0xb8] sm:$0xff]
        %v509 = vld [vmem:[%s1 + $0xc0] sm:$0xff]
        %v510 = vld [vmem:[%s1 + $0xc8] sm:$0xff]
        %v511 = vld [vmem:[%s1 + $0xd0] sm:$0xff]
        %v512 = vld [vmem:[%s1 + $0xd8] sm:$0xff]
        %v513 = vld [vmem:[%s1 + $0xe0] sm:$0xff]
        %v514 = vld [vmem:[%s1 + $0xe8] sm:$0xff]
        %v515 = vld [vmem:[%s1 + $0xf0] sm:$0xff]
        %v516 = vld [vmem:[%s1 + $0xf8] sm:$0xff]
        %v517 = vld [vmem:[%s1 + $0x100] sm:$0xff]
        %v518 = vld [vmem:[%s1 + $0x108] sm:$0xff]
        %v519 = vld [vmem:[%s1 + $0x110] sm:$0xff]
        %v520 = vld [vmem:[%s1 + $0x118] sm:$0xff]
        %v521 = vld [vmem:[%s1 + $0x120] sm:$0xff]
        %v522 = vld [vmem:[%s1 + $0x128] sm:$0xff]
        %v523 = vld [vmem:[%s1 + $0x130] sm:$0xff]
        %v524 = vld [vmem:[%s1 + $0x138] sm:$0xff]
        %v525 = vld [vmem:[%s1 + $0x140] sm:$0xff]
        %v526 = vld [vmem:[%s1 + $0x148] sm:$0xff]
        %v527 = vld [vmem:[%s1 + $0x150] sm:$0xff]
        %v528 = vld [vmem:[%s1 + $0x158] sm:$0xff]
        %v529 = vld [vmem:[%s1 + $0x160] sm:$0xff]
        %v530 = vld [vmem:[%s1 + $0x168] sm:$0xff]
        %v531 = vld [vmem:[%s1 + $0x170] sm:$0xff]
        %v532 = vld [vmem:[%s1 + $0x178] sm:$0xff]
        %v533 = vld [vmem:[%s1 + $0x180] sm:$0xff]
        %v534 = vld [vmem:[%s1 + $0x188] sm:$0xff]
        %v535 = vld [vmem:[%s2] sm:$0x1]
        %v537 = vperm.slane %v535, 0
        %vm539 = vcmask 130048
        %v541 = vsel %vm539, %v232, 0
        %v544 = vsel %vm539, %v236, 0
        %v547 = vsel %vm539, %v240, 0
        %v550 = vsel %vm539, %v244, 0
        %v553 = vsel %vm539, %v248, 0
        %v556 = vsel %vm539, %v252, 0
        %v559 = vsel %vm539, %v256, 0
        %v562 = vsel %vm539, %v260, 0
        %v565 = vsel %vm539, %v264, 0
        %v568 = vsel %vm539, %v268, 0
        %v571 = vsel %vm539, %v272, 0
        %v574 = vsel %vm539, %v276, 0
        %v577 = vsel %vm539, %v280, 0
        %v580 = vsel %vm539, %v284, 0
        %v583 = vsel %vm539, %v288, 0
        %v586 = vsel %vm539, %v292, 0
        %v589 = vsel %vm539, %v296, 0
        %v592 = vsel %vm539, %v300, 0
        %v595 = vsel %vm539, %v304, 0
        %v598 = vsel %vm539, %v308, 0
        %v601 = vsel %vm539, %v312, 0
        %v604 = vsel %vm539, %v316, 0
        %v607 = vsel %vm539, %v320, 0
        %v610 = vsel %vm539, %v324, 0
        %v613 = vsel %vm539, %v328, 0
        %v616 = vsel %vm539, %v332, 0
        %v619 = vsel %vm539, %v336, 0
        %v622 = vsel %vm539, %v340, 0
        %v625 = vsel %vm539, %v344, 0
        %v628 = vsel %vm539, %v348, 0
        %v631 = vsel %vm539, %v352, 0
        %v634 = vsel %vm539, %v356, 0
        %v637 = vsel %vm539, %v360, 0
        %v640 = vsel %vm539, %v364, 0
        %v643 = vsel %vm539, %v368, 0
        %v646 = vsel %vm539, %v372, 0
        %v649 = vsel %vm539, %v376, 0
        %v652 = vsel %vm539, %v380, 0
        %v655 = vsel %vm539, %v384, 0
        %v658 = vsel %vm539, %v388, 0
        %v661 = vsel %vm539, %v392, 0
        %v664 = vsel %vm539, %v396, 0
        %v667 = vsel %vm539, %v400, 0
        %v670 = vsel %vm539, %v404, 0
        %v673 = vsel %vm539, %v408, 0
        %v676 = vsel %vm539, %v412, 0
        %v679 = vsel %vm539, %v416, 0
        %v682 = vsel %vm539, %v420, 0
        %v685 = vsel %vm539, %v424, 0
        %v688 = vsel %vm539, %v428, 0
        %v691 = vsel %vm539, %v432, 0
        %v694 = vsel %vm539, %v436, 0
        %v697 = vsel %vm539, %v440, 0
        %v700 = vsel %vm539, %v444, 0
        %v703 = vsel %vm539, %v448, 0
        %v706 = vsel %vm539, %v452, 0
        %v709 = vsel %vm539, %v456, 0
        %v712 = vsel %vm539, %v460, 0
        %v715 = vsel %vm539, %v464, 0
        %v718 = vsel %vm539, %v468, 0
        %v721 = vsel %vm539, %v472, 0
        %v724 = vsel %vm539, %v476, 0
        %v727 = vsel %vm539, %v480, 0
        %v730 = vsel %vm539, %v484, 0
        %732 = vmatpush.msra.mxu0 %v500
        %733 = vmatpush.msra.mxu0 %v499
        %734 = vmatpush.msra.mxu0 %v498
        %735 = vmatpush.msra.mxu0 %v497
        %736 = vmatpush.msra.mxu0 %v496
        %737 = vmatpush.msra.mxu0 %v495
        %738 = vmatpush.msra.mxu0 %v494
        %739 = vmatpush.msra.mxu0 %v493
        %740 = vmatpush.msra.mxu0 %v492
        %741 = vmatpush.msra.mxu0 %v491
        %742 = vmatpush.msra.mxu0 %v490
        %743 = vmatpush.msra.mxu0 %v489
        %744 = vmatpush.msra.mxu0 %v488
        %745 = vmatpush.msra.mxu0 %v487
        %746 = vmatpush.msra.mxu0 %v486
        %747 = vmatpush.msra.mxu0 %v485
        %748 = vmatmul.f32.gmra.mxu0 %v229
        %v749 = vpop.f32.mrf.mxu0
        %v750 = vadd.f32 %v537, %v749
        %751 = vmatmul.f32.gmra.mxu0 %v233
        %v752 = vpop.f32.mrf.mxu0
        %v753 = vadd.f32 %v537, %v752
        %754 = vmatmul.f32.gmra.mxu0 %v237
        %v755 = vpop.f32.mrf.mxu0
        %v756 = vadd.f32 %v537, %v755
        %757 = vmatmul.f32.gmra.mxu0 %v241
        %v758 = vpop.f32.mrf.mxu0
        %v759 = vadd.f32 %v537, %v758
        %760 = vmatmul.f32.gmra.mxu0 %v245
        %v761 = vpop.f32.mrf.mxu0
        %v762 = vadd.f32 %v537, %v761
        %763 = vmatmul.f32.gmra.mxu0 %v249
        %v764 = vpop.f32.mrf.mxu0
        %v765 = vadd.f32 %v537, %v764
        %766 = vmatmul.f32.gmra.mxu0 %v253
        %v767 = vpop.f32.mrf.mxu0
        %v768 = vadd.f32 %v537, %v767
        %769 = vmatmul.f32.gmra.mxu0 %v257
        %v770 = vpop.f32.mrf.mxu0
        %v771 = vadd.f32 %v537, %v770
        %772 = vmatmul.f32.gmra.mxu0 %v261
        %v773 = vpop.f32.mrf.mxu0
        %v774 = vadd.f32 %v537, %v773
        %775 = vmatmul.f32.gmra.mxu0 %v265
        %v776 = vpop.f32.mrf.mxu0
        %v777 = vadd.f32 %v537, %v776
        %778 = vmatmul.f32.gmra.mxu0 %v269
        %v779 = vpop.f32.mrf.mxu0
        %v780 = vadd.f32 %v537, %v779
        %781 = vmatmul.f32.gmra.mxu0 %v273
        %v782 = vpop.f32.mrf.mxu0
        %v783 = vadd.f32 %v537, %v782
        %784 = vmatmul.f32.gmra.mxu0 %v277
        %v785 = vpop.f32.mrf.mxu0
        %v786 = vadd.f32 %v537, %v785
        %787 = vmatmul.f32.gmra.mxu0 %v281
        %v788 = vpop.f32.mrf.mxu0
        %v789 = vadd.f32 %v537, %v788
        %790 = vmatmul.f32.gmra.mxu0 %v285
        %v791 = vpop.f32.mrf.mxu0
        %v792 = vadd.f32 %v537, %v791
        %793 = vmatmul.f32.gmra.mxu0 %v289
        %v794 = vpop.f32.mrf.mxu0
        %v795 = vadd.f32 %v537, %v794
        %796 = vmatmul.f32.gmra.mxu0 %v293
        %v797 = vpop.f32.mrf.mxu0
        %v798 = vadd.f32 %v537, %v797
        %799 = vmatmul.f32.gmra.mxu0 %v297
        %v800 = vpop.f32.mrf.mxu0
        %v801 = vadd.f32 %v537, %v800
        %802 = vmatmul.f32.gmra.mxu0 %v301
        %v803 = vpop.f32.mrf.mxu0
        %v804 = vadd.f32 %v537, %v803
        %805 = vmatmul.f32.gmra.mxu0 %v305
        %v806 = vpop.f32.mrf.mxu0
        %v807 = vadd.f32 %v537, %v806
        %808 = vmatmul.f32.gmra.mxu0 %v309
        %v809 = vpop.f32.mrf.mxu0
        %v810 = vadd.f32 %v537, %v809
        %811 = vmatmul.f32.gmra.mxu0 %v313
        %v812 = vpop.f32.mrf.mxu0
        %v813 = vadd.f32 %v537, %v812
        %814 = vmatmul.f32.gmra.mxu0 %v317
        %v815 = vpop.f32.mrf.mxu0
        %v816 = vadd.f32 %v537, %v815
        %817 = vmatmul.f32.gmra.mxu0 %v321
        %v818 = vpop.f32.mrf.mxu0
        %v819 = vadd.f32 %v537, %v818
        %820 = vmatmul.f32.gmra.mxu0 %v325
        %v821 = vpop.f32.mrf.mxu0
        %v822 = vadd.f32 %v537, %v821
        %823 = vmatmul.f32.gmra.mxu0 %v329
        %v824 = vpop.f32.mrf.mxu0
        %v825 = vadd.f32 %v537, %v824
        %826 = vmatmul.f32.gmra.mxu0 %v333
        %v827 = vpop.f32.mrf.mxu0
        %v828 = vadd.f32 %v537, %v827
        %829 = vmatmul.f32.gmra.mxu0 %v337
        %v830 = vpop.f32.mrf.mxu0
        %v831 = vadd.f32 %v537, %v830
        %832 = vmatmul.f32.gmra.mxu0 %v341
        %v833 = vpop.f32.mrf.mxu0
        %v834 = vadd.f32 %v537, %v833
        %835 = vmatmul.f32.gmra.mxu0 %v345
        %v836 = vpop.f32.mrf.mxu0
        %v837 = vadd.f32 %v537, %v836
        %838 = vmatmul.f32.gmra.mxu0 %v349
        %v839 = vpop.f32.mrf.mxu0
        %v840 = vadd.f32 %v537, %v839
        %841 = vmatmul.f32.gmra.mxu0 %v353
        %v842 = vpop.f32.mrf.mxu0
        %v843 = vadd.f32 %v537, %v842
        %844 = vmatmul.f32.gmra.mxu0 %v357
        %v845 = vpop.f32.mrf.mxu0
        %v846 = vadd.f32 %v537, %v845
        %847 = vmatmul.f32.gmra.mxu0 %v361
        %v848 = vpop.f32.mrf.mxu0
        %v849 = vadd.f32 %v537, %v848
        %850 = vmatmul.f32.gmra.mxu0 %v365
        %v851 = vpop.f32.mrf.mxu0
        %v852 = vadd.f32 %v537, %v851
        %853 = vmatmul.f32.gmra.mxu0 %v369
        %v854 = vpop.f32.mrf.mxu0
        %v855 = vadd.f32 %v537, %v854
        %856 = vmatmul.f32.gmra.mxu0 %v373
        %v857 = vpop.f32.mrf.mxu0
        %v858 = vadd.f32 %v537, %v857
        %859 = vmatmul.f32.gmra.mxu0 %v377
        %v860 = vpop.f32.mrf.mxu0
        %v861 = vadd.f32 %v537, %v860
        %862 = vmatmul.f32.gmra.mxu0 %v381
        %v863 = vpop.f32.mrf.mxu0
        %v864 = vadd.f32 %v537, %v863
        %865 = vmatmul.f32.gmra.mxu0 %v385
        %v866 = vpop.f32.mrf.mxu0
        %v867 = vadd.f32 %v537, %v866
        %868 = vmatmul.f32.gmra.mxu0 %v389
        %v869 = vpop.f32.mrf.mxu0
        %v870 = vadd.f32 %v537, %v869
        %871 = vmatmul.f32.gmra.mxu0 %v393
        %v872 = vpop.f32.mrf.mxu0
        %v873 = vadd.f32 %v537, %v872
        %874 = vmatmul.f32.gmra.mxu0 %v397
        %v875 = vpop.f32.mrf.mxu0
        %v876 = vadd.f32 %v537, %v875
        %877 = vmatmul.f32.gmra.mxu0 %v401
        %v878 = vpop.f32.mrf.mxu0
        %v879 = vadd.f32 %v537, %v878
        %880 = vmatmul.f32.gmra.mxu0 %v405
        %v881 = vpop.f32.mrf.mxu0
        %v882 = vadd.f32 %v537, %v881
        %883 = vmatmul.f32.gmra.mxu0 %v409
        %v884 = vpop.f32.mrf.mxu0
        %v885 = vadd.f32 %v537, %v884
        %886 = vmatmul.f32.gmra.mxu0 %v413
        %v887 = vpop.f32.mrf.mxu0
        %v888 = vadd.f32 %v537, %v887
        %889 = vmatmul.f32.gmra.mxu0 %v417
        %v890 = vpop.f32.mrf.mxu0
        %v891 = vadd.f32 %v537, %v890
        %892 = vmatmul.f32.gmra.mxu0 %v421
        %v893 = vpop.f32.mrf.mxu0
        %v894 = vadd.f32 %v537, %v893
        %895 = vmatmul.f32.gmra.mxu0 %v425
        %v896 = vpop.f32.mrf.mxu0
        %v897 = vadd.f32 %v537, %v896
        %898 = vmatmul.f32.gmra.mxu0 %v429
        %v899 = vpop.f32.mrf.mxu0
        %v900 = vadd.f32 %v537, %v899
        %901 = vmatmul.f32.gmra.mxu0 %v433
        %v902 = vpop.f32.mrf.mxu0
        %v903 = vadd.f32 %v537, %v902
        %904 = vmatmul.f32.gmra.mxu0 %v437
        %v905 = vpop.f32.mrf.mxu0
        %v906 = vadd.f32 %v537, %v905
        %907 = vmatmul.f32.gmra.mxu0 %v441
        %v908 = vpop.f32.mrf.mxu0
        %v909 = vadd.f32 %v537, %v908
        %910 = vmatmul.f32.gmra.mxu0 %v445
        %v911 = vpop.f32.mrf.mxu0
        %v912 = vadd.f32 %v537, %v911
        %913 = vmatmul.f32.gmra.mxu0 %v449
        %v914 = vpop.f32.mrf.mxu0
        %v915 = vadd.f32 %v537, %v914
        %916 = vmatmul.f32.gmra.mxu0 %v453
        %v917 = vpop.f32.mrf.mxu0
        %v918 = vadd.f32 %v537, %v917
        %919 = vmatmul.f32.gmra.mxu0 %v457
        %v920 = vpop.f32.mrf.mxu0
        %v921 = vadd.f32 %v537, %v920
        %922 = vmatmul.f32.gmra.mxu0 %v461
        %v923 = vpop.f32.mrf.mxu0
        %v924 = vadd.f32 %v537, %v923
        %925 = vmatmul.f32.gmra.mxu0 %v465
        %v926 = vpop.f32.mrf.mxu0
        %v927 = vadd.f32 %v537, %v926
        %928 = vmatmul.f32.gmra.mxu0 %v469
        %v929 = vpop.f32.mrf.mxu0
        %v930 = vadd.f32 %v537, %v929
        %931 = vmatmul.f32.gmra.mxu0 %v473
        %v932 = vpop.f32.mrf.mxu0
        %v933 = vadd.f32 %v537, %v932
        %934 = vmatmul.f32.gmra.mxu0 %v477
        %v935 = vpop.f32.mrf.mxu0
        %v936 = vadd.f32 %v537, %v935
        %937 = vmatmul.f32.gmra.mxu0 %v481
        %v938 = vpop.f32.mrf.mxu0
        %v939 = vadd.f32 %v537, %v938
        %940 = vdwg.mxu0
        %941 = vmatpush.msra.mxu0 %v516
        %942 = vmatpush.msra.mxu0 %v515
        %943 = vmatpush.msra.mxu0 %v514
        %944 = vmatpush.msra.mxu0 %v513
        %945 = vmatpush.msra.mxu0 %v512
        %946 = vmatpush.msra.mxu0 %v511
        %947 = vmatpush.msra.mxu0 %v510
        %948 = vmatpush.msra.mxu0 %v509
        %949 = vmatpush.msra.mxu0 %v508
        %950 = vmatpush.msra.mxu0 %v507
        %951 = vmatpush.msra.mxu0 %v506
        %952 = vmatpush.msra.mxu0 %v505
        %953 = vmatpush.msra.mxu0 %v504
        %954 = vmatpush.msra.mxu0 %v503
        %955 = vmatpush.msra.mxu0 %v502
        %956 = vmatpush.msra.mxu0 %v501
        %957 = vmatmul.f32.gmra.mxu0 %v230
        %v958 = vpop.f32.mrf.mxu0
        %v959 = vadd.f32 %v750, %v958
        %960 = vmatmul.f32.gmra.mxu0 %v234
        %v961 = vpop.f32.mrf.mxu0
        %v962 = vadd.f32 %v753, %v961
        %963 = vmatmul.f32.gmra.mxu0 %v238
        %v964 = vpop.f32.mrf.mxu0
        %v965 = vadd.f32 %v756, %v964
        %966 = vmatmul.f32.gmra.mxu0 %v242
        %v967 = vpop.f32.mrf.mxu0
        %v968 = vadd.f32 %v759, %v967
        %969 = vmatmul.f32.gmra.mxu0 %v246
        %v970 = vpop.f32.mrf.mxu0
        %v971 = vadd.f32 %v762, %v970
        %972 = vmatmul.f32.gmra.mxu0 %v250
        %v973 = vpop.f32.mrf.mxu0
        %v974 = vadd.f32 %v765, %v973
        %975 = vmatmul.f32.gmra.mxu0 %v254
        %v976 = vpop.f32.mrf.mxu0
        %v977 = vadd.f32 %v768, %v976
        %978 = vmatmul.f32.gmra.mxu0 %v258
        %v979 = vpop.f32.mrf.mxu0
        %v980 = vadd.f32 %v771, %v979
        %981 = vmatmul.f32.gmra.mxu0 %v262
        %v982 = vpop.f32.mrf.mxu0
        %v983 = vadd.f32 %v774, %v982
        %984 = vmatmul.f32.gmra.mxu0 %v266
        %v985 = vpop.f32.mrf.mxu0
        %v986 = vadd.f32 %v777, %v985
        %987 = vmatmul.f32.gmra.mxu0 %v270
        %v988 = vpop.f32.mrf.mxu0
        %v989 = vadd.f32 %v780, %v988
        %990 = vmatmul.f32.gmra.mxu0 %v274
        %v991 = vpop.f32.mrf.mxu0
        %v992 = vadd.f32 %v783, %v991
        %993 = vmatmul.f32.gmra.mxu0 %v278
        %v994 = vpop.f32.mrf.mxu0
        %v995 = vadd.f32 %v786, %v994
        %996 = vmatmul.f32.gmra.mxu0 %v282
        %v997 = vpop.f32.mrf.mxu0
        %v998 = vadd.f32 %v789, %v997
        %999 = vmatmul.f32.gmra.mxu0 %v286
        %v1000 = vpop.f32.mrf.mxu0
        %v1001 = vadd.f32 %v792, %v1000
        %1002 = vmatmul.f32.gmra.mxu0 %v290
        %v1003 = vpop.f32.mrf.mxu0
        %v1004 = vadd.f32 %v795, %v1003
        %1005 = vmatmul.f32.gmra.mxu0 %v294
        %v1006 = vpop.f32.mrf.mxu0
        %v1007 = vadd.f32 %v798, %v1006
        %1008 = vmatmul.f32.gmra.mxu0 %v298
        %v1009 = vpop.f32.mrf.mxu0
        %v1010 = vadd.f32 %v801, %v1009
        %1011 = vmatmul.f32.gmra.mxu0 %v302
        %v1012 = vpop.f32.mrf.mxu0
        %v1013 = vadd.f32 %v804, %v1012
        %1014 = vmatmul.f32.gmra.mxu0 %v306
        %v1015 = vpop.f32.mrf.mxu0
        %v1016 = vadd.f32 %v807, %v1015
        %1017 = vmatmul.f32.gmra.mxu0 %v310
        %v1018 = vpop.f32.mrf.mxu0
        %v1019 = vadd.f32 %v810, %v1018
        %1020 = vmatmul.f32.gmra.mxu0 %v314
        %v1021 = vpop.f32.mrf.mxu0
        %v1022 = vadd.f32 %v813, %v1021
        %1023 = vmatmul.f32.gmra.mxu0 %v318
        %v1024 = vpop.f32.mrf.mxu0
        %v1025 = vadd.f32 %v816, %v1024
        %1026 = vmatmul.f32.gmra.mxu0 %v322
        %v1027 = vpop.f32.mrf.mxu0
        %v1028 = vadd.f32 %v819, %v1027
        %1029 = vmatmul.f32.gmra.mxu0 %v326
        %v1030 = vpop.f32.mrf.mxu0
        %v1031 = vadd.f32 %v822, %v1030
        %1032 = vmatmul.f32.gmra.mxu0 %v330
        %v1033 = vpop.f32.mrf.mxu0
        %v1034 = vadd.f32 %v825, %v1033
        %1035 = vmatmul.f32.gmra.mxu0 %v334
        %v1036 = vpop.f32.mrf.mxu0
        %v1037 = vadd.f32 %v828, %v1036
        %1038 = vmatmul.f32.gmra.mxu0 %v338
        %v1039 = vpop.f32.mrf.mxu0
        %v1040 = vadd.f32 %v831, %v1039
        %1041 = vmatmul.f32.gmra.mxu0 %v342
        %v1042 = vpop.f32.mrf.mxu0
        %v1043 = vadd.f32 %v834, %v1042
        %1044 = vmatmul.f32.gmra.mxu0 %v346
        %v1045 = vpop.f32.mrf.mxu0
        %v1046 = vadd.f32 %v837, %v1045
        %1047 = vmatmul.f32.gmra.mxu0 %v350
        %v1048 = vpop.f32.mrf.mxu0
        %v1049 = vadd.f32 %v840, %v1048
        %1050 = vmatmul.f32.gmra.mxu0 %v354
        %v1051 = vpop.f32.mrf.mxu0
        %v1052 = vadd.f32 %v843, %v1051
        %1053 = vmatmul.f32.gmra.mxu0 %v358
        %v1054 = vpop.f32.mrf.mxu0
        %v1055 = vadd.f32 %v846, %v1054
        %1056 = vmatmul.f32.gmra.mxu0 %v362
        %v1057 = vpop.f32.mrf.mxu0
        %v1058 = vadd.f32 %v849, %v1057
        %1059 = vmatmul.f32.gmra.mxu0 %v366
        %v1060 = vpop.f32.mrf.mxu0
        %v1061 = vadd.f32 %v852, %v1060
        %1062 = vmatmul.f32.gmra.mxu0 %v370
        %v1063 = vpop.f32.mrf.mxu0
        %v1064 = vadd.f32 %v855, %v1063
        %1065 = vmatmul.f32.gmra.mxu0 %v374
        %v1066 = vpop.f32.mrf.mxu0
        %v1067 = vadd.f32 %v858, %v1066
        %1068 = vmatmul.f32.gmra.mxu0 %v378
        %v1069 = vpop.f32.mrf.mxu0
        %v1070 = vadd.f32 %v861, %v1069
        %1071 = vmatmul.f32.gmra.mxu0 %v382
        %v1072 = vpop.f32.mrf.mxu0
        %v1073 = vadd.f32 %v864, %v1072
        %1074 = vmatmul.f32.gmra.mxu0 %v386
        %v1075 = vpop.f32.mrf.mxu0
        %v1076 = vadd.f32 %v867, %v1075
        %1077 = vmatmul.f32.gmra.mxu0 %v390
        %v1078 = vpop.f32.mrf.mxu0
        %v1079 = vadd.f32 %v870, %v1078
        %1080 = vmatmul.f32.gmra.mxu0 %v394
        %v1081 = vpop.f32.mrf.mxu0
        %v1082 = vadd.f32 %v873, %v1081
        %1083 = vmatmul.f32.gmra.mxu0 %v398
        %v1084 = vpop.f32.mrf.mxu0
        %v1085 = vadd.f32 %v876, %v1084
        %1086 = vmatmul.f32.gmra.mxu0 %v402
        %v1087 = vpop.f32.mrf.mxu0
        %v1088 = vadd.f32 %v879, %v1087
        %1089 = vmatmul.f32.gmra.mxu0 %v406
        %v1090 = vpop.f32.mrf.mxu0
        %v1091 = vadd.f32 %v882, %v1090
        %1092 = vmatmul.f32.gmra.mxu0 %v410
        %v1093 = vpop.f32.mrf.mxu0
        %v1094 = vadd.f32 %v885, %v1093
        %1095 = vmatmul.f32.gmra.mxu0 %v414
        %v1096 = vpop.f32.mrf.mxu0
        %v1097 = vadd.f32 %v888, %v1096
        %1098 = vmatmul.f32.gmra.mxu0 %v418
        %v1099 = vpop.f32.mrf.mxu0
        %v1100 = vadd.f32 %v891, %v1099
        %1101 = vmatmul.f32.gmra.mxu0 %v422
        %v1102 = vpop.f32.mrf.mxu0
        %v1103 = vadd.f32 %v894, %v1102
        %1104 = vmatmul.f32.gmra.mxu0 %v426
        %v1105 = vpop.f32.mrf.mxu0
        %v1106 = vadd.f32 %v897, %v1105
        %1107 = vmatmul.f32.gmra.mxu0 %v430
        %v1108 = vpop.f32.mrf.mxu0
        %v1109 = vadd.f32 %v900, %v1108
        %1110 = vmatmul.f32.gmra.mxu0 %v434
        %v1111 = vpop.f32.mrf.mxu0
        %v1112 = vadd.f32 %v903, %v1111
        %1113 = vmatmul.f32.gmra.mxu0 %v438
        %v1114 = vpop.f32.mrf.mxu0
        %v1115 = vadd.f32 %v906, %v1114
        %1116 = vmatmul.f32.gmra.mxu0 %v442
        %v1117 = vpop.f32.mrf.mxu0
        %v1118 = vadd.f32 %v909, %v1117
        %1119 = vmatmul.f32.gmra.mxu0 %v446
        %v1120 = vpop.f32.mrf.mxu0
        %v1121 = vadd.f32 %v912, %v1120
        %1122 = vmatmul.f32.gmra.mxu0 %v450
        %v1123 = vpop.f32.mrf.mxu0
        %v1124 = vadd.f32 %v915, %v1123
        %1125 = vmatmul.f32.gmra.mxu0 %v454
        %v1126 = vpop.f32.mrf.mxu0
        %v1127 = vadd.f32 %v918, %v1126
        %1128 = vmatmul.f32.gmra.mxu0 %v458
        %v1129 = vpop.f32.mrf.mxu0
        %v1130 = vadd.f32 %v921, %v1129
        %1131 = vmatmul.f32.gmra.mxu0 %v462
        %v1132 = vpop.f32.mrf.mxu0
        %v1133 = vadd.f32 %v924, %v1132
        %1134 = vmatmul.f32.gmra.mxu0 %v466
        %v1135 = vpop.f32.mrf.mxu0
        %v1136 = vadd.f32 %v927, %v1135
        %1137 = vmatmul.f32.gmra.mxu0 %v470
        %v1138 = vpop.f32.mrf.mxu0
        %v1139 = vadd.f32 %v930, %v1138
        %1140 = vmatmul.f32.gmra.mxu0 %v474
        %v1141 = vpop.f32.mrf.mxu0
        %v1142 = vadd.f32 %v933, %v1141
        %1143 = vmatmul.f32.gmra.mxu0 %v478
        %v1144 = vpop.f32.mrf.mxu0
        %v1145 = vadd.f32 %v936, %v1144
        %1146 = vmatmul.f32.gmra.mxu0 %v482
        %v1147 = vpop.f32.mrf.mxu0
        %v1148 = vadd.f32 %v939, %v1147
        %1149 = vdwg.mxu0
        %1150 = vmatpush.msra.mxu0 %v532
        %1151 = vmatpush.msra.mxu0 %v531
        %1152 = vmatpush.msra.mxu0 %v530
        %1153 = vmatpush.msra.mxu0 %v529
        %1154 = vmatpush.msra.mxu0 %v528
        %1155 = vmatpush.msra.mxu0 %v527
        %1156 = vmatpush.msra.mxu0 %v526
        %1157 = vmatpush.msra.mxu0 %v525
        %1158 = vmatpush.msra.mxu0 %v524
        %1159 = vmatpush.msra.mxu0 %v523
        %1160 = vmatpush.msra.mxu0 %v522
        %1161 = vmatpush.msra.mxu0 %v521
        %1162 = vmatpush.msra.mxu0 %v520
        %1163 = vmatpush.msra.mxu0 %v519
        %1164 = vmatpush.msra.mxu0 %v518
        %1165 = vmatpush.msra.mxu0 %v517
        %1166 = vmatmul.f32.gmra.mxu0 %v231
        %v1167 = vpop.f32.mrf.mxu0
        %v1168 = vadd.f32 %v959, %v1167
        %1169 = vmatmul.f32.gmra.mxu0 %v235
        %v1170 = vpop.f32.mrf.mxu0
        %v1171 = vadd.f32 %v962, %v1170
        %1172 = vmatmul.f32.gmra.mxu0 %v239
        %v1173 = vpop.f32.mrf.mxu0
        %v1174 = vadd.f32 %v965, %v1173
        %1175 = vmatmul.f32.gmra.mxu0 %v243
        %v1176 = vpop.f32.mrf.mxu0
        %v1177 = vadd.f32 %v968, %v1176
        %1178 = vmatmul.f32.gmra.mxu0 %v247
        %v1179 = vpop.f32.mrf.mxu0
        %v1180 = vadd.f32 %v971, %v1179
        %1181 = vmatmul.f32.gmra.mxu0 %v251
        %v1182 = vpop.f32.mrf.mxu0
        %v1183 = vadd.f32 %v974, %v1182
        %1184 = vmatmul.f32.gmra.mxu0 %v255
        %v1185 = vpop.f32.mrf.mxu0
        %v1186 = vadd.f32 %v977, %v1185
        %1187 = vmatmul.f32.gmra.mxu0 %v259
        %v1188 = vpop.f32.mrf.mxu0
        %v1189 = vadd.f32 %v980, %v1188
        %1190 = vmatmul.f32.gmra.mxu0 %v263
        %v1191 = vpop.f32.mrf.mxu0
        %v1192 = vadd.f32 %v983, %v1191
        %1193 = vmatmul.f32.gmra.mxu0 %v267
        %v1194 = vpop.f32.mrf.mxu0
        %v1195 = vadd.f32 %v986, %v1194
        %1196 = vmatmul.f32.gmra.mxu0 %v271
        %v1197 = vpop.f32.mrf.mxu0
        %v1198 = vadd.f32 %v989, %v1197
        %1199 = vmatmul.f32.gmra.mxu0 %v275
        %v1200 = vpop.f32.mrf.mxu0
        %v1201 = vadd.f32 %v992, %v1200
        %1202 = vmatmul.f32.gmra.mxu0 %v279
        %v1203 = vpop.f32.mrf.mxu0
        %v1204 = vadd.f32 %v995, %v1203
        %1205 = vmatmul.f32.gmra.mxu0 %v283
        %v1206 = vpop.f32.mrf.mxu0
        %v1207 = vadd.f32 %v998, %v1206
        %1208 = vmatmul.f32.gmra.mxu0 %v287
        %v1209 = vpop.f32.mrf.mxu0
        %v1210 = vadd.f32 %v1001, %v1209
        %1211 = vmatmul.f32.gmra.mxu0 %v291
        %v1212 = vpop.f32.mrf.mxu0
        %v1213 = vadd.f32 %v1004, %v1212
        %1214 = vmatmul.f32.gmra.mxu0 %v295
        %v1215 = vpop.f32.mrf.mxu0
        %v1216 = vadd.f32 %v1007, %v1215
        %1217 = vmatmul.f32.gmra.mxu0 %v299
        %v1218 = vpop.f32.mrf.mxu0
        %v1219 = vadd.f32 %v1010, %v1218
        %1220 = vmatmul.f32.gmra.mxu0 %v303
        %v1221 = vpop.f32.mrf.mxu0
        %v1222 = vadd.f32 %v1013, %v1221
        %1223 = vmatmul.f32.gmra.mxu0 %v307
        %v1224 = vpop.f32.mrf.mxu0
        %v1225 = vadd.f32 %v1016, %v1224
        %1226 = vmatmul.f32.gmra.mxu0 %v311
        %v1227 = vpop.f32.mrf.mxu0
        %v1228 = vadd.f32 %v1019, %v1227
        %1229 = vmatmul.f32.gmra.mxu0 %v315
        %v1230 = vpop.f32.mrf.mxu0
        %v1231 = vadd.f32 %v1022, %v1230
        %1232 = vmatmul.f32.gmra.mxu0 %v319
        %v1233 = vpop.f32.mrf.mxu0
        %v1234 = vadd.f32 %v1025, %v1233
        %1235 = vmatmul.f32.gmra.mxu0 %v323
        %v1236 = vpop.f32.mrf.mxu0
        %v1237 = vadd.f32 %v1028, %v1236
        %1238 = vmatmul.f32.gmra.mxu0 %v327
        %v1239 = vpop.f32.mrf.mxu0
        %v1240 = vadd.f32 %v1031, %v1239
        %1241 = vmatmul.f32.gmra.mxu0 %v331
        %v1242 = vpop.f32.mrf.mxu0
        %v1243 = vadd.f32 %v1034, %v1242
        %1244 = vmatmul.f32.gmra.mxu0 %v335
        %v1245 = vpop.f32.mrf.mxu0
        %v1246 = vadd.f32 %v1037, %v1245
        %1247 = vmatmul.f32.gmra.mxu0 %v339
        %v1248 = vpop.f32.mrf.mxu0
        %v1249 = vadd.f32 %v1040, %v1248
        %1250 = vmatmul.f32.gmra.mxu0 %v343
        %v1251 = vpop.f32.mrf.mxu0
        %v1252 = vadd.f32 %v1043, %v1251
        %1253 = vmatmul.f32.gmra.mxu0 %v347
        %v1254 = vpop.f32.mrf.mxu0
        %v1255 = vadd.f32 %v1046, %v1254
        %1256 = vmatmul.f32.gmra.mxu0 %v351
        %v1257 = vpop.f32.mrf.mxu0
        %v1258 = vadd.f32 %v1049, %v1257
        %1259 = vmatmul.f32.gmra.mxu0 %v355
        %v1260 = vpop.f32.mrf.mxu0
        %v1261 = vadd.f32 %v1052, %v1260
        %1262 = vmatmul.f32.gmra.mxu0 %v359
        %v1263 = vpop.f32.mrf.mxu0
        %v1264 = vadd.f32 %v1055, %v1263
        %1265 = vmatmul.f32.gmra.mxu0 %v363
        %v1266 = vpop.f32.mrf.mxu0
        %v1267 = vadd.f32 %v1058, %v1266
        %1268 = vmatmul.f32.gmra.mxu0 %v367
        %v1269 = vpop.f32.mrf.mxu0
        %v1270 = vadd.f32 %v1061, %v1269
        %1271 = vmatmul.f32.gmra.mxu0 %v371
        %v1272 = vpop.f32.mrf.mxu0
        %v1273 = vadd.f32 %v1064, %v1272
        %1274 = vmatmul.f32.gmra.mxu0 %v375
        %v1275 = vpop.f32.mrf.mxu0
        %v1276 = vadd.f32 %v1067, %v1275
        %1277 = vmatmul.f32.gmra.mxu0 %v379
        %v1278 = vpop.f32.mrf.mxu0
        %v1279 = vadd.f32 %v1070, %v1278
        %1280 = vmatmul.f32.gmra.mxu0 %v383
        %v1281 = vpop.f32.mrf.mxu0
        %v1282 = vadd.f32 %v1073, %v1281
        %1283 = vmatmul.f32.gmra.mxu0 %v387
        %v1284 = vpop.f32.mrf.mxu0
        %v1285 = vadd.f32 %v1076, %v1284
        %1286 = vmatmul.f32.gmra.mxu0 %v391
        %v1287 = vpop.f32.mrf.mxu0
        %v1288 = vadd.f32 %v1079, %v1287
        %1289 = vmatmul.f32.gmra.mxu0 %v395
        %v1290 = vpop.f32.mrf.mxu0
        %v1291 = vadd.f32 %v1082, %v1290
        %1292 = vmatmul.f32.gmra.mxu0 %v399
        %v1293 = vpop.f32.mrf.mxu0
        %v1294 = vadd.f32 %v1085, %v1293
        %1295 = vmatmul.f32.gmra.mxu0 %v403
        %v1296 = vpop.f32.mrf.mxu0
        %v1297 = vadd.f32 %v1088, %v1296
        %1298 = vmatmul.f32.gmra.mxu0 %v407
        %v1299 = vpop.f32.mrf.mxu0
        %v1300 = vadd.f32 %v1091, %v1299
        %1301 = vmatmul.f32.gmra.mxu0 %v411
        %v1302 = vpop.f32.mrf.mxu0
        %v1303 = vadd.f32 %v1094, %v1302
        %1304 = vmatmul.f32.gmra.mxu0 %v415
        %v1305 = vpop.f32.mrf.mxu0
        %v1306 = vadd.f32 %v1097, %v1305
        %1307 = vmatmul.f32.gmra.mxu0 %v419
        %v1308 = vpop.f32.mrf.mxu0
        %v1309 = vadd.f32 %v1100, %v1308
        %1310 = vmatmul.f32.gmra.mxu0 %v423
        %v1311 = vpop.f32.mrf.mxu0
        %v1312 = vadd.f32 %v1103, %v1311
        %1313 = vmatmul.f32.gmra.mxu0 %v427
        %v1314 = vpop.f32.mrf.mxu0
        %v1315 = vadd.f32 %v1106, %v1314
        %1316 = vmatmul.f32.gmra.mxu0 %v431
        %v1317 = vpop.f32.mrf.mxu0
        %v1318 = vadd.f32 %v1109, %v1317
        %1319 = vmatmul.f32.gmra.mxu0 %v435
        %v1320 = vpop.f32.mrf.mxu0
        %v1321 = vadd.f32 %v1112, %v1320
        %1322 = vmatmul.f32.gmra.mxu0 %v439
        %v1323 = vpop.f32.mrf.mxu0
        %v1324 = vadd.f32 %v1115, %v1323
        %1325 = vmatmul.f32.gmra.mxu0 %v443
        %v1326 = vpop.f32.mrf.mxu0
        %v1327 = vadd.f32 %v1118, %v1326
        %1328 = vmatmul.f32.gmra.mxu0 %v447
        %v1329 = vpop.f32.mrf.mxu0
        %v1330 = vadd.f32 %v1121, %v1329
        %1331 = vmatmul.f32.gmra.mxu0 %v451
        %v1332 = vpop.f32.mrf.mxu0
        %v1333 = vadd.f32 %v1124, %v1332
        %1334 = vmatmul.f32.gmra.mxu0 %v455
        %v1335 = vpop.f32.mrf.mxu0
        %v1336 = vadd.f32 %v1127, %v1335
        %1337 = vmatmul.f32.gmra.mxu0 %v459
        %v1338 = vpop.f32.mrf.mxu0
        %v1339 = vadd.f32 %v1130, %v1338
        %1340 = vmatmul.f32.gmra.mxu0 %v463
        %v1341 = vpop.f32.mrf.mxu0
        %v1342 = vadd.f32 %v1133, %v1341
        %1343 = vmatmul.f32.gmra.mxu0 %v467
        %v1344 = vpop.f32.mrf.mxu0
        %v1345 = vadd.f32 %v1136, %v1344
        %1346 = vmatmul.f32.gmra.mxu0 %v471
        %v1347 = vpop.f32.mrf.mxu0
        %v1348 = vadd.f32 %v1139, %v1347
        %1349 = vmatmul.f32.gmra.mxu0 %v475
        %v1350 = vpop.f32.mrf.mxu0
        %v1351 = vadd.f32 %v1142, %v1350
        %1352 = vmatmul.f32.gmra.mxu0 %v479
        %v1353 = vpop.f32.mrf.mxu0
        %v1354 = vadd.f32 %v1145, %v1353
        %1355 = vmatmul.f32.gmra.mxu0 %v483
        %v1356 = vpop.f32.mrf.mxu0
        %v1357 = vadd.f32 %v1148, %v1356
        %1358 = vdwg.mxu0
        %1359 = vmatpush.msra.mxu0 0.0
        %1360 = vmatpush.msra.mxu0 0.0
        %1361 = vmatpush.msra.mxu0 0.0
        %1362 = vmatpush.msra.mxu0 0.0
        %1363 = vmatpush.msra.mxu0 0.0
        %1364 = vmatpush.msra.mxu0 0.0
        %1365 = vmatpush.msra.mxu0 0.0
        %1366 = vmatpush.msra.mxu0 0.0
        %1367 = vmatpush.msra.mxu0 0.0
        %1368 = vmatpush.msra.mxu0 0.0
        %1369 = vmatpush.msra.mxu0 0.0
        %1370 = vmatpush.msra.mxu0 0.0
        %1371 = vmatpush.msra.mxu0 0.0
        %1372 = vmatpush.msra.mxu0 0.0
        %1373 = vmatpush.msra.mxu0 %v534
        %1374 = vmatpush.msra.mxu0 %v533
        %1375 = vmatmul.f32.gmra.mxu0 %v541
        %v1376 = vpop.f32.mrf.mxu0
        %v1377 = vadd.f32 %v1168, %v1376
        %1378 = vmatmul.f32.gmra.mxu0 %v544
        %v1379 = vpop.f32.mrf.mxu0
        %v1380 = vadd.f32 %v1171, %v1379
        %1381 = vmatmul.f32.gmra.mxu0 %v547
        %v1382 = vpop.f32.mrf.mxu0
        %v1383 = vadd.f32 %v1174, %v1382
        %1384 = vmatmul.f32.gmra.mxu0 %v550
        %v1385 = vpop.f32.mrf.mxu0
        %v1386 = vadd.f32 %v1177, %v1385
        %1387 = vmatmul.f32.gmra.mxu0 %v553
        %v1388 = vpop.f32.mrf.mxu0
        %v1389 = vadd.f32 %v1180, %v1388
        %1390 = vmatmul.f32.gmra.mxu0 %v556
        %v1391 = vpop.f32.mrf.mxu0
        %v1392 = vadd.f32 %v1183, %v1391
        %1393 = vmatmul.f32.gmra.mxu0 %v559
        %v1394 = vpop.f32.mrf.mxu0
        %v1395 = vadd.f32 %v1186, %v1394
        %1396 = vmatmul.f32.gmra.mxu0 %v562
        %v1397 = vpop.f32.mrf.mxu0
        %v1398 = vadd.f32 %v1189, %v1397
        %1399 = vmatmul.f32.gmra.mxu0 %v565
        %v1400 = vpop.f32.mrf.mxu0
        %v1401 = vadd.f32 %v1192, %v1400
        %1402 = vmatmul.f32.gmra.mxu0 %v568
        %v1403 = vpop.f32.mrf.mxu0
        %v1404 = vadd.f32 %v1195, %v1403
        %1405 = vmatmul.f32.gmra.mxu0 %v571
        %v1406 = vpop.f32.mrf.mxu0
        %v1407 = vadd.f32 %v1198, %v1406
        %1408 = vmatmul.f32.gmra.mxu0 %v574
        %v1409 = vpop.f32.mrf.mxu0
        %v1410 = vadd.f32 %v1201, %v1409
        %1411 = vmatmul.f32.gmra.mxu0 %v577
        %v1412 = vpop.f32.mrf.mxu0
        %v1413 = vadd.f32 %v1204, %v1412
        %1414 = vmatmul.f32.gmra.mxu0 %v580
        %v1415 = vpop.f32.mrf.mxu0
        %v1416 = vadd.f32 %v1207, %v1415
        %1417 = vmatmul.f32.gmra.mxu0 %v583
        %v1418 = vpop.f32.mrf.mxu0
        %v1419 = vadd.f32 %v1210, %v1418
        %1420 = vmatmul.f32.gmra.mxu0 %v586
        %v1421 = vpop.f32.mrf.mxu0
        %v1422 = vadd.f32 %v1213, %v1421
        %1423 = vmatmul.f32.gmra.mxu0 %v589
        %v1424 = vpop.f32.mrf.mxu0
        %v1425 = vadd.f32 %v1216, %v1424
        %1426 = vmatmul.f32.gmra.mxu0 %v592
        %v1427 = vpop.f32.mrf.mxu0
        %v1428 = vadd.f32 %v1219, %v1427
        %1429 = vmatmul.f32.gmra.mxu0 %v595
        %v1430 = vpop.f32.mrf.mxu0
        %v1431 = vadd.f32 %v1222, %v1430
        %1432 = vmatmul.f32.gmra.mxu0 %v598
        %v1433 = vpop.f32.mrf.mxu0
        %v1434 = vadd.f32 %v1225, %v1433
        %1435 = vmatmul.f32.gmra.mxu0 %v601
        %v1436 = vpop.f32.mrf.mxu0
        %v1437 = vadd.f32 %v1228, %v1436
        %1438 = vmatmul.f32.gmra.mxu0 %v604
        %v1439 = vpop.f32.mrf.mxu0
        %v1440 = vadd.f32 %v1231, %v1439
        %1441 = vmatmul.f32.gmra.mxu0 %v607
        %v1442 = vpop.f32.mrf.mxu0
        %v1443 = vadd.f32 %v1234, %v1442
        %1444 = vmatmul.f32.gmra.mxu0 %v610
        %v1445 = vpop.f32.mrf.mxu0
        %v1446 = vadd.f32 %v1237, %v1445
        %1447 = vmatmul.f32.gmra.mxu0 %v613
        %v1448 = vpop.f32.mrf.mxu0
        %v1449 = vadd.f32 %v1240, %v1448
        %1450 = vmatmul.f32.gmra.mxu0 %v616
        %v1451 = vpop.f32.mrf.mxu0
        %v1452 = vadd.f32 %v1243, %v1451
        %1453 = vmatmul.f32.gmra.mxu0 %v619
        %v1454 = vpop.f32.mrf.mxu0
        %v1455 = vadd.f32 %v1246, %v1454
        %1456 = vmatmul.f32.gmra.mxu0 %v622
        %v1457 = vpop.f32.mrf.mxu0
        %v1458 = vadd.f32 %v1249, %v1457
        %1459 = vmatmul.f32.gmra.mxu0 %v625
        %v1460 = vpop.f32.mrf.mxu0
        %v1461 = vadd.f32 %v1252, %v1460
        %1462 = vmatmul.f32.gmra.mxu0 %v628
        %v1463 = vpop.f32.mrf.mxu0
        %v1464 = vadd.f32 %v1255, %v1463
        %1465 = vmatmul.f32.gmra.mxu0 %v631
        %v1466 = vpop.f32.mrf.mxu0
        %v1467 = vadd.f32 %v1258, %v1466
        %1468 = vmatmul.f32.gmra.mxu0 %v634
        %v1469 = vpop.f32.mrf.mxu0
        %v1470 = vadd.f32 %v1261, %v1469
        %1471 = vmatmul.f32.gmra.mxu0 %v637
        %v1472 = vpop.f32.mrf.mxu0
        %v1473 = vadd.f32 %v1264, %v1472
        %1474 = vmatmul.f32.gmra.mxu0 %v640
        %v1475 = vpop.f32.mrf.mxu0
        %v1476 = vadd.f32 %v1267, %v1475
        %1477 = vmatmul.f32.gmra.mxu0 %v643
        %v1478 = vpop.f32.mrf.mxu0
        %v1479 = vadd.f32 %v1270, %v1478
        %1480 = vmatmul.f32.gmra.mxu0 %v646
        %v1481 = vpop.f32.mrf.mxu0
        %v1482 = vadd.f32 %v1273, %v1481
        %1483 = vmatmul.f32.gmra.mxu0 %v649
        %v1484 = vpop.f32.mrf.mxu0
        %v1485 = vadd.f32 %v1276, %v1484
        %1486 = vmatmul.f32.gmra.mxu0 %v652
        %v1487 = vpop.f32.mrf.mxu0
        %v1488 = vadd.f32 %v1279, %v1487
        %1489 = vmatmul.f32.gmra.mxu0 %v655
        %v1490 = vpop.f32.mrf.mxu0
        %v1491 = vadd.f32 %v1282, %v1490
        %1492 = vmatmul.f32.gmra.mxu0 %v658
        %v1493 = vpop.f32.mrf.mxu0
        %v1494 = vadd.f32 %v1285, %v1493
        %1495 = vmatmul.f32.gmra.mxu0 %v661
        %v1496 = vpop.f32.mrf.mxu0
        %v1497 = vadd.f32 %v1288, %v1496
        %1498 = vmatmul.f32.gmra.mxu0 %v664
        %v1499 = vpop.f32.mrf.mxu0
        %v1500 = vadd.f32 %v1291, %v1499
        %1501 = vmatmul.f32.gmra.mxu0 %v667
        %v1502 = vpop.f32.mrf.mxu0
        %v1503 = vadd.f32 %v1294, %v1502
        %1504 = vmatmul.f32.gmra.mxu0 %v670
        %v1505 = vpop.f32.mrf.mxu0
        %v1506 = vadd.f32 %v1297, %v1505
        %1507 = vmatmul.f32.gmra.mxu0 %v673
        %v1508 = vpop.f32.mrf.mxu0
        %v1509 = vadd.f32 %v1300, %v1508
        %1510 = vmatmul.f32.gmra.mxu0 %v676
        %v1511 = vpop.f32.mrf.mxu0
        %v1512 = vadd.f32 %v1303, %v1511
        %1513 = vmatmul.f32.gmra.mxu0 %v679
        %v1514 = vpop.f32.mrf.mxu0
        %v1515 = vadd.f32 %v1306, %v1514
        %1516 = vmatmul.f32.gmra.mxu0 %v682
        %v1517 = vpop.f32.mrf.mxu0
        %v1518 = vadd.f32 %v1309, %v1517
        %1519 = vmatmul.f32.gmra.mxu0 %v685
        %v1520 = vpop.f32.mrf.mxu0
        %v1521 = vadd.f32 %v1312, %v1520
        %1522 = vmatmul.f32.gmra.mxu0 %v688
        %v1523 = vpop.f32.mrf.mxu0
        %v1524 = vadd.f32 %v1315, %v1523
        %1525 = vmatmul.f32.gmra.mxu0 %v691
        %v1526 = vpop.f32.mrf.mxu0
        %v1527 = vadd.f32 %v1318, %v1526
        %1528 = vmatmul.f32.gmra.mxu0 %v694
        %v1529 = vpop.f32.mrf.mxu0
        %v1530 = vadd.f32 %v1321, %v1529
        %1531 = vmatmul.f32.gmra.mxu0 %v697
        %v1532 = vpop.f32.mrf.mxu0
        %v1533 = vadd.f32 %v1324, %v1532
        %1534 = vmatmul.f32.gmra.mxu0 %v700
        %v1535 = vpop.f32.mrf.mxu0
        %v1536 = vadd.f32 %v1327, %v1535
        %1537 = vmatmul.f32.gmra.mxu0 %v703
        %v1538 = vpop.f32.mrf.mxu0
        %v1539 = vadd.f32 %v1330, %v1538
        %1540 = vmatmul.f32.gmra.mxu0 %v706
        %v1541 = vpop.f32.mrf.mxu0
        %v1542 = vadd.f32 %v1333, %v1541
        %1543 = vmatmul.f32.gmra.mxu0 %v709
        %v1544 = vpop.f32.mrf.mxu0
        %v1545 = vadd.f32 %v1336, %v1544
        %1546 = vmatmul.f32.gmra.mxu0 %v712
        %v1547 = vpop.f32.mrf.mxu0
        %v1548 = vadd.f32 %v1339, %v1547
        %1549 = vmatmul.f32.gmra.mxu0 %v715
        %v1550 = vpop.f32.mrf.mxu0
        %v1551 = vadd.f32 %v1342, %v1550
        %1552 = vmatmul.f32.gmra.mxu0 %v718
        %v1553 = vpop.f32.mrf.mxu0
        %v1554 = vadd.f32 %v1345, %v1553
        %1555 = vmatmul.f32.gmra.mxu0 %v721
        %v1556 = vpop.f32.mrf.mxu0
        %v1557 = vadd.f32 %v1348, %v1556
        %1558 = vmatmul.f32.gmra.mxu0 %v724
        %v1559 = vpop.f32.mrf.mxu0
        %v1560 = vadd.f32 %v1351, %v1559
        %1561 = vmatmul.f32.gmra.mxu0 %v727
        %v1562 = vpop.f32.mrf.mxu0
        %v1563 = vadd.f32 %v1354, %v1562
        %1564 = vmatmul.f32.gmra.mxu0 %v730
        %v1565 = vpop.f32.mrf.mxu0
        %v1566 = vadd.f32 %v1357, %v1565
        %1567 = vdwg.mxu0
        %v1568 = vmax.f32 %v1377, 0.0
        %v1569 = vmax.f32 %v1380, 0.0
        %v1570 = vmax.f32 %v1383, 0.0
        %v1571 = vmax.f32 %v1386, 0.0
        %v1572 = vmax.f32 %v1389, 0.0
        %v1573 = vmax.f32 %v1392, 0.0
        %v1574 = vmax.f32 %v1395, 0.0
        %v1575 = vmax.f32 %v1398, 0.0
        %v1576 = vmax.f32 %v1401, 0.0
        %v1577 = vmax.f32 %v1404, 0.0
        %v1578 = vmax.f32 %v1407, 0.0
        %v1579 = vmax.f32 %v1410, 0.0
        %v1580 = vmax.f32 %v1413, 0.0
        %v1581 = vmax.f32 %v1416, 0.0
        %v1582 = vmax.f32 %v1419, 0.0
        %v1583 = vmax.f32 %v1422, 0.0
        %v1584 = vmax.f32 %v1425, 0.0
        %v1585 = vmax.f32 %v1428, 0.0
        %v1586 = vmax.f32 %v1431, 0.0
        %v1587 = vmax.f32 %v1434, 0.0
        %v1588 = vmax.f32 %v1437, 0.0
        %v1589 = vmax.f32 %v1440, 0.0
        %v1590 = vmax.f32 %v1443, 0.0
        %v1591 = vmax.f32 %v1446, 0.0
        %v1592 = vmax.f32 %v1449, 0.0
        %v1593 = vmax.f32 %v1452, 0.0
        %v1594 = vmax.f32 %v1455, 0.0
        %v1595 = vmax.f32 %v1458, 0.0
        %v1596 = vmax.f32 %v1461, 0.0
        %v1597 = vmax.f32 %v1464, 0.0
        %v1598 = vmax.f32 %v1467, 0.0
        %v1599 = vmax.f32 %v1470, 0.0
        %v1600 = vmax.f32 %v1473, 0.0
        %v1601 = vmax.f32 %v1476, 0.0
        %v1602 = vmax.f32 %v1479, 0.0
        %v1603 = vmax.f32 %v1482, 0.0
        %v1604 = vmax.f32 %v1485, 0.0
        %v1605 = vmax.f32 %v1488, 0.0
        %v1606 = vmax.f32 %v1491, 0.0
        %v1607 = vmax.f32 %v1494, 0.0
        %v1608 = vmax.f32 %v1497, 0.0
        %v1609 = vmax.f32 %v1500, 0.0
        %v1610 = vmax.f32 %v1503, 0.0
        %v1611 = vmax.f32 %v1506, 0.0
        %v1612 = vmax.f32 %v1509, 0.0
        %v1613 = vmax.f32 %v1512, 0.0
        %v1614 = vmax.f32 %v1515, 0.0
        %v1615 = vmax.f32 %v1518, 0.0
        %v1616 = vmax.f32 %v1521, 0.0
        %v1617 = vmax.f32 %v1524, 0.0
        %v1618 = vmax.f32 %v1527, 0.0
        %v1619 = vmax.f32 %v1530, 0.0
        %v1620 = vmax.f32 %v1533, 0.0
        %v1621 = vmax.f32 %v1536, 0.0
        %v1622 = vmax.f32 %v1539, 0.0
        %v1623 = vmax.f32 %v1542, 0.0
        %v1624 = vmax.f32 %v1545, 0.0
        %v1625 = vmax.f32 %v1548, 0.0
        %v1626 = vmax.f32 %v1551, 0.0
        %v1627 = vmax.f32 %v1554, 0.0
        %v1628 = vmax.f32 %v1557, 0.0
        %v1629 = vmax.f32 %v1560, 0.0
        %v1630 = vmax.f32 %v1563, 0.0
        %v1631 = vmax.f32 %v1566, 0.0
        %v1632 = vld [vmem:[%s3] sm:$0xff]
        %v1633 = vld [vmem:[%s3 + $0x8] sm:$0xff]
        %v1634 = vld [vmem:[%s3 + $0x10] sm:$0xff]
        %v1635 = vld [vmem:[%s3 + $0x18] sm:$0x3f]
        %v1636 = vld [vmem:[%s4] sm:$0x1]
        %v1638 = vperm.slane %v1636, 0
        %vm1640 = vcmask 244736
        %v1642 = vsel %vm1640, %v1568, 0
        %v1645 = vsel %vm1640, %v1569, 0
        %v1648 = vsel %vm1640, %v1570, 0
        %v1651 = vsel %vm1640, %v1571, 0
        %v1654 = vsel %vm1640, %v1572, 0
        %v1657 = vsel %vm1640, %v1573, 0
        %v1660 = vsel %vm1640, %v1574, 0
        %v1663 = vsel %vm1640, %v1575, 0
        %v1666 = vsel %vm1640, %v1576, 0
        %v1669 = vsel %vm1640, %v1577, 0
        %v1672 = vsel %vm1640, %v1578, 0
        %v1675 = vsel %vm1640, %v1579, 0
        %v1678 = vsel %vm1640, %v1580, 0
        %v1681 = vsel %vm1640, %v1581, 0
        %v1684 = vsel %vm1640, %v1582, 0
        %v1687 = vsel %vm1640, %v1583, 0
        %v1690 = vsel %vm1640, %v1584, 0
        %v1693 = vsel %vm1640, %v1585, 0
        %v1696 = vsel %vm1640, %v1586, 0
        %v1699 = vsel %vm1640, %v1587, 0
        %v1702 = vsel %vm1640, %v1588, 0
        %v1705 = vsel %vm1640, %v1589, 0
        %v1708 = vsel %vm1640, %v1590, 0
        %v1711 = vsel %vm1640, %v1591, 0
        %v1714 = vsel %vm1640, %v1592, 0
        %v1717 = vsel %vm1640, %v1593, 0
        %v1720 = vsel %vm1640, %v1594, 0
        %v1723 = vsel %vm1640, %v1595, 0
        %v1726 = vsel %vm1640, %v1596, 0
        %v1729 = vsel %vm1640, %v1597, 0
        %v1732 = vsel %vm1640, %v1598, 0
        %v1735 = vsel %vm1640, %v1599, 0
        %v1738 = vsel %vm1640, %v1600, 0
        %v1741 = vsel %vm1640, %v1601, 0
        %v1744 = vsel %vm1640, %v1602, 0
        %v1747 = vsel %vm1640, %v1603, 0
        %v1750 = vsel %vm1640, %v1604, 0
        %v1753 = vsel %vm1640, %v1605, 0
        %v1756 = vsel %vm1640, %v1606, 0
        %v1759 = vsel %vm1640, %v1607, 0
        %v1762 = vsel %vm1640, %v1608, 0
        %v1765 = vsel %vm1640, %v1609, 0
        %v1768 = vsel %vm1640, %v1610, 0
        %v1771 = vsel %vm1640, %v1611, 0
        %v1774 = vsel %vm1640, %v1612, 0
        %v1777 = vsel %vm1640, %v1613, 0
        %v1780 = vsel %vm1640, %v1614, 0
        %v1783 = vsel %vm1640, %v1615, 0
        %v1786 = vsel %vm1640, %v1616, 0
        %v1789 = vsel %vm1640, %v1617, 0
        %v1792 = vsel %vm1640, %v1618, 0
        %v1795 = vsel %vm1640, %v1619, 0
        %v1798 = vsel %vm1640, %v1620, 0
        %v1801 = vsel %vm1640, %v1621, 0
        %v1804 = vsel %vm1640, %v1622, 0
        %v1807 = vsel %vm1640, %v1623, 0
        %v1810 = vsel %vm1640, %v1624, 0
        %v1813 = vsel %vm1640, %v1625, 0
        %v1816 = vsel %vm1640, %v1626, 0
        %v1819 = vsel %vm1640, %v1627, 0
        %v1822 = vsel %vm1640, %v1628, 0
        %v1825 = vsel %vm1640, %v1629, 0
        %v1828 = vsel %vm1640, %v1630, 0
        %v1831 = vsel %vm1640, %v1631, 0
        %vm1833 = vcmask 1045504
        %v1835 = vsel %vm1833, %v1635, 0
        %1837 = vmatpush.msra.mxu0 0.0
        %1838 = vmatpush.msra.mxu0 0.0
        %1839 = vmatpush.msra.mxu0 0.0
        %1840 = vmatpush.msra.mxu0 0.0
        %1841 = vmatpush.msra.mxu0 0.0
        %1842 = vmatpush.msra.mxu0 0.0
        %1843 = vmatpush.msra.mxu0 0.0
        %1844 = vmatpush.msra.mxu0 0.0
        %1845 = vmatpush.msra.mxu0 0.0
        %1846 = vmatpush.msra.mxu0 0.0
        %1847 = vmatpush.msra.mxu0 0.0
        %1848 = vmatpush.msra.mxu0 0.0
        %1849 = vmatpush.msra.mxu0 %v1835
        %1850 = vmatpush.msra.mxu0 %v1634
        %1851 = vmatpush.msra.mxu0 %v1633
        %1852 = vmatpush.msra.mxu0 %v1632
        %1853 = vmatmul.f32.gmra.mxu0 %v1642
        %v1854 = vpop.f32.mrf.mxu0
        %v1855 = vadd.f32 %v1638, %v1854
        %1856 = vmatmul.f32.gmra.mxu0 %v1645
        %v1857 = vpop.f32.mrf.mxu0
        %v1858 = vadd.f32 %v1638, %v1857
        %1859 = vmatmul.f32.gmra.mxu0 %v1648
        %v1860 = vpop.f32.mrf.mxu0
        %v1861 = vadd.f32 %v1638, %v1860
        %1862 = vmatmul.f32.gmra.mxu0 %v1651
        %v1863 = vpop.f32.mrf.mxu0
        %v1864 = vadd.f32 %v1638, %v1863
        %1865 = vmatmul.f32.gmra.mxu0 %v1654
        %v1866 = vpop.f32.mrf.mxu0
        %v1867 = vadd.f32 %v1638, %v1866
        %1868 = vmatmul.f32.gmra.mxu0 %v1657
        %v1869 = vpop.f32.mrf.mxu0
        %v1870 = vadd.f32 %v1638, %v1869
        %1871 = vmatmul.f32.gmra.mxu0 %v1660
        %v1872 = vpop.f32.mrf.mxu0
        %v1873 = vadd.f32 %v1638, %v1872
        %1874 = vmatmul.f32.gmra.mxu0 %v1663
        %v1875 = vpop.f32.mrf.mxu0
        %v1876 = vadd.f32 %v1638, %v1875
        %1877 = vmatmul.f32.gmra.mxu0 %v1666
        %v1878 = vpop.f32.mrf.mxu0
        %v1879 = vadd.f32 %v1638, %v1878
        %1880 = vmatmul.f32.gmra.mxu0 %v1669
        %v1881 = vpop.f32.mrf.mxu0
        %v1882 = vadd.f32 %v1638, %v1881
        %1883 = vmatmul.f32.gmra.mxu0 %v1672
        %v1884 = vpop.f32.mrf.mxu0
        %v1885 = vadd.f32 %v1638, %v1884
        %1886 = vmatmul.f32.gmra.mxu0 %v1675
        %v1887 = vpop.f32.mrf.mxu0
        %v1888 = vadd.f32 %v1638, %v1887
        %1889 = vmatmul.f32.gmra.mxu0 %v1678
        %v1890 = vpop.f32.mrf.mxu0
        %v1891 = vadd.f32 %v1638, %v1890
        %1892 = vmatmul.f32.gmra.mxu0 %v1681
        %v1893 = vpop.f32.mrf.mxu0
        %v1894 = vadd.f32 %v1638, %v1893
        %1895 = vmatmul.f32.gmra.mxu0 %v1684
        %v1896 = vpop.f32.mrf.mxu0
        %v1897 = vadd.f32 %v1638, %v1896
        %1898 = vmatmul.f32.gmra.mxu0 %v1687
        %v1899 = vpop.f32.mrf.mxu0
        %v1900 = vadd.f32 %v1638, %v1899
        %1901 = vmatmul.f32.gmra.mxu0 %v1690
        %v1902 = vpop.f32.mrf.mxu0
        %v1903 = vadd.f32 %v1638, %v1902
        %1904 = vmatmul.f32.gmra.mxu0 %v1693
        %v1905 = vpop.f32.mrf.mxu0
        %v1906 = vadd.f32 %v1638, %v1905
        %1907 = vmatmul.f32.gmra.mxu0 %v1696
        %v1908 = vpop.f32.mrf.mxu0
        %v1909 = vadd.f32 %v1638, %v1908
        %1910 = vmatmul.f32.gmra.mxu0 %v1699
        %v1911 = vpop.f32.mrf.mxu0
        %v1912 = vadd.f32 %v1638, %v1911
        %1913 = vmatmul.f32.gmra.mxu0 %v1702
        %v1914 = vpop.f32.mrf.mxu0
        %v1915 = vadd.f32 %v1638, %v1914
        %1916 = vmatmul.f32.gmra.mxu0 %v1705
        %v1917 = vpop.f32.mrf.mxu0
        %v1918 = vadd.f32 %v1638, %v1917
        %1919 = vmatmul.f32.gmra.mxu0 %v1708
        %v1920 = vpop.f32.mrf.mxu0
        %v1921 = vadd.f32 %v1638, %v1920
        %1922 = vmatmul.f32.gmra.mxu0 %v1711
        %v1923 = vpop.f32.mrf.mxu0
        %v1924 = vadd.f32 %v1638, %v1923
        %1925 = vmatmul.f32.gmra.mxu0 %v1714
        %v1926 = vpop.f32.mrf.mxu0
        %v1927 = vadd.f32 %v1638, %v1926
        %1928 = vmatmul.f32.gmra.mxu0 %v1717
        %v1929 = vpop.f32.mrf.mxu0
        %v1930 = vadd.f32 %v1638, %v1929
        %1931 = vmatmul.f32.gmra.mxu0 %v1720
        %v1932 = vpop.f32.mrf.mxu0
        %v1933 = vadd.f32 %v1638, %v1932
        %1934 = vmatmul.f32.gmra.mxu0 %v1723
        %v1935 = vpop.f32.mrf.mxu0
        %v1936 = vadd.f32 %v1638, %v1935
        %1937 = vmatmul.f32.gmra.mxu0 %v1726
        %v1938 = vpop.f32.mrf.mxu0
        %v1939 = vadd.f32 %v1638, %v1938
        %1940 = vmatmul.f32.gmra.mxu0 %v1729
        %v1941 = vpop.f32.mrf.mxu0
        %v1942 = vadd.f32 %v1638, %v1941
        %1943 = vmatmul.f32.gmra.mxu0 %v1732
        %v1944 = vpop.f32.mrf.mxu0
        %v1945 = vadd.f32 %v1638, %v1944
        %1946 = vmatmul.f32.gmra.mxu0 %v1735
        %v1947 = vpop.f32.mrf.mxu0
        %v1948 = vadd.f32 %v1638, %v1947
        %1949 = vmatmul.f32.gmra.mxu0 %v1738
        %v1950 = vpop.f32.mrf.mxu0
        %v1951 = vadd.f32 %v1638, %v1950
        %1952 = vmatmul.f32.gmra.mxu0 %v1741
        %v1953 = vpop.f32.mrf.mxu0
        %v1954 = vadd.f32 %v1638, %v1953
        %1955 = vmatmul.f32.gmra.mxu0 %v1744
        %v1956 = vpop.f32.mrf.mxu0
        %v1957 = vadd.f32 %v1638, %v1956
        %1958 = vmatmul.f32.gmra.mxu0 %v1747
        %v1959 = vpop.f32.mrf.mxu0
        %v1960 = vadd.f32 %v1638, %v1959
        %1961 = vmatmul.f32.gmra.mxu0 %v1750
        %v1962 = vpop.f32.mrf.mxu0
        %v1963 = vadd.f32 %v1638, %v1962
        %1964 = vmatmul.f32.gmra.mxu0 %v1753
        %v1965 = vpop.f32.mrf.mxu0
        %v1966 = vadd.f32 %v1638, %v1965
        %1967 = vmatmul.f32.gmra.mxu0 %v1756
        %v1968 = vpop.f32.mrf.mxu0
        %v1969 = vadd.f32 %v1638, %v1968
        %1970 = vmatmul.f32.gmra.mxu0 %v1759
        %v1971 = vpop.f32.mrf.mxu0
        %v1972 = vadd.f32 %v1638, %v1971
        %1973 = vmatmul.f32.gmra.mxu0 %v1762
        %v1974 = vpop.f32.mrf.mxu0
        %v1975 = vadd.f32 %v1638, %v1974
        %1976 = vmatmul.f32.gmra.mxu0 %v1765
        %v1977 = vpop.f32.mrf.mxu0
        %v1978 = vadd.f32 %v1638, %v1977
        %1979 = vmatmul.f32.gmra.mxu0 %v1768
        %v1980 = vpop.f32.mrf.mxu0
        %v1981 = vadd.f32 %v1638, %v1980
        %1982 = vmatmul.f32.gmra.mxu0 %v1771
        %v1983 = vpop.f32.mrf.mxu0
        %v1984 = vadd.f32 %v1638, %v1983
        %1985 = vmatmul.f32.gmra.mxu0 %v1774
        %v1986 = vpop.f32.mrf.mxu0
        %v1987 = vadd.f32 %v1638, %v1986
        %1988 = vmatmul.f32.gmra.mxu0 %v1777
        %v1989 = vpop.f32.mrf.mxu0
        %v1990 = vadd.f32 %v1638, %v1989
        %1991 = vmatmul.f32.gmra.mxu0 %v1780
        %v1992 = vpop.f32.mrf.mxu0
        %v1993 = vadd.f32 %v1638, %v1992
        %1994 = vmatmul.f32.gmra.mxu0 %v1783
        %v1995 = vpop.f32.mrf.mxu0
        %v1996 = vadd.f32 %v1638, %v1995
        %1997 = vmatmul.f32.gmra.mxu0 %v1786
        %v1998 = vpop.f32.mrf.mxu0
        %v1999 = vadd.f32 %v1638, %v1998
        %2000 = vmatmul.f32.gmra.mxu0 %v1789
        %v2001 = vpop.f32.mrf.mxu0
        %v2002 = vadd.f32 %v1638, %v2001
        %2003 = vmatmul.f32.gmra.mxu0 %v1792
        %v2004 = vpop.f32.mrf.mxu0
        %v2005 = vadd.f32 %v1638, %v2004
        %2006 = vmatmul.f32.gmra.mxu0 %v1795
        %v2007 = vpop.f32.mrf.mxu0
        %v2008 = vadd.f32 %v1638, %v2007
        %2009 = vmatmul.f32.gmra.mxu0 %v1798
        %v2010 = vpop.f32.mrf.mxu0
        %v2011 = vadd.f32 %v1638, %v2010
        %2012 = vmatmul.f32.gmra.mxu0 %v1801
        %v2013 = vpop.f32.mrf.mxu0
        %v2014 = vadd.f32 %v1638, %v2013
        %2015 = vmatmul.f32.gmra.mxu0 %v1804
        %v2016 = vpop.f32.mrf.mxu0
        %v2017 = vadd.f32 %v1638, %v2016
        %2018 = vmatmul.f32.gmra.mxu0 %v1807
        %v2019 = vpop.f32.mrf.mxu0
        %v2020 = vadd.f32 %v1638, %v2019
        %2021 = vmatmul.f32.gmra.mxu0 %v1810
        %v2022 = vpop.f32.mrf.mxu0
        %v2023 = vadd.f32 %v1638, %v2022
        %2024 = vmatmul.f32.gmra.mxu0 %v1813
        %v2025 = vpop.f32.mrf.mxu0
        %v2026 = vadd.f32 %v1638, %v2025
        %2027 = vmatmul.f32.gmra.mxu0 %v1816
        %v2028 = vpop.f32.mrf.mxu0
        %v2029 = vadd.f32 %v1638, %v2028
        %2030 = vmatmul.f32.gmra.mxu0 %v1819
        %v2031 = vpop.f32.mrf.mxu0
        %v2032 = vadd.f32 %v1638, %v2031
        %2033 = vmatmul.f32.gmra.mxu0 %v1822
        %v2034 = vpop.f32.mrf.mxu0
        %v2035 = vadd.f32 %v1638, %v2034
        %2036 = vmatmul.f32.gmra.mxu0 %v1825
        %v2037 = vpop.f32.mrf.mxu0
        %v2038 = vadd.f32 %v1638, %v2037
        %2039 = vmatmul.f32.gmra.mxu0 %v1828
        %v2040 = vpop.f32.mrf.mxu0
        %v2041 = vadd.f32 %v1638, %v2040
        %2042 = vmatmul.f32.gmra.mxu0 %v1831
        %v2043 = vpop.f32.mrf.mxu0
        %v2044 = vadd.f32 %v1638, %v2043
        %2045 = vdwg.mxu0
        %2046 = vmax.xlane.f32.xlu0 %v1855
        %v2047 = vpop.xlane.xlu0 %2046
        %2048 = vmax.xlane.f32.xlu0 %v1858
        %v2049 = vpop.xlane.xlu0 %2048
        %2050 = vmax.xlane.f32.xlu0 %v1861
        %v2051 = vpop.xlane.xlu0 %2050
        %2052 = vmax.xlane.f32.xlu0 %v1864
        %v2053 = vpop.xlane.xlu0 %2052
        %2054 = vmax.xlane.f32.xlu0 %v1867
        %v2055 = vpop.xlane.xlu0 %2054
        %2056 = vmax.xlane.f32.xlu0 %v1870
        %v2057 = vpop.xlane.xlu0 %2056
        %2058 = vmax.xlane.f32.xlu0 %v1873
        %v2059 = vpop.xlane.xlu0 %2058
        %2060 = vmax.xlane.f32.xlu0 %v1876
        %v2061 = vpop.xlane.xlu0 %2060
        %2062 = vmax.xlane.f32.xlu0 %v1879
        %v2063 = vpop.xlane.xlu0 %2062
        %2064 = vmax.xlane.f32.xlu0 %v1882
        %v2065 = vpop.xlane.xlu0 %2064
        %2066 = vmax.xlane.f32.xlu0 %v1885
        %v2067 = vpop.xlane.xlu0 %2066
        %2068 = vmax.xlane.f32.xlu0 %v1888
        %v2069 = vpop.xlane.xlu0 %2068
        %2070 = vmax.xlane.f32.xlu0 %v1891
        %v2071 = vpop.xlane.xlu0 %2070
        %2072 = vmax.xlane.f32.xlu0 %v1894
        %v2073 = vpop.xlane.xlu0 %2072
        %2074 = vmax.xlane.f32.xlu0 %v1897
        %v2075 = vpop.xlane.xlu0 %2074
        %2076 = vmax.xlane.f32.xlu0 %v1900
        %v2077 = vpop.xlane.xlu0 %2076
        %2078 = vmax.xlane.f32.xlu0 %v1903
        %v2079 = vpop.xlane.xlu0 %2078
        %2080 = vmax.xlane.f32.xlu0 %v1906
        %v2081 = vpop.xlane.xlu0 %2080
        %2082 = vmax.xlane.f32.xlu0 %v1909
        %v2083 = vpop.xlane.xlu0 %2082
        %2084 = vmax.xlane.f32.xlu0 %v1912
        %v2085 = vpop.xlane.xlu0 %2084
        %2086 = vmax.xlane.f32.xlu0 %v1915
        %v2087 = vpop.xlane.xlu0 %2086
        %2088 = vmax.xlane.f32.xlu0 %v1918
        %v2089 = vpop.xlane.xlu0 %2088
        %2090 = vmax.xlane.f32.xlu0 %v1921
        %v2091 = vpop.xlane.xlu0 %2090
        %2092 = vmax.xlane.f32.xlu0 %v1924
        %v2093 = vpop.xlane.xlu0 %2092
        %2094 = vmax.xlane.f32.xlu0 %v1927
        %v2095 = vpop.xlane.xlu0 %2094
        %2096 = vmax.xlane.f32.xlu0 %v1930
        %v2097 = vpop.xlane.xlu0 %2096
        %2098 = vmax.xlane.f32.xlu0 %v1933
        %v2099 = vpop.xlane.xlu0 %2098
        %2100 = vmax.xlane.f32.xlu0 %v1936
        %v2101 = vpop.xlane.xlu0 %2100
        %2102 = vmax.xlane.f32.xlu0 %v1939
        %v2103 = vpop.xlane.xlu0 %2102
        %2104 = vmax.xlane.f32.xlu0 %v1942
        %v2105 = vpop.xlane.xlu0 %2104
        %2106 = vmax.xlane.f32.xlu0 %v1945
        %v2107 = vpop.xlane.xlu0 %2106
        %2108 = vmax.xlane.f32.xlu0 %v1948
        %v2109 = vpop.xlane.xlu0 %2108
        %2110 = vmax.xlane.f32.xlu0 %v1951
        %v2111 = vpop.xlane.xlu0 %2110
        %2112 = vmax.xlane.f32.xlu0 %v1954
        %v2113 = vpop.xlane.xlu0 %2112
        %2114 = vmax.xlane.f32.xlu0 %v1957
        %v2115 = vpop.xlane.xlu0 %2114
        %2116 = vmax.xlane.f32.xlu0 %v1960
        %v2117 = vpop.xlane.xlu0 %2116
        %2118 = vmax.xlane.f32.xlu0 %v1963
        %v2119 = vpop.xlane.xlu0 %2118
        %2120 = vmax.xlane.f32.xlu0 %v1966
        %v2121 = vpop.xlane.xlu0 %2120
        %2122 = vmax.xlane.f32.xlu0 %v1969
        %v2123 = vpop.xlane.xlu0 %2122
        %2124 = vmax.xlane.f32.xlu0 %v1972
        %v2125 = vpop.xlane.xlu0 %2124
        %2126 = vmax.xlane.f32.xlu0 %v1975
        %v2127 = vpop.xlane.xlu0 %2126
        %2128 = vmax.xlane.f32.xlu0 %v1978
        %v2129 = vpop.xlane.xlu0 %2128
        %2130 = vmax.xlane.f32.xlu0 %v1981
        %v2131 = vpop.xlane.xlu0 %2130
        %2132 = vmax.xlane.f32.xlu0 %v1984
        %v2133 = vpop.xlane.xlu0 %2132
        %2134 = vmax.xlane.f32.xlu0 %v1987
        %v2135 = vpop.xlane.xlu0 %2134
        %2136 = vmax.xlane.f32.xlu0 %v1990
        %v2137 = vpop.xlane.xlu0 %2136
        %2138 = vmax.xlane.f32.xlu0 %v1993
        %v2139 = vpop.xlane.xlu0 %2138
        %2140 = vmax.xlane.f32.xlu0 %v1996
        %v2141 = vpop.xlane.xlu0 %2140
        %2142 = vmax.xlane.f32.xlu0 %v1999
        %v2143 = vpop.xlane.xlu0 %2142
        %2144 = vmax.xlane.f32.xlu0 %v2002
        %v2145 = vpop.xlane.xlu0 %2144
        %2146 = vmax.xlane.f32.xlu0 %v2005
        %v2147 = vpop.xlane.xlu0 %2146
        %2148 = vmax.xlane.f32.xlu0 %v2008
        %v2149 = vpop.xlane.xlu0 %2148
        %2150 = vmax.xlane.f32.xlu0 %v2011
        %v2151 = vpop.xlane.xlu0 %2150
        %2152 = vmax.xlane.f32.xlu0 %v2014
        %v2153 = vpop.xlane.xlu0 %2152
        %2154 = vmax.xlane.f32.xlu0 %v2017
        %v2155 = vpop.xlane.xlu0 %2154
        %2156 = vmax.xlane.f32.xlu0 %v2020
        %v2157 = vpop.xlane.xlu0 %2156
        %2158 = vmax.xlane.f32.xlu0 %v2023
        %v2159 = vpop.xlane.xlu0 %2158
        %2160 = vmax.xlane.f32.xlu0 %v2026
        %v2161 = vpop.xlane.xlu0 %2160
        %2162 = vmax.xlane.f32.xlu0 %v2029
        %v2163 = vpop.xlane.xlu0 %2162
        %2164 = vmax.xlane.f32.xlu0 %v2032
        %v2165 = vpop.xlane.xlu0 %2164
        %2166 = vmax.xlane.f32.xlu0 %v2035
        %v2167 = vpop.xlane.xlu0 %2166
        %2168 = vmax.xlane.f32.xlu0 %v2038
        %v2169 = vpop.xlane.xlu0 %2168
        %2170 = vmax.xlane.f32.xlu0 %v2041
        %v2171 = vpop.xlane.xlu0 %2170
        %2172 = vmax.xlane.f32.xlu0 %v2044
        %v2173 = vpop.xlane.xlu0 %2172
        %v2174 = vsub.f32 %v1855, %v2047
        %v2175 = vsub.f32 %v1858, %v2049
        %v2176 = vsub.f32 %v1861, %v2051
        %v2177 = vsub.f32 %v1864, %v2053
        %v2178 = vsub.f32 %v1867, %v2055
        %v2179 = vsub.f32 %v1870, %v2057
        %v2180 = vsub.f32 %v1873, %v2059
        %v2181 = vsub.f32 %v1876, %v2061
        %v2182 = vsub.f32 %v1879, %v2063
        %v2183 = vsub.f32 %v1882, %v2065
        %v2184 = vsub.f32 %v1885, %v2067
        %v2185 = vsub.f32 %v1888, %v2069
        %v2186 = vsub.f32 %v1891, %v2071
        %v2187 = vsub.f32 %v1894, %v2073
        %v2188 = vsub.f32 %v1897, %v2075
        %v2189 = vsub.f32 %v1900, %v2077
        %v2190 = vsub.f32 %v1903, %v2079
        %v2191 = vsub.f32 %v1906, %v2081
        %v2192 = vsub.f32 %v1909, %v2083
        %v2193 = vsub.f32 %v1912, %v2085
        %v2194 = vsub.f32 %v1915, %v2087
        %v2195 = vsub.f32 %v1918, %v2089
        %v2196 = vsub.f32 %v1921, %v2091
        %v2197 = vsub.f32 %v1924, %v2093
        %v2198 = vsub.f32 %v1927, %v2095
        %v2199 = vsub.f32 %v1930, %v2097
        %v2200 = vsub.f32 %v1933, %v2099
        %v2201 = vsub.f32 %v1936, %v2101
        %v2202 = vsub.f32 %v1939, %v2103
        %v2203 = vsub.f32 %v1942, %v2105
        %v2204 = vsub.f32 %v1945, %v2107
        %v2205 = vsub.f32 %v1948, %v2109
        %v2206 = vsub.f32 %v1951, %v2111
        %v2207 = vsub.f32 %v1954, %v2113
        %v2208 = vsub.f32 %v1957, %v2115
        %v2209 = vsub.f32 %v1960, %v2117
        %v2210 = vsub.f32 %v1963, %v2119
        %v2211 = vsub.f32 %v1966, %v2121
        %v2212 = vsub.f32 %v1969, %v2123
        %v2213 = vsub.f32 %v1972, %v2125
        %v2214 = vsub.f32 %v1975, %v2127
        %v2215 = vsub.f32 %v1978, %v2129
        %v2216 = vsub.f32 %v1981, %v2131
        %v2217 = vsub.f32 %v1984, %v2133
        %v2218 = vsub.f32 %v1987, %v2135
        %v2219 = vsub.f32 %v1990, %v2137
        %v2220 = vsub.f32 %v1993, %v2139
        %v2221 = vsub.f32 %v1996, %v2141
        %v2222 = vsub.f32 %v1999, %v2143
        %v2223 = vsub.f32 %v2002, %v2145
        %v2224 = vsub.f32 %v2005, %v2147
        %v2225 = vsub.f32 %v2008, %v2149
        %v2226 = vsub.f32 %v2011, %v2151
        %v2227 = vsub.f32 %v2014, %v2153
        %v2228 = vsub.f32 %v2017, %v2155
        %v2229 = vsub.f32 %v2020, %v2157
        %v2230 = vsub.f32 %v2023, %v2159
        %v2231 = vsub.f32 %v2026, %v2161
        %v2232 = vsub.f32 %v2029, %v2163
        %v2233 = vsub.f32 %v2032, %v2165
        %v2234 = vsub.f32 %v2035, %v2167
        %v2235 = vsub.f32 %v2038, %v2169
        %v2236 = vsub.f32 %v2041, %v2171
        %v2237 = vsub.f32 %v2044, %v2173
        %v2238 = vmul.f32 %v2174, 1.442695
        %v2239 = vpow.pop %v2238
        %v2240 = vmul.f32 %v2175, 1.442695
        %v2241 = vpow.pop %v2240
        %v2242 = vmul.f32 %v2176, 1.442695
        %v2243 = vpow.pop %v2242
        %v2244 = vmul.f32 %v2177, 1.442695
        %v2245 = vpow.pop %v2244
        %v2246 = vmul.f32 %v2178, 1.442695
        %v2247 = vpow.pop %v2246
        %v2248 = vmul.f32 %v2179, 1.442695
        %v2249 = vpow.pop %v2248
        %v2250 = vmul.f32 %v2180, 1.442695
        %v2251 = vpow.pop %v2250
        %v2252 = vmul.f32 %v2181, 1.442695
        %v2253 = vpow.pop %v2252
        %v2254 = vmul.f32 %v2182, 1.442695
        %v2255 = vpow.pop %v2254
        %v2256 = vmul.f32 %v2183, 1.442695
        %v2257 = vpow.pop %v2256
        %v2258 = vmul.f32 %v2184, 1.442695
        %v2259 = vpow.pop %v2258
        %v2260 = vmul.f32 %v2185, 1.442695
        %v2261 = vpow.pop %v2260
        %v2262 = vmul.f32 %v2186, 1.442695
        %v2263 = vpow.pop %v2262
        %v2264 = vmul.f32 %v2187, 1.442695
        %v2265 = vpow.pop %v2264
        %v2266 = vmul.f32 %v2188, 1.442695
        %v2267 = vpow.pop %v2266
        %v2268 = vmul.f32 %v2189, 1.442695
        %v2269 = vpow.pop %v2268
        %v2270 = vmul.f32 %v2190, 1.442695
        %v2271 = vpow.pop %v2270
        %v2272 = vmul.f32 %v2191, 1.442695
        %v2273 = vpow.pop %v2272
        %v2274 = vmul.f32 %v2192, 1.442695
        %v2275 = vpow.pop %v2274
        %v2276 = vmul.f32 %v2193, 1.442695
        %v2277 = vpow.pop %v2276
        %v2278 = vmul.f32 %v2194, 1.442695
        %v2279 = vpow.pop %v2278
        %v2280 = vmul.f32 %v2195, 1.442695
        %v2281 = vpow.pop %v2280
        %v2282 = vmul.f32 %v2196, 1.442695
        %v2283 = vpow.pop %v2282
        %v2284 = vmul.f32 %v2197, 1.442695
        %v2285 = vpow.pop %v2284
        %v2286 = vmul.f32 %v2198, 1.442695
        %v2287 = vpow.pop %v2286
        %v2288 = vmul.f32 %v2199, 1.442695
        %v2289 = vpow.pop %v2288
        %v2290 = vmul.f32 %v2200, 1.442695
        %v2291 = vpow.pop %v2290
        %v2292 = vmul.f32 %v2201, 1.442695
        %v2293 = vpow.pop %v2292
        %v2294 = vmul.f32 %v2202, 1.442695
        %v2295 = vpow.pop %v2294
        %v2296 = vmul.f32 %v2203, 1.442695
        %v2297 = vpow.pop %v2296
        %v2298 = vmul.f32 %v2204, 1.442695
        %v2299 = vpow.pop %v2298
        %v2300 = vmul.f32 %v2205, 1.442695
        %v2301 = vpow.pop %v2300
        %v2302 = vmul.f32 %v2206, 1.442695
        %v2303 = vpow.pop %v2302
        %v2304 = vmul.f32 %v2207, 1.442695
        %v2305 = vpow.pop %v2304
        %v2306 = vmul.f32 %v2208, 1.442695
        %v2307 = vpow.pop %v2306
        %v2308 = vmul.f32 %v2209, 1.442695
        %v2309 = vpow.pop %v2308
        %v2310 = vmul.f32 %v2210, 1.442695
        %v2311 = vpow.pop %v2310
        %v2312 = vmul.f32 %v2211, 1.442695
        %v2313 = vpow.pop %v2312
        %v2314 = vmul.f32 %v2212, 1.442695
        %v2315 = vpow.pop %v2314
        %v2316 = vmul.f32 %v2213, 1.442695
        %v2317 = vpow.pop %v2316
        %v2318 = vmul.f32 %v2214, 1.442695
        %v2319 = vpow.pop %v2318
        %v2320 = vmul.f32 %v2215, 1.442695
        %v2321 = vpow.pop %v2320
        %v2322 = vmul.f32 %v2216, 1.442695
        %v2323 = vpow.pop %v2322
        %v2324 = vmul.f32 %v2217, 1.442695
        %v2325 = vpow.pop %v2324
        %v2326 = vmul.f32 %v2218, 1.442695
        %v2327 = vpow.pop %v2326
        %v2328 = vmul.f32 %v2219, 1.442695
        %v2329 = vpow.pop %v2328
        %v2330 = vmul.f32 %v2220, 1.442695
        %v2331 = vpow.pop %v2330
        %v2332 = vmul.f32 %v2221, 1.442695
        %v2333 = vpow.pop %v2332
        %v2334 = vmul.f32 %v2222, 1.442695
        %v2335 = vpow.pop %v2334
        %v2336 = vmul.f32 %v2223, 1.442695
        %v2337 = vpow.pop %v2336
        %v2338 = vmul.f32 %v2224, 1.442695
        %v2339 = vpow.pop %v2338
        %v2340 = vmul.f32 %v2225, 1.442695
        %v2341 = vpow.pop %v2340
        %v2342 = vmul.f32 %v2226, 1.442695
        %v2343 = vpow.pop %v2342
        %v2344 = vmul.f32 %v2227, 1.442695
        %v2345 = vpow.pop %v2344
        %v2346 = vmul.f32 %v2228, 1.442695
        %v2347 = vpow.pop %v2346
        %v2348 = vmul.f32 %v2229, 1.442695
        %v2349 = vpow.pop %v2348
        %v2350 = vmul.f32 %v2230, 1.442695
        %v2351 = vpow.pop %v2350
        %v2352 = vmul.f32 %v2231, 1.442695
        %v2353 = vpow.pop %v2352
        %v2354 = vmul.f32 %v2232, 1.442695
        %v2355 = vpow.pop %v2354
        %v2356 = vmul.f32 %v2233, 1.442695
        %v2357 = vpow.pop %v2356
        %v2358 = vmul.f32 %v2234, 1.442695
        %v2359 = vpow.pop %v2358
        %v2360 = vmul.f32 %v2235, 1.442695
        %v2361 = vpow.pop %v2360
        %v2362 = vmul.f32 %v2236, 1.442695
        %v2363 = vpow.pop %v2362
        %v2364 = vmul.f32 %v2237, 1.442695
        %v2365 = vpow.pop %v2364
        %2366 = vadd.xlane.f32.xlu0 %v2239
        %v2367 = vpop.xlane.xlu0 %2366
        %2368 = vadd.xlane.f32.xlu0 %v2241
        %v2369 = vpop.xlane.xlu0 %2368
        %2370 = vadd.xlane.f32.xlu0 %v2243
        %v2371 = vpop.xlane.xlu0 %2370
        %2372 = vadd.xlane.f32.xlu0 %v2245
        %v2373 = vpop.xlane.xlu0 %2372
        %2374 = vadd.xlane.f32.xlu0 %v2247
        %v2375 = vpop.xlane.xlu0 %2374
        %2376 = vadd.xlane.f32.xlu0 %v2249
        %v2377 = vpop.xlane.xlu0 %2376
        %2378 = vadd.xlane.f32.xlu0 %v2251
        %v2379 = vpop.xlane.xlu0 %2378
        %2380 = vadd.xlane.f32.xlu0 %v2253
        %v2381 = vpop.xlane.xlu0 %2380
        %2382 = vadd.xlane.f32.xlu0 %v2255
        %v2383 = vpop.xlane.xlu0 %2382
        %2384 = vadd.xlane.f32.xlu0 %v2257
        %v2385 = vpop.xlane.xlu0 %2384
        %2386 = vadd.xlane.f32.xlu0 %v2259
        %v2387 = vpop.xlane.xlu0 %2386
        %2388 = vadd.xlane.f32.xlu0 %v2261
        %v2389 = vpop.xlane.xlu0 %2388
        %2390 = vadd.xlane.f32.xlu0 %v2263
        %v2391 = vpop.xlane.xlu0 %2390
        %2392 = vadd.xlane.f32.xlu0 %v2265
        %v2393 = vpop.xlane.xlu0 %2392
        %2394 = vadd.xlane.f32.xlu0 %v2267
        %v2395 = vpop.xlane.xlu0 %2394
        %2396 = vadd.xlane.f32.xlu0 %v2269
        %v2397 = vpop.xlane.xlu0 %2396
        %2398 = vadd.xlane.f32.xlu0 %v2271
        %v2399 = vpop.xlane.xlu0 %2398
        %2400 = vadd.xlane.f32.xlu0 %v2273
        %v2401 = vpop.xlane.xlu0 %2400
        %2402 = vadd.xlane.f32.xlu0 %v2275
        %v2403 = vpop.xlane.xlu0 %2402
        %2404 = vadd.xlane.f32.xlu0 %v2277
        %v2405 = vpop.xlane.xlu0 %2404
        %2406 = vadd.xlane.f32.xlu0 %v2279
        %v2407 = vpop.xlane.xlu0 %2406
        %2408 = vadd.xlane.f32.xlu0 %v2281
        %v2409 = vpop.xlane.xlu0 %2408
        %2410 = vadd.xlane.f32.xlu0 %v2283
        %v2411 = vpop.xlane.xlu0 %2410
        %2412 = vadd.xlane.f32.xlu0 %v2285
        %v2413 = vpop.xlane.xlu0 %2412
        %2414 = vadd.xlane.f32.xlu0 %v2287
        %v2415 = vpop.xlane.xlu0 %2414
        %2416 = vadd.xlane.f32.xlu0 %v2289
        %v2417 = vpop.xlane.xlu0 %2416
        %2418 = vadd.xlane.f32.xlu0 %v2291
        %v2419 = vpop.xlane.xlu0 %2418
        %2420 = vadd.xlane.f32.xlu0 %v2293
        %v2421 = vpop.xlane.xlu0 %2420
        %2422 = vadd.xlane.f32.xlu0 %v2295
        %v2423 = vpop.xlane.xlu0 %2422
        %2424 = vadd.xlane.f32.xlu0 %v2297
        %v2425 = vpop.xlane.xlu0 %2424
        %2426 = vadd.xlane.f32.xlu0 %v2299
        %v2427 = vpop.xlane.xlu0 %2426
        %2428 = vadd.xlane.f32.xlu0 %v2301
        %v2429 = vpop.xlane.xlu0 %2428
        %2430 = vadd.xlane.f32.xlu0 %v2303
        %v2431 = vpop.xlane.xlu0 %2430
        %2432 = vadd.xlane.f32.xlu0 %v2305
        %v2433 = vpop.xlane.xlu0 %2432
        %2434 = vadd.xlane.f32.xlu0 %v2307
        %v2435 = vpop.xlane.xlu0 %2434
        %2436 = vadd.xlane.f32.xlu0 %v2309
        %v2437 = vpop.xlane.xlu0 %2436
        %2438 = vadd.xlane.f32.xlu0 %v2311
        %v2439 = vpop.xlane.xlu0 %2438
        %2440 = vadd.xlane.f32.xlu0 %v2313
        %v2441 = vpop.xlane.xlu0 %2440
        %2442 = vadd.xlane.f32.xlu0 %v2315
        %v2443 = vpop.xlane.xlu0 %2442
        %2444 = vadd.xlane.f32.xlu0 %v2317
        %v2445 = vpop.xlane.xlu0 %2444
        %2446 = vadd.xlane.f32.xlu0 %v2319
        %v2447 = vpop.xlane.xlu0 %2446
        %2448 = vadd.xlane.f32.xlu0 %v2321
        %v2449 = vpop.xlane.xlu0 %2448
        %2450 = vadd.xlane.f32.xlu0 %v2323
        %v2451 = vpop.xlane.xlu0 %2450
        %2452 = vadd.xlane.f32.xlu0 %v2325
        %v2453 = vpop.xlane.xlu0 %2452
        %2454 = vadd.xlane.f32.xlu0 %v2327
        %v2455 = vpop.xlane.xlu0 %2454
        %2456 = vadd.xlane.f32.xlu0 %v2329
        %v2457 = vpop.xlane.xlu0 %2456
        %2458 = vadd.xlane.f32.xlu0 %v2331
        %v2459 = vpop.xlane.xlu0 %2458
        %2460 = vadd.xlane.f32.xlu0 %v2333
        %v2461 = vpop.xlane.xlu0 %2460
        %2462 = vadd.xlane.f32.xlu0 %v2335
        %v2463 = vpop.xlane.xlu0 %2462
        %2464 = vadd.xlane.f32.xlu0 %v2337
        %v2465 = vpop.xlane.xlu0 %2464
        %2466 = vadd.xlane.f32.xlu0 %v2339
        %v2467 = vpop.xlane.xlu0 %2466
        %2468 = vadd.xlane.f32.xlu0 %v2341
        %v2469 = vpop.xlane.xlu0 %2468
        %2470 = vadd.xlane.f32.xlu0 %v2343
        %v2471 = vpop.xlane.xlu0 %2470
        %2472 = vadd.xlane.f32.xlu0 %v2345
        %v2473 = vpop.xlane.xlu0 %2472
        %2474 = vadd.xlane.f32.xlu0 %v2347
        %v2475 = vpop.xlane.xlu0 %2474
        %2476 = vadd.xlane.f32.xlu0 %v2349
        %v2477 = vpop.xlane.xlu0 %2476
        %2478 = vadd.xlane.f32.xlu0 %v2351
        %v2479 = vpop.xlane.xlu0 %2478
        %2480 = vadd.xlane.f32.xlu0 %v2353
        %v2481 = vpop.xlane.xlu0 %2480
        %2482 = vadd.xlane.f32.xlu0 %v2355
        %v2483 = vpop.xlane.xlu0 %2482
        %2484 = vadd.xlane.f32.xlu0 %v2357
        %v2485 = vpop.xlane.xlu0 %2484
        %2486 = vadd.xlane.f32.xlu0 %v2359
        %v2487 = vpop.xlane.xlu0 %2486
        %2488 = vadd.xlane.f32.xlu0 %v2361
        %v2489 = vpop.xlane.xlu0 %2488
        %2490 = vadd.xlane.f32.xlu0 %v2363
        %v2491 = vpop.xlane.xlu0 %2490
        %2492 = vadd.xlane.f32.xlu0 %v2365
        %v2493 = vpop.xlane.xlu0 %2492
        %v2494 = vrcp.pop %v2367
        %v2495 = vmul.f32 %v2367, %v2494
        %v2496 = vsub.f32 1.0, %v2495
        %v2497 = vmul.f32 %v2494, %v2496
        %v2498 = vadd.f32 %v2494, %v2497
        %vm2499 = vweird.f32 %v2367
        %vm2500 = vweird.f32 %v2494
        %vm2501 = vmor %vm2499, %vm2500
        %v2502 = vsel %vm2501, %v2494, %v2498
        %v2503 = vand.u32 2147483647, %v2367
        %vm2504 = vcmp.eq.f32.partialorder %v2503, 8.507059e+37
        %v2505 = vand.u32 %v2367, 2147483648
        %v2506 = vor.u32 1.1754944e-38, %v2505
        %v2507 = vsel %vm2504, %v2506, %v2502
        %v2508 = vrcp.pop %v2369
        %v2509 = vmul.f32 %v2369, %v2508
        %v2510 = vsub.f32 1.0, %v2509
        %v2511 = vmul.f32 %v2508, %v2510
        %v2512 = vadd.f32 %v2508, %v2511
        %vm2513 = vweird.f32 %v2369
        %vm2514 = vweird.f32 %v2508
        %vm2515 = vmor %vm2513, %vm2514
        %v2516 = vsel %vm2515, %v2508, %v2512
        %v2517 = vand.u32 2147483647, %v2369
        %vm2518 = vcmp.eq.f32.partialorder %v2517, 8.507059e+37
        %v2519 = vand.u32 %v2369, 2147483648
        %v2520 = vor.u32 1.1754944e-38, %v2519
        %v2521 = vsel %vm2518, %v2520, %v2516
        %v2522 = vrcp.pop %v2371
        %v2523 = vmul.f32 %v2371, %v2522
        %v2524 = vsub.f32 1.0, %v2523
        %v2525 = vmul.f32 %v2522, %v2524
        %v2526 = vadd.f32 %v2522, %v2525
        %vm2527 = vweird.f32 %v2371
        %vm2528 = vweird.f32 %v2522
        %vm2529 = vmor %vm2527, %vm2528
        %v2530 = vsel %vm2529, %v2522, %v2526
        %v2531 = vand.u32 2147483647, %v2371
        %vm2532 = vcmp.eq.f32.partialorder %v2531, 8.507059e+37
        %v2533 = vand.u32 %v2371, 2147483648
        %v2534 = vor.u32 1.1754944e-38, %v2533
        %v2535 = vsel %vm2532, %v2534, %v2530
        %v2536 = vrcp.pop %v2373
        %v2537 = vmul.f32 %v2373, %v2536
        %v2538 = vsub.f32 1.0, %v2537
        %v2539 = vmul.f32 %v2536, %v2538
        %v2540 = vadd.f32 %v2536, %v2539
        %vm2541 = vweird.f32 %v2373
        %vm2542 = vweird.f32 %v2536
        %vm2543 = vmor %vm2541, %vm2542
        %v2544 = vsel %vm2543, %v2536, %v2540
        %v2545 = vand.u32 2147483647, %v2373
        %vm2546 = vcmp.eq.f32.partialorder %v2545, 8.507059e+37
        %v2547 = vand.u32 %v2373, 2147483648
        %v2548 = vor.u32 1.1754944e-38, %v2547
        %v2549 = vsel %vm2546, %v2548, %v2544
        %v2550 = vrcp.pop %v2375
        %v2551 = vmul.f32 %v2375, %v2550
        %v2552 = vsub.f32 1.0, %v2551
        %v2553 = vmul.f32 %v2550, %v2552
        %v2554 = vadd.f32 %v2550, %v2553
        %vm2555 = vweird.f32 %v2375
        %vm2556 = vweird.f32 %v2550
        %vm2557 = vmor %vm2555, %vm2556
        %v2558 = vsel %vm2557, %v2550, %v2554
        %v2559 = vand.u32 2147483647, %v2375
        %vm2560 = vcmp.eq.f32.partialorder %v2559, 8.507059e+37
        %v2561 = vand.u32 %v2375, 2147483648
        %v2562 = vor.u32 1.1754944e-38, %v2561
        %v2563 = vsel %vm2560, %v2562, %v2558
        %v2564 = vrcp.pop %v2377
        %v2565 = vmul.f32 %v2377, %v2564
        %v2566 = vsub.f32 1.0, %v2565
        %v2567 = vmul.f32 %v2564, %v2566
        %v2568 = vadd.f32 %v2564, %v2567
        %vm2569 = vweird.f32 %v2377
        %vm2570 = vweird.f32 %v2564
        %vm2571 = vmor %vm2569, %vm2570
        %v2572 = vsel %vm2571, %v2564, %v2568
        %v2573 = vand.u32 2147483647, %v2377
        %vm2574 = vcmp.eq.f32.partialorder %v2573, 8.507059e+37
        %v2575 = vand.u32 %v2377, 2147483648
        %v2576 = vor.u32 1.1754944e-38, %v2575
        %v2577 = vsel %vm2574, %v2576, %v2572
        %v2578 = vrcp.pop %v2379
        %v2579 = vmul.f32 %v2379, %v2578
        %v2580 = vsub.f32 1.0, %v2579
        %v2581 = vmul.f32 %v2578, %v2580
        %v2582 = vadd.f32 %v2578, %v2581
        %vm2583 = vweird.f32 %v2379
        %vm2584 = vweird.f32 %v2578
        %vm2585 = vmor %vm2583, %vm2584
        %v2586 = vsel %vm2585, %v2578, %v2582
        %v2587 = vand.u32 2147483647, %v2379
        %vm2588 = vcmp.eq.f32.partialorder %v2587, 8.507059e+37
        %v2589 = vand.u32 %v2379, 2147483648
        %v2590 = vor.u32 1.1754944e-38, %v2589
        %v2591 = vsel %vm2588, %v2590, %v2586
        %v2592 = vrcp.pop %v2381
        %v2593 = vmul.f32 %v2381, %v2592
        %v2594 = vsub.f32 1.0, %v2593
        %v2595 = vmul.f32 %v2592, %v2594
        %v2596 = vadd.f32 %v2592, %v2595
        %vm2597 = vweird.f32 %v2381
        %vm2598 = vweird.f32 %v2592
        %vm2599 = vmor %vm2597, %vm2598
        %v2600 = vsel %vm2599, %v2592, %v2596
        %v2601 = vand.u32 2147483647, %v2381
        %vm2602 = vcmp.eq.f32.partialorder %v2601, 8.507059e+37
        %v2603 = vand.u32 %v2381, 2147483648
        %v2604 = vor.u32 1.1754944e-38, %v2603
        %v2605 = vsel %vm2602, %v2604, %v2600
        %v2606 = vrcp.pop %v2383
        %v2607 = vmul.f32 %v2383, %v2606
        %v2608 = vsub.f32 1.0, %v2607
        %v2609 = vmul.f32 %v2606, %v2608
        %v2610 = vadd.f32 %v2606, %v2609
        %vm2611 = vweird.f32 %v2383
        %vm2612 = vweird.f32 %v2606
        %vm2613 = vmor %vm2611, %vm2612
        %v2614 = vsel %vm2613, %v2606, %v2610
        %v2615 = vand.u32 2147483647, %v2383
        %vm2616 = vcmp.eq.f32.partialorder %v2615, 8.507059e+37
        %v2617 = vand.u32 %v2383, 2147483648
        %v2618 = vor.u32 1.1754944e-38, %v2617
        %v2619 = vsel %vm2616, %v2618, %v2614
        %v2620 = vrcp.pop %v2385
        %v2621 = vmul.f32 %v2385, %v2620
        %v2622 = vsub.f32 1.0, %v2621
        %v2623 = vmul.f32 %v2620, %v2622
        %v2624 = vadd.f32 %v2620, %v2623
        %vm2625 = vweird.f32 %v2385
        %vm2626 = vweird.f32 %v2620
        %vm2627 = vmor %vm2625, %vm2626
        %v2628 = vsel %vm2627, %v2620, %v2624
        %v2629 = vand.u32 2147483647, %v2385
        %vm2630 = vcmp.eq.f32.partialorder %v2629, 8.507059e+37
        %v2631 = vand.u32 %v2385, 2147483648
        %v2632 = vor.u32 1.1754944e-38, %v2631
        %v2633 = vsel %vm2630, %v2632, %v2628
        %v2634 = vrcp.pop %v2387
        %v2635 = vmul.f32 %v2387, %v2634
        %v2636 = vsub.f32 1.0, %v2635
        %v2637 = vmul.f32 %v2634, %v2636
        %v2638 = vadd.f32 %v2634, %v2637
        %vm2639 = vweird.f32 %v2387
        %vm2640 = vweird.f32 %v2634
        %vm2641 = vmor %vm2639, %vm2640
        %v2642 = vsel %vm2641, %v2634, %v2638
        %v2643 = vand.u32 2147483647, %v2387
        %vm2644 = vcmp.eq.f32.partialorder %v2643, 8.507059e+37
        %v2645 = vand.u32 %v2387, 2147483648
        %v2646 = vor.u32 1.1754944e-38, %v2645
        %v2647 = vsel %vm2644, %v2646, %v2642
        %v2648 = vrcp.pop %v2389
        %v2649 = vmul.f32 %v2389, %v2648
        %v2650 = vsub.f32 1.0, %v2649
        %v2651 = vmul.f32 %v2648, %v2650
        %v2652 = vadd.f32 %v2648, %v2651
        %vm2653 = vweird.f32 %v2389
        %vm2654 = vweird.f32 %v2648
        %vm2655 = vmor %vm2653, %vm2654
        %v2656 = vsel %vm2655, %v2648, %v2652
        %v2657 = vand.u32 2147483647, %v2389
        %vm2658 = vcmp.eq.f32.partialorder %v2657, 8.507059e+37
        %v2659 = vand.u32 %v2389, 2147483648
        %v2660 = vor.u32 1.1754944e-38, %v2659
        %v2661 = vsel %vm2658, %v2660, %v2656
        %v2662 = vrcp.pop %v2391
        %v2663 = vmul.f32 %v2391, %v2662
        %v2664 = vsub.f32 1.0, %v2663
        %v2665 = vmul.f32 %v2662, %v2664
        %v2666 = vadd.f32 %v2662, %v2665
        %vm2667 = vweird.f32 %v2391
        %vm2668 = vweird.f32 %v2662
        %vm2669 = vmor %vm2667, %vm2668
        %v2670 = vsel %vm2669, %v2662, %v2666
        %v2671 = vand.u32 2147483647, %v2391
        %vm2672 = vcmp.eq.f32.partialorder %v2671, 8.507059e+37
        %v2673 = vand.u32 %v2391, 2147483648
        %v2674 = vor.u32 1.1754944e-38, %v2673
        %v2675 = vsel %vm2672, %v2674, %v2670
        %v2676 = vrcp.pop %v2393
        %v2677 = vmul.f32 %v2393, %v2676
        %v2678 = vsub.f32 1.0, %v2677
        %v2679 = vmul.f32 %v2676, %v2678
        %v2680 = vadd.f32 %v2676, %v2679
        %vm2681 = vweird.f32 %v2393
        %vm2682 = vweird.f32 %v2676
        %vm2683 = vmor %vm2681, %vm2682
        %v2684 = vsel %vm2683, %v2676, %v2680
        %v2685 = vand.u32 2147483647, %v2393
        %vm2686 = vcmp.eq.f32.partialorder %v2685, 8.507059e+37
        %v2687 = vand.u32 %v2393, 2147483648
        %v2688 = vor.u32 1.1754944e-38, %v2687
        %v2689 = vsel %vm2686, %v2688, %v2684
        %v2690 = vrcp.pop %v2395
        %v2691 = vmul.f32 %v2395, %v2690
        %v2692 = vsub.f32 1.0, %v2691
        %v2693 = vmul.f32 %v2690, %v2692
        %v2694 = vadd.f32 %v2690, %v2693
        %vm2695 = vweird.f32 %v2395
        %vm2696 = vweird.f32 %v2690
        %vm2697 = vmor %vm2695, %vm2696
        %v2698 = vsel %vm2697, %v2690, %v2694
        %v2699 = vand.u32 2147483647, %v2395
        %vm2700 = vcmp.eq.f32.partialorder %v2699, 8.507059e+37
        %v2701 = vand.u32 %v2395, 2147483648
        %v2702 = vor.u32 1.1754944e-38, %v2701
        %v2703 = vsel %vm2700, %v2702, %v2698
        %v2704 = vrcp.pop %v2397
        %v2705 = vmul.f32 %v2397, %v2704
        %v2706 = vsub.f32 1.0, %v2705
        %v2707 = vmul.f32 %v2704, %v2706
        %v2708 = vadd.f32 %v2704, %v2707
        %vm2709 = vweird.f32 %v2397
        %vm2710 = vweird.f32 %v2704
        %vm2711 = vmor %vm2709, %vm2710
        %v2712 = vsel %vm2711, %v2704, %v2708
        %v2713 = vand.u32 2147483647, %v2397
        %vm2714 = vcmp.eq.f32.partialorder %v2713, 8.507059e+37
        %v2715 = vand.u32 %v2397, 2147483648
        %v2716 = vor.u32 1.1754944e-38, %v2715
        %v2717 = vsel %vm2714, %v2716, %v2712
        %v2718 = vrcp.pop %v2399
        %v2719 = vmul.f32 %v2399, %v2718
        %v2720 = vsub.f32 1.0, %v2719
        %v2721 = vmul.f32 %v2718, %v2720
        %v2722 = vadd.f32 %v2718, %v2721
        %vm2723 = vweird.f32 %v2399
        %vm2724 = vweird.f32 %v2718
        %vm2725 = vmor %vm2723, %vm2724
        %v2726 = vsel %vm2725, %v2718, %v2722
        %v2727 = vand.u32 2147483647, %v2399
        %vm2728 = vcmp.eq.f32.partialorder %v2727, 8.507059e+37
        %v2729 = vand.u32 %v2399, 2147483648
        %v2730 = vor.u32 1.1754944e-38, %v2729
        %v2731 = vsel %vm2728, %v2730, %v2726
        %v2732 = vrcp.pop %v2401
        %v2733 = vmul.f32 %v2401, %v2732
        %v2734 = vsub.f32 1.0, %v2733
        %v2735 = vmul.f32 %v2732, %v2734
        %v2736 = vadd.f32 %v2732, %v2735
        %vm2737 = vweird.f32 %v2401
        %vm2738 = vweird.f32 %v2732
        %vm2739 = vmor %vm2737, %vm2738
        %v2740 = vsel %vm2739, %v2732, %v2736
        %v2741 = vand.u32 2147483647, %v2401
        %vm2742 = vcmp.eq.f32.partialorder %v2741, 8.507059e+37
        %v2743 = vand.u32 %v2401, 2147483648
        %v2744 = vor.u32 1.1754944e-38, %v2743
        %v2745 = vsel %vm2742, %v2744, %v2740
        %v2746 = vrcp.pop %v2403
        %v2747 = vmul.f32 %v2403, %v2746
        %v2748 = vsub.f32 1.0, %v2747
        %v2749 = vmul.f32 %v2746, %v2748
        %v2750 = vadd.f32 %v2746, %v2749
        %vm2751 = vweird.f32 %v2403
        %vm2752 = vweird.f32 %v2746
        %vm2753 = vmor %vm2751, %vm2752
        %v2754 = vsel %vm2753, %v2746, %v2750
        %v2755 = vand.u32 2147483647, %v2403
        %vm2756 = vcmp.eq.f32.partialorder %v2755, 8.507059e+37
        %v2757 = vand.u32 %v2403, 2147483648
        %v2758 = vor.u32 1.1754944e-38, %v2757
        %v2759 = vsel %vm2756, %v2758, %v2754
        %v2760 = vrcp.pop %v2405
        %v2761 = vmul.f32 %v2405, %v2760
        %v2762 = vsub.f32 1.0, %v2761
        %v2763 = vmul.f32 %v2760, %v2762
        %v2764 = vadd.f32 %v2760, %v2763
        %vm2765 = vweird.f32 %v2405
        %vm2766 = vweird.f32 %v2760
        %vm2767 = vmor %vm2765, %vm2766
        %v2768 = vsel %vm2767, %v2760, %v2764
        %v2769 = vand.u32 2147483647, %v2405
        %vm2770 = vcmp.eq.f32.partialorder %v2769, 8.507059e+37
        %v2771 = vand.u32 %v2405, 2147483648
        %v2772 = vor.u32 1.1754944e-38, %v2771
        %v2773 = vsel %vm2770, %v2772, %v2768
        %v2774 = vrcp.pop %v2407
        %v2775 = vmul.f32 %v2407, %v2774
        %v2776 = vsub.f32 1.0, %v2775
        %v2777 = vmul.f32 %v2774, %v2776
        %v2778 = vadd.f32 %v2774, %v2777
        %vm2779 = vweird.f32 %v2407
        %vm2780 = vweird.f32 %v2774
        %vm2781 = vmor %vm2779, %vm2780
        %v2782 = vsel %vm2781, %v2774, %v2778
        %v2783 = vand.u32 2147483647, %v2407
        %vm2784 = vcmp.eq.f32.partialorder %v2783, 8.507059e+37
        %v2785 = vand.u32 %v2407, 2147483648
        %v2786 = vor.u32 1.1754944e-38, %v2785
        %v2787 = vsel %vm2784, %v2786, %v2782
        %v2788 = vrcp.pop %v2409
        %v2789 = vmul.f32 %v2409, %v2788
        %v2790 = vsub.f32 1.0, %v2789
        %v2791 = vmul.f32 %v2788, %v2790
        %v2792 = vadd.f32 %v2788, %v2791
        %vm2793 = vweird.f32 %v2409
        %vm2794 = vweird.f32 %v2788
        %vm2795 = vmor %vm2793, %vm2794
        %v2796 = vsel %vm2795, %v2788, %v2792
        %v2797 = vand.u32 2147483647, %v2409
        %vm2798 = vcmp.eq.f32.partialorder %v2797, 8.507059e+37
        %v2799 = vand.u32 %v2409, 2147483648
        %v2800 = vor.u32 1.1754944e-38, %v2799
        %v2801 = vsel %vm2798, %v2800, %v2796
        %v2802 = vrcp.pop %v2411
        %v2803 = vmul.f32 %v2411, %v2802
        %v2804 = vsub.f32 1.0, %v2803
        %v2805 = vmul.f32 %v2802, %v2804
        %v2806 = vadd.f32 %v2802, %v2805
        %vm2807 = vweird.f32 %v2411
        %vm2808 = vweird.f32 %v2802
        %vm2809 = vmor %vm2807, %vm2808
        %v2810 = vsel %vm2809, %v2802, %v2806
        %v2811 = vand.u32 2147483647, %v2411
        %vm2812 = vcmp.eq.f32.partialorder %v2811, 8.507059e+37
        %v2813 = vand.u32 %v2411, 2147483648
        %v2814 = vor.u32 1.1754944e-38, %v2813
        %v2815 = vsel %vm2812, %v2814, %v2810
        %v2816 = vrcp.pop %v2413
        %v2817 = vmul.f32 %v2413, %v2816
        %v2818 = vsub.f32 1.0, %v2817
        %v2819 = vmul.f32 %v2816, %v2818
        %v2820 = vadd.f32 %v2816, %v2819
        %vm2821 = vweird.f32 %v2413
        %vm2822 = vweird.f32 %v2816
        %vm2823 = vmor %vm2821, %vm2822
        %v2824 = vsel %vm2823, %v2816, %v2820
        %v2825 = vand.u32 2147483647, %v2413
        %vm2826 = vcmp.eq.f32.partialorder %v2825, 8.507059e+37
        %v2827 = vand.u32 %v2413, 2147483648
        %v2828 = vor.u32 1.1754944e-38, %v2827
        %v2829 = vsel %vm2826, %v2828, %v2824
        %v2830 = vrcp.pop %v2415
        %v2831 = vmul.f32 %v2415, %v2830
        %v2832 = vsub.f32 1.0, %v2831
        %v2833 = vmul.f32 %v2830, %v2832
        %v2834 = vadd.f32 %v2830, %v2833
        %vm2835 = vweird.f32 %v2415
        %vm2836 = vweird.f32 %v2830
        %vm2837 = vmor %vm2835, %vm2836
        %v2838 = vsel %vm2837, %v2830, %v2834
        %v2839 = vand.u32 2147483647, %v2415
        %vm2840 = vcmp.eq.f32.partialorder %v2839, 8.507059e+37
        %v2841 = vand.u32 %v2415, 2147483648
        %v2842 = vor.u32 1.1754944e-38, %v2841
        %v2843 = vsel %vm2840, %v2842, %v2838
        %v2844 = vrcp.pop %v2417
        %v2845 = vmul.f32 %v2417, %v2844
        %v2846 = vsub.f32 1.0, %v2845
        %v2847 = vmul.f32 %v2844, %v2846
        %v2848 = vadd.f32 %v2844, %v2847
        %vm2849 = vweird.f32 %v2417
        %vm2850 = vweird.f32 %v2844
        %vm2851 = vmor %vm2849, %vm2850
        %v2852 = vsel %vm2851, %v2844, %v2848
        %v2853 = vand.u32 2147483647, %v2417
        %vm2854 = vcmp.eq.f32.partialorder %v2853, 8.507059e+37
        %v2855 = vand.u32 %v2417, 2147483648
        %v2856 = vor.u32 1.1754944e-38, %v2855
        %v2857 = vsel %vm2854, %v2856, %v2852
        %v2858 = vrcp.pop %v2419
        %v2859 = vmul.f32 %v2419, %v2858
        %v2860 = vsub.f32 1.0, %v2859
        %v2861 = vmul.f32 %v2858, %v2860
        %v2862 = vadd.f32 %v2858, %v2861
        %vm2863 = vweird.f32 %v2419
        %vm2864 = vweird.f32 %v2858
        %vm2865 = vmor %vm2863, %vm2864
        %v2866 = vsel %vm2865, %v2858, %v2862
        %v2867 = vand.u32 2147483647, %v2419
        %vm2868 = vcmp.eq.f32.partialorder %v2867, 8.507059e+37
        %v2869 = vand.u32 %v2419, 2147483648
        %v2870 = vor.u32 1.1754944e-38, %v2869
        %v2871 = vsel %vm2868, %v2870, %v2866
        %v2872 = vrcp.pop %v2421
        %v2873 = vmul.f32 %v2421, %v2872
        %v2874 = vsub.f32 1.0, %v2873
        %v2875 = vmul.f32 %v2872, %v2874
        %v2876 = vadd.f32 %v2872, %v2875
        %vm2877 = vweird.f32 %v2421
        %vm2878 = vweird.f32 %v2872
        %vm2879 = vmor %vm2877, %vm2878
        %v2880 = vsel %vm2879, %v2872, %v2876
        %v2881 = vand.u32 2147483647, %v2421
        %vm2882 = vcmp.eq.f32.partialorder %v2881, 8.507059e+37
        %v2883 = vand.u32 %v2421, 2147483648
        %v2884 = vor.u32 1.1754944e-38, %v2883
        %v2885 = vsel %vm2882, %v2884, %v2880
        %v2886 = vrcp.pop %v2423
        %v2887 = vmul.f32 %v2423, %v2886
        %v2888 = vsub.f32 1.0, %v2887
        %v2889 = vmul.f32 %v2886, %v2888
        %v2890 = vadd.f32 %v2886, %v2889
        %vm2891 = vweird.f32 %v2423
        %vm2892 = vweird.f32 %v2886
        %vm2893 = vmor %vm2891, %vm2892
        %v2894 = vsel %vm2893, %v2886, %v2890
        %v2895 = vand.u32 2147483647, %v2423
        %vm2896 = vcmp.eq.f32.partialorder %v2895, 8.507059e+37
        %v2897 = vand.u32 %v2423, 2147483648
        %v2898 = vor.u32 1.1754944e-38, %v2897
        %v2899 = vsel %vm2896, %v2898, %v2894
        %v2900 = vrcp.pop %v2425
        %v2901 = vmul.f32 %v2425, %v2900
        %v2902 = vsub.f32 1.0, %v2901
        %v2903 = vmul.f32 %v2900, %v2902
        %v2904 = vadd.f32 %v2900, %v2903
        %vm2905 = vweird.f32 %v2425
        %vm2906 = vweird.f32 %v2900
        %vm2907 = vmor %vm2905, %vm2906
        %v2908 = vsel %vm2907, %v2900, %v2904
        %v2909 = vand.u32 2147483647, %v2425
        %vm2910 = vcmp.eq.f32.partialorder %v2909, 8.507059e+37
        %v2911 = vand.u32 %v2425, 2147483648
        %v2912 = vor.u32 1.1754944e-38, %v2911
        %v2913 = vsel %vm2910, %v2912, %v2908
        %v2914 = vrcp.pop %v2427
        %v2915 = vmul.f32 %v2427, %v2914
        %v2916 = vsub.f32 1.0, %v2915
        %v2917 = vmul.f32 %v2914, %v2916
        %v2918 = vadd.f32 %v2914, %v2917
        %vm2919 = vweird.f32 %v2427
        %vm2920 = vweird.f32 %v2914
        %vm2921 = vmor %vm2919, %vm2920
        %v2922 = vsel %vm2921, %v2914, %v2918
        %v2923 = vand.u32 2147483647, %v2427
        %vm2924 = vcmp.eq.f32.partialorder %v2923, 8.507059e+37
        %v2925 = vand.u32 %v2427, 2147483648
        %v2926 = vor.u32 1.1754944e-38, %v2925
        %v2927 = vsel %vm2924, %v2926, %v2922
        %v2928 = vrcp.pop %v2429
        %v2929 = vmul.f32 %v2429, %v2928
        %v2930 = vsub.f32 1.0, %v2929
        %v2931 = vmul.f32 %v2928, %v2930
        %v2932 = vadd.f32 %v2928, %v2931
        %vm2933 = vweird.f32 %v2429
        %vm2934 = vweird.f32 %v2928
        %vm2935 = vmor %vm2933, %vm2934
        %v2936 = vsel %vm2935, %v2928, %v2932
        %v2937 = vand.u32 2147483647, %v2429
        %vm2938 = vcmp.eq.f32.partialorder %v2937, 8.507059e+37
        %v2939 = vand.u32 %v2429, 2147483648
        %v2940 = vor.u32 1.1754944e-38, %v2939
        %v2941 = vsel %vm2938, %v2940, %v2936
        %v2942 = vrcp.pop %v2431
        %v2943 = vmul.f32 %v2431, %v2942
        %v2944 = vsub.f32 1.0, %v2943
        %v2945 = vmul.f32 %v2942, %v2944
        %v2946 = vadd.f32 %v2942, %v2945
        %vm2947 = vweird.f32 %v2431
        %vm2948 = vweird.f32 %v2942
        %vm2949 = vmor %vm2947, %vm2948
        %v2950 = vsel %vm2949, %v2942, %v2946
        %v2951 = vand.u32 2147483647, %v2431
        %vm2952 = vcmp.eq.f32.partialorder %v2951, 8.507059e+37
        %v2953 = vand.u32 %v2431, 2147483648
        %v2954 = vor.u32 1.1754944e-38, %v2953
        %v2955 = vsel %vm2952, %v2954, %v2950
        %v2956 = vrcp.pop %v2433
        %v2957 = vmul.f32 %v2433, %v2956
        %v2958 = vsub.f32 1.0, %v2957
        %v2959 = vmul.f32 %v2956, %v2958
        %v2960 = vadd.f32 %v2956, %v2959
        %vm2961 = vweird.f32 %v2433
        %vm2962 = vweird.f32 %v2956
        %vm2963 = vmor %vm2961, %vm2962
        %v2964 = vsel %vm2963, %v2956, %v2960
        %v2965 = vand.u32 2147483647, %v2433
        %vm2966 = vcmp.eq.f32.partialorder %v2965, 8.507059e+37
        %v2967 = vand.u32 %v2433, 2147483648
        %v2968 = vor.u32 1.1754944e-38, %v2967
        %v2969 = vsel %vm2966, %v2968, %v2964
        %v2970 = vrcp.pop %v2435
        %v2971 = vmul.f32 %v2435, %v2970
        %v2972 = vsub.f32 1.0, %v2971
        %v2973 = vmul.f32 %v2970, %v2972
        %v2974 = vadd.f32 %v2970, %v2973
        %vm2975 = vweird.f32 %v2435
        %vm2976 = vweird.f32 %v2970
        %vm2977 = vmor %vm2975, %vm2976
        %v2978 = vsel %vm2977, %v2970, %v2974
        %v2979 = vand.u32 2147483647, %v2435
        %vm2980 = vcmp.eq.f32.partialorder %v2979, 8.507059e+37
        %v2981 = vand.u32 %v2435, 2147483648
        %v2982 = vor.u32 1.1754944e-38, %v2981
        %v2983 = vsel %vm2980, %v2982, %v2978
        %v2984 = vrcp.pop %v2437
        %v2985 = vmul.f32 %v2437, %v2984
        %v2986 = vsub.f32 1.0, %v2985
        %v2987 = vmul.f32 %v2984, %v2986
        %v2988 = vadd.f32 %v2984, %v2987
        %vm2989 = vweird.f32 %v2437
        %vm2990 = vweird.f32 %v2984
        %vm2991 = vmor %vm2989, %vm2990
        %v2992 = vsel %vm2991, %v2984, %v2988
        %v2993 = vand.u32 2147483647, %v2437
        %vm2994 = vcmp.eq.f32.partialorder %v2993, 8.507059e+37
        %v2995 = vand.u32 %v2437, 2147483648
        %v2996 = vor.u32 1.1754944e-38, %v2995
        %v2997 = vsel %vm2994, %v2996, %v2992
        %v2998 = vrcp.pop %v2439
        %v2999 = vmul.f32 %v2439, %v2998
        %v3000 = vsub.f32 1.0, %v2999
        %v3001 = vmul.f32 %v2998, %v3000
        %v3002 = vadd.f32 %v2998, %v3001
        %vm3003 = vweird.f32 %v2439
        %vm3004 = vweird.f32 %v2998
        %vm3005 = vmor %vm3003, %vm3004
        %v3006 = vsel %vm3005, %v2998, %v3002
        %v3007 = vand.u32 2147483647, %v2439
        %vm3008 = vcmp.eq.f32.partialorder %v3007, 8.507059e+37
        %v3009 = vand.u32 %v2439, 2147483648
        %v3010 = vor.u32 1.1754944e-38, %v3009
        %v3011 = vsel %vm3008, %v3010, %v3006
        %v3012 = vrcp.pop %v2441
        %v3013 = vmul.f32 %v2441, %v3012
        %v3014 = vsub.f32 1.0, %v3013
        %v3015 = vmul.f32 %v3012, %v3014
        %v3016 = vadd.f32 %v3012, %v3015
        %vm3017 = vweird.f32 %v2441
        %vm3018 = vweird.f32 %v3012
        %vm3019 = vmor %vm3017, %vm3018
        %v3020 = vsel %vm3019, %v3012, %v3016
        %v3021 = vand.u32 2147483647, %v2441
        %vm3022 = vcmp.eq.f32.partialorder %v3021, 8.507059e+37
        %v3023 = vand.u32 %v2441, 2147483648
        %v3024 = vor.u32 1.1754944e-38, %v3023
        %v3025 = vsel %vm3022, %v3024, %v3020
        %v3026 = vrcp.pop %v2443
        %v3027 = vmul.f32 %v2443, %v3026
        %v3028 = vsub.f32 1.0, %v3027
        %v3029 = vmul.f32 %v3026, %v3028
        %v3030 = vadd.f32 %v3026, %v3029
        %vm3031 = vweird.f32 %v2443
        %vm3032 = vweird.f32 %v3026
        %vm3033 = vmor %vm3031, %vm3032
        %v3034 = vsel %vm3033, %v3026, %v3030
        %v3035 = vand.u32 2147483647, %v2443
        %vm3036 = vcmp.eq.f32.partialorder %v3035, 8.507059e+37
        %v3037 = vand.u32 %v2443, 2147483648
        %v3038 = vor.u32 1.1754944e-38, %v3037
        %v3039 = vsel %vm3036, %v3038, %v3034
        %v3040 = vrcp.pop %v2445
        %v3041 = vmul.f32 %v2445, %v3040
        %v3042 = vsub.f32 1.0, %v3041
        %v3043 = vmul.f32 %v3040, %v3042
        %v3044 = vadd.f32 %v3040, %v3043
        %vm3045 = vweird.f32 %v2445
        %vm3046 = vweird.f32 %v3040
        %vm3047 = vmor %vm3045, %vm3046
        %v3048 = vsel %vm3047, %v3040, %v3044
        %v3049 = vand.u32 2147483647, %v2445
        %vm3050 = vcmp.eq.f32.partialorder %v3049, 8.507059e+37
        %v3051 = vand.u32 %v2445, 2147483648
        %v3052 = vor.u32 1.1754944e-38, %v3051
        %v3053 = vsel %vm3050, %v3052, %v3048
        %v3054 = vrcp.pop %v2447
        %v3055 = vmul.f32 %v2447, %v3054
        %v3056 = vsub.f32 1.0, %v3055
        %v3057 = vmul.f32 %v3054, %v3056
        %v3058 = vadd.f32 %v3054, %v3057
        %vm3059 = vweird.f32 %v2447
        %vm3060 = vweird.f32 %v3054
        %vm3061 = vmor %vm3059, %vm3060
        %v3062 = vsel %vm3061, %v3054, %v3058
        %v3063 = vand.u32 2147483647, %v2447
        %vm3064 = vcmp.eq.f32.partialorder %v3063, 8.507059e+37
        %v3065 = vand.u32 %v2447, 2147483648
        %v3066 = vor.u32 1.1754944e-38, %v3065
        %v3067 = vsel %vm3064, %v3066, %v3062
        %v3068 = vrcp.pop %v2449
        %v3069 = vmul.f32 %v2449, %v3068
        %v3070 = vsub.f32 1.0, %v3069
        %v3071 = vmul.f32 %v3068, %v3070
        %v3072 = vadd.f32 %v3068, %v3071
        %vm3073 = vweird.f32 %v2449
        %vm3074 = vweird.f32 %v3068
        %vm3075 = vmor %vm3073, %vm3074
        %v3076 = vsel %vm3075, %v3068, %v3072
        %v3077 = vand.u32 2147483647, %v2449
        %vm3078 = vcmp.eq.f32.partialorder %v3077, 8.507059e+37
        %v3079 = vand.u32 %v2449, 2147483648
        %v3080 = vor.u32 1.1754944e-38, %v3079
        %v3081 = vsel %vm3078, %v3080, %v3076
        %v3082 = vrcp.pop %v2451
        %v3083 = vmul.f32 %v2451, %v3082
        %v3084 = vsub.f32 1.0, %v3083
        %v3085 = vmul.f32 %v3082, %v3084
        %v3086 = vadd.f32 %v3082, %v3085
        %vm3087 = vweird.f32 %v2451
        %vm3088 = vweird.f32 %v3082
        %vm3089 = vmor %vm3087, %vm3088
        %v3090 = vsel %vm3089, %v3082, %v3086
        %v3091 = vand.u32 2147483647, %v2451
        %vm3092 = vcmp.eq.f32.partialorder %v3091, 8.507059e+37
        %v3093 = vand.u32 %v2451, 2147483648
        %v3094 = vor.u32 1.1754944e-38, %v3093
        %v3095 = vsel %vm3092, %v3094, %v3090
        %v3096 = vrcp.pop %v2453
        %v3097 = vmul.f32 %v2453, %v3096
        %v3098 = vsub.f32 1.0, %v3097
        %v3099 = vmul.f32 %v3096, %v3098
        %v3100 = vadd.f32 %v3096, %v3099
        %vm3101 = vweird.f32 %v2453
        %vm3102 = vweird.f32 %v3096
        %vm3103 = vmor %vm3101, %vm3102
        %v3104 = vsel %vm3103, %v3096, %v3100
        %v3105 = vand.u32 2147483647, %v2453
        %vm3106 = vcmp.eq.f32.partialorder %v3105, 8.507059e+37
        %v3107 = vand.u32 %v2453, 2147483648
        %v3108 = vor.u32 1.1754944e-38, %v3107
        %v3109 = vsel %vm3106, %v3108, %v3104
        %v3110 = vrcp.pop %v2455
        %v3111 = vmul.f32 %v2455, %v3110
        %v3112 = vsub.f32 1.0, %v3111
        %v3113 = vmul.f32 %v3110, %v3112
        %v3114 = vadd.f32 %v3110, %v3113
        %vm3115 = vweird.f32 %v2455
        %vm3116 = vweird.f32 %v3110
        %vm3117 = vmor %vm3115, %vm3116
        %v3118 = vsel %vm3117, %v3110, %v3114
        %v3119 = vand.u32 2147483647, %v2455
        %vm3120 = vcmp.eq.f32.partialorder %v3119, 8.507059e+37
        %v3121 = vand.u32 %v2455, 2147483648
        %v3122 = vor.u32 1.1754944e-38, %v3121
        %v3123 = vsel %vm3120, %v3122, %v3118
        %v3124 = vrcp.pop %v2457
        %v3125 = vmul.f32 %v2457, %v3124
        %v3126 = vsub.f32 1.0, %v3125
        %v3127 = vmul.f32 %v3124, %v3126
        %v3128 = vadd.f32 %v3124, %v3127
        %vm3129 = vweird.f32 %v2457
        %vm3130 = vweird.f32 %v3124
        %vm3131 = vmor %vm3129, %vm3130
        %v3132 = vsel %vm3131, %v3124, %v3128
        %v3133 = vand.u32 2147483647, %v2457
        %vm3134 = vcmp.eq.f32.partialorder %v3133, 8.507059e+37
        %v3135 = vand.u32 %v2457, 2147483648
        %v3136 = vor.u32 1.1754944e-38, %v3135
        %v3137 = vsel %vm3134, %v3136, %v3132
        %v3138 = vrcp.pop %v2459
        %v3139 = vmul.f32 %v2459, %v3138
        %v3140 = vsub.f32 1.0, %v3139
        %v3141 = vmul.f32 %v3138, %v3140
        %v3142 = vadd.f32 %v3138, %v3141
        %vm3143 = vweird.f32 %v2459
        %vm3144 = vweird.f32 %v3138
        %vm3145 = vmor %vm3143, %vm3144
        %v3146 = vsel %vm3145, %v3138, %v3142
        %v3147 = vand.u32 2147483647, %v2459
        %vm3148 = vcmp.eq.f32.partialorder %v3147, 8.507059e+37
        %v3149 = vand.u32 %v2459, 2147483648
        %v3150 = vor.u32 1.1754944e-38, %v3149
        %v3151 = vsel %vm3148, %v3150, %v3146
        %v3152 = vrcp.pop %v2461
        %v3153 = vmul.f32 %v2461, %v3152
        %v3154 = vsub.f32 1.0, %v3153
        %v3155 = vmul.f32 %v3152, %v3154
        %v3156 = vadd.f32 %v3152, %v3155
        %vm3157 = vweird.f32 %v2461
        %vm3158 = vweird.f32 %v3152
        %vm3159 = vmor %vm3157, %vm3158
        %v3160 = vsel %vm3159, %v3152, %v3156
        %v3161 = vand.u32 2147483647, %v2461
        %vm3162 = vcmp.eq.f32.partialorder %v3161, 8.507059e+37
        %v3163 = vand.u32 %v2461, 2147483648
        %v3164 = vor.u32 1.1754944e-38, %v3163
        %v3165 = vsel %vm3162, %v3164, %v3160
        %v3166 = vrcp.pop %v2463
        %v3167 = vmul.f32 %v2463, %v3166
        %v3168 = vsub.f32 1.0, %v3167
        %v3169 = vmul.f32 %v3166, %v3168
        %v3170 = vadd.f32 %v3166, %v3169
        %vm3171 = vweird.f32 %v2463
        %vm3172 = vweird.f32 %v3166
        %vm3173 = vmor %vm3171, %vm3172
        %v3174 = vsel %vm3173, %v3166, %v3170
        %v3175 = vand.u32 2147483647, %v2463
        %vm3176 = vcmp.eq.f32.partialorder %v3175, 8.507059e+37
        %v3177 = vand.u32 %v2463, 2147483648
        %v3178 = vor.u32 1.1754944e-38, %v3177
        %v3179 = vsel %vm3176, %v3178, %v3174
        %v3180 = vrcp.pop %v2465
        %v3181 = vmul.f32 %v2465, %v3180
        %v3182 = vsub.f32 1.0, %v3181
        %v3183 = vmul.f32 %v3180, %v3182
        %v3184 = vadd.f32 %v3180, %v3183
        %vm3185 = vweird.f32 %v2465
        %vm3186 = vweird.f32 %v3180
        %vm3187 = vmor %vm3185, %vm3186
        %v3188 = vsel %vm3187, %v3180, %v3184
        %v3189 = vand.u32 2147483647, %v2465
        %vm3190 = vcmp.eq.f32.partialorder %v3189, 8.507059e+37
        %v3191 = vand.u32 %v2465, 2147483648
        %v3192 = vor.u32 1.1754944e-38, %v3191
        %v3193 = vsel %vm3190, %v3192, %v3188
        %v3194 = vrcp.pop %v2467
        %v3195 = vmul.f32 %v2467, %v3194
        %v3196 = vsub.f32 1.0, %v3195
        %v3197 = vmul.f32 %v3194, %v3196
        %v3198 = vadd.f32 %v3194, %v3197
        %vm3199 = vweird.f32 %v2467
        %vm3200 = vweird.f32 %v3194
        %vm3201 = vmor %vm3199, %vm3200
        %v3202 = vsel %vm3201, %v3194, %v3198
        %v3203 = vand.u32 2147483647, %v2467
        %vm3204 = vcmp.eq.f32.partialorder %v3203, 8.507059e+37
        %v3205 = vand.u32 %v2467, 2147483648
        %v3206 = vor.u32 1.1754944e-38, %v3205
        %v3207 = vsel %vm3204, %v3206, %v3202
        %v3208 = vrcp.pop %v2469
        %v3209 = vmul.f32 %v2469, %v3208
        %v3210 = vsub.f32 1.0, %v3209
        %v3211 = vmul.f32 %v3208, %v3210
        %v3212 = vadd.f32 %v3208, %v3211
        %vm3213 = vweird.f32 %v2469
        %vm3214 = vweird.f32 %v3208
        %vm3215 = vmor %vm3213, %vm3214
        %v3216 = vsel %vm3215, %v3208, %v3212
        %v3217 = vand.u32 2147483647, %v2469
        %vm3218 = vcmp.eq.f32.partialorder %v3217, 8.507059e+37
        %v3219 = vand.u32 %v2469, 2147483648
        %v3220 = vor.u32 1.1754944e-38, %v3219
        %v3221 = vsel %vm3218, %v3220, %v3216
        %v3222 = vrcp.pop %v2471
        %v3223 = vmul.f32 %v2471, %v3222
        %v3224 = vsub.f32 1.0, %v3223
        %v3225 = vmul.f32 %v3222, %v3224
        %v3226 = vadd.f32 %v3222, %v3225
        %vm3227 = vweird.f32 %v2471
        %vm3228 = vweird.f32 %v3222
        %vm3229 = vmor %vm3227, %vm3228
        %v3230 = vsel %vm3229, %v3222, %v3226
        %v3231 = vand.u32 2147483647, %v2471
        %vm3232 = vcmp.eq.f32.partialorder %v3231, 8.507059e+37
        %v3233 = vand.u32 %v2471, 2147483648
        %v3234 = vor.u32 1.1754944e-38, %v3233
        %v3235 = vsel %vm3232, %v3234, %v3230
        %v3236 = vrcp.pop %v2473
        %v3237 = vmul.f32 %v2473, %v3236
        %v3238 = vsub.f32 1.0, %v3237
        %v3239 = vmul.f32 %v3236, %v3238
        %v3240 = vadd.f32 %v3236, %v3239
        %vm3241 = vweird.f32 %v2473
        %vm3242 = vweird.f32 %v3236
        %vm3243 = vmor %vm3241, %vm3242
        %v3244 = vsel %vm3243, %v3236, %v3240
        %v3245 = vand.u32 2147483647, %v2473
        %vm3246 = vcmp.eq.f32.partialorder %v3245, 8.507059e+37
        %v3247 = vand.u32 %v2473, 2147483648
        %v3248 = vor.u32 1.1754944e-38, %v3247
        %v3249 = vsel %vm3246, %v3248, %v3244
        %v3250 = vrcp.pop %v2475
        %v3251 = vmul.f32 %v2475, %v3250
        %v3252 = vsub.f32 1.0, %v3251
        %v3253 = vmul.f32 %v3250, %v3252
        %v3254 = vadd.f32 %v3250, %v3253
        %vm3255 = vweird.f32 %v2475
        %vm3256 = vweird.f32 %v3250
        %vm3257 = vmor %vm3255, %vm3256
        %v3258 = vsel %vm3257, %v3250, %v3254
        %v3259 = vand.u32 2147483647, %v2475
        %vm3260 = vcmp.eq.f32.partialorder %v3259, 8.507059e+37
        %v3261 = vand.u32 %v2475, 2147483648
        %v3262 = vor.u32 1.1754944e-38, %v3261
        %v3263 = vsel %vm3260, %v3262, %v3258
        %v3264 = vrcp.pop %v2477
        %v3265 = vmul.f32 %v2477, %v3264
        %v3266 = vsub.f32 1.0, %v3265
        %v3267 = vmul.f32 %v3264, %v3266
        %v3268 = vadd.f32 %v3264, %v3267
        %vm3269 = vweird.f32 %v2477
        %vm3270 = vweird.f32 %v3264
        %vm3271 = vmor %vm3269, %vm3270
        %v3272 = vsel %vm3271, %v3264, %v3268
        %v3273 = vand.u32 2147483647, %v2477
        %vm3274 = vcmp.eq.f32.partialorder %v3273, 8.507059e+37
        %v3275 = vand.u32 %v2477, 2147483648
        %v3276 = vor.u32 1.1754944e-38, %v3275
        %v3277 = vsel %vm3274, %v3276, %v3272
        %v3278 = vrcp.pop %v2479
        %v3279 = vmul.f32 %v2479, %v3278
        %v3280 = vsub.f32 1.0, %v3279
        %v3281 = vmul.f32 %v3278, %v3280
        %v3282 = vadd.f32 %v3278, %v3281
        %vm3283 = vweird.f32 %v2479
        %vm3284 = vweird.f32 %v3278
        %vm3285 = vmor %vm3283, %vm3284
        %v3286 = vsel %vm3285, %v3278, %v3282
        %v3287 = vand.u32 2147483647, %v2479
        %vm3288 = vcmp.eq.f32.partialorder %v3287, 8.507059e+37
        %v3289 = vand.u32 %v2479, 2147483648
        %v3290 = vor.u32 1.1754944e-38, %v3289
        %v3291 = vsel %vm3288, %v3290, %v3286
        %v3292 = vrcp.pop %v2481
        %v3293 = vmul.f32 %v2481, %v3292
        %v3294 = vsub.f32 1.0, %v3293
        %v3295 = vmul.f32 %v3292, %v3294
        %v3296 = vadd.f32 %v3292, %v3295
        %vm3297 = vweird.f32 %v2481
        %vm3298 = vweird.f32 %v3292
        %vm3299 = vmor %vm3297, %vm3298
        %v3300 = vsel %vm3299, %v3292, %v3296
        %v3301 = vand.u32 2147483647, %v2481
        %vm3302 = vcmp.eq.f32.partialorder %v3301, 8.507059e+37
        %v3303 = vand.u32 %v2481, 2147483648
        %v3304 = vor.u32 1.1754944e-38, %v3303
        %v3305 = vsel %vm3302, %v3304, %v3300
        %v3306 = vrcp.pop %v2483
        %v3307 = vmul.f32 %v2483, %v3306
        %v3308 = vsub.f32 1.0, %v3307
        %v3309 = vmul.f32 %v3306, %v3308
        %v3310 = vadd.f32 %v3306, %v3309
        %vm3311 = vweird.f32 %v2483
        %vm3312 = vweird.f32 %v3306
        %vm3313 = vmor %vm3311, %vm3312
        %v3314 = vsel %vm3313, %v3306, %v3310
        %v3315 = vand.u32 2147483647, %v2483
        %vm3316 = vcmp.eq.f32.partialorder %v3315, 8.507059e+37
        %v3317 = vand.u32 %v2483, 2147483648
        %v3318 = vor.u32 1.1754944e-38, %v3317
        %v3319 = vsel %vm3316, %v3318, %v3314
        %v3320 = vrcp.pop %v2485
        %v3321 = vmul.f32 %v2485, %v3320
        %v3322 = vsub.f32 1.0, %v3321
        %v3323 = vmul.f32 %v3320, %v3322
        %v3324 = vadd.f32 %v3320, %v3323
        %vm3325 = vweird.f32 %v2485
        %vm3326 = vweird.f32 %v3320
        %vm3327 = vmor %vm3325, %vm3326
        %v3328 = vsel %vm3327, %v3320, %v3324
        %v3329 = vand.u32 2147483647, %v2485
        %vm3330 = vcmp.eq.f32.partialorder %v3329, 8.507059e+37
        %v3331 = vand.u32 %v2485, 2147483648
        %v3332 = vor.u32 1.1754944e-38, %v3331
        %v3333 = vsel %vm3330, %v3332, %v3328
        %v3334 = vrcp.pop %v2487
        %v3335 = vmul.f32 %v2487, %v3334
        %v3336 = vsub.f32 1.0, %v3335
        %v3337 = vmul.f32 %v3334, %v3336
        %v3338 = vadd.f32 %v3334, %v3337
        %vm3339 = vweird.f32 %v2487
        %vm3340 = vweird.f32 %v3334
        %vm3341 = vmor %vm3339, %vm3340
        %v3342 = vsel %vm3341, %v3334, %v3338
        %v3343 = vand.u32 2147483647, %v2487
        %vm3344 = vcmp.eq.f32.partialorder %v3343, 8.507059e+37
        %v3345 = vand.u32 %v2487, 2147483648
        %v3346 = vor.u32 1.1754944e-38, %v3345
        %v3347 = vsel %vm3344, %v3346, %v3342
        %v3348 = vrcp.pop %v2489
        %v3349 = vmul.f32 %v2489, %v3348
        %v3350 = vsub.f32 1.0, %v3349
        %v3351 = vmul.f32 %v3348, %v3350
        %v3352 = vadd.f32 %v3348, %v3351
        %vm3353 = vweird.f32 %v2489
        %vm3354 = vweird.f32 %v3348
        %vm3355 = vmor %vm3353, %vm3354
        %v3356 = vsel %vm3355, %v3348, %v3352
        %v3357 = vand.u32 2147483647, %v2489
        %vm3358 = vcmp.eq.f32.partialorder %v3357, 8.507059e+37
        %v3359 = vand.u32 %v2489, 2147483648
        %v3360 = vor.u32 1.1754944e-38, %v3359
        %v3361 = vsel %vm3358, %v3360, %v3356
        %v3362 = vrcp.pop %v2491
        %v3363 = vmul.f32 %v2491, %v3362
        %v3364 = vsub.f32 1.0, %v3363
        %v3365 = vmul.f32 %v3362, %v3364
        %v3366 = vadd.f32 %v3362, %v3365
        %vm3367 = vweird.f32 %v2491
        %vm3368 = vweird.f32 %v3362
        %vm3369 = vmor %vm3367, %vm3368
        %v3370 = vsel %vm3369, %v3362, %v3366
        %v3371 = vand.u32 2147483647, %v2491
        %vm3372 = vcmp.eq.f32.partialorder %v3371, 8.507059e+37
        %v3373 = vand.u32 %v2491, 2147483648
        %v3374 = vor.u32 1.1754944e-38, %v3373
        %v3375 = vsel %vm3372, %v3374, %v3370
        %v3376 = vrcp.pop %v2493
        %v3377 = vmul.f32 %v2493, %v3376
        %v3378 = vsub.f32 1.0, %v3377
        %v3379 = vmul.f32 %v3376, %v3378
        %v3380 = vadd.f32 %v3376, %v3379
        %vm3381 = vweird.f32 %v2493
        %vm3382 = vweird.f32 %v3376
        %vm3383 = vmor %vm3381, %vm3382
        %v3384 = vsel %vm3383, %v3376, %v3380
        %v3385 = vand.u32 2147483647, %v2493
        %vm3386 = vcmp.eq.f32.partialorder %v3385, 8.507059e+37
        %v3387 = vand.u32 %v2493, 2147483648
        %v3388 = vor.u32 1.1754944e-38, %v3387
        %v3389 = vsel %vm3386, %v3388, %v3384
        %v3390 = vmul.f32 %v2239, %v2507
        %v3391 = vmul.f32 %v2241, %v2521
        %v3392 = vmul.f32 %v2243, %v2535
        %v3393 = vmul.f32 %v2245, %v2549
        %v3394 = vmul.f32 %v2247, %v2563
        %v3395 = vmul.f32 %v2249, %v2577
        %v3396 = vmul.f32 %v2251, %v2591
        %v3397 = vmul.f32 %v2253, %v2605
        %v3398 = vmul.f32 %v2255, %v2619
        %v3399 = vmul.f32 %v2257, %v2633
        %v3400 = vmul.f32 %v2259, %v2647
        %v3401 = vmul.f32 %v2261, %v2661
        %v3402 = vmul.f32 %v2263, %v2675
        %v3403 = vmul.f32 %v2265, %v2689
        %v3404 = vmul.f32 %v2267, %v2703
        %v3405 = vmul.f32 %v2269, %v2717
        %v3406 = vmul.f32 %v2271, %v2731
        %v3407 = vmul.f32 %v2273, %v2745
        %v3408 = vmul.f32 %v2275, %v2759
        %v3409 = vmul.f32 %v2277, %v2773
        %v3410 = vmul.f32 %v2279, %v2787
        %v3411 = vmul.f32 %v2281, %v2801
        %v3412 = vmul.f32 %v2283, %v2815
        %v3413 = vmul.f32 %v2285, %v2829
        %v3414 = vmul.f32 %v2287, %v2843
        %v3415 = vmul.f32 %v2289, %v2857
        %v3416 = vmul.f32 %v2291, %v2871
        %v3417 = vmul.f32 %v2293, %v2885
        %v3418 = vmul.f32 %v2295, %v2899
        %v3419 = vmul.f32 %v2297, %v2913
        %v3420 = vmul.f32 %v2299, %v2927
        %v3421 = vmul.f32 %v2301, %v2941
        %v3422 = vmul.f32 %v2303, %v2955
        %v3423 = vmul.f32 %v2305, %v2969
        %v3424 = vmul.f32 %v2307, %v2983
        %v3425 = vmul.f32 %v2309, %v2997
        %v3426 = vmul.f32 %v2311, %v3011
        %v3427 = vmul.f32 %v2313, %v3025
        %v3428 = vmul.f32 %v2315, %v3039
        %v3429 = vmul.f32 %v2317, %v3053
        %v3430 = vmul.f32 %v2319, %v3067
        %v3431 = vmul.f32 %v2321, %v3081
        %v3432 = vmul.f32 %v2323, %v3095
        %v3433 = vmul.f32 %v2325, %v3109
        %v3434 = vmul.f32 %v2327, %v3123
        %v3435 = vmul.f32 %v2329, %v3137
        %v3436 = vmul.f32 %v2331, %v3151
        %v3437 = vmul.f32 %v2333, %v3165
        %v3438 = vmul.f32 %v2335, %v3179
        %v3439 = vmul.f32 %v2337, %v3193
        %v3440 = vmul.f32 %v2339, %v3207
        %v3441 = vmul.f32 %v2341, %v3221
        %v3442 = vmul.f32 %v2343, %v3235
        %v3443 = vmul.f32 %v2345, %v3249
        %v3444 = vmul.f32 %v2347, %v3263
        %v3445 = vmul.f32 %v2349, %v3277
        %v3446 = vmul.f32 %v2351, %v3291
        %v3447 = vmul.f32 %v2353, %v3305
        %v3448 = vmul.f32 %v2355, %v3319
        %v3449 = vmul.f32 %v2357, %v3333
        %v3450 = vmul.f32 %v2359, %v3347
        %v3451 = vmul.f32 %v2361, %v3361
        %v3452 = vmul.f32 %v2363, %v3375
        %v3453 = vmul.f32 %v2365, %v3389
        %3454 = vst [vmem:[%s220] sm:$0xff] %v3390
        %3455 = vst [vmem:[%s220 + $0x8] sm:$0xff] %v3391
        %3456 = vst [vmem:[%s220 + $0x10] sm:$0xff] %v3392
        %3457 = vst [vmem:[%s220 + $0x18] sm:$0xff] %v3393
        %3458 = vst [vmem:[%s220 + $0x20] sm:$0xff] %v3394
        %3459 = vst [vmem:[%s220 + $0x28] sm:$0xff] %v3395
        %3460 = vst [vmem:[%s220 + $0x30] sm:$0xff] %v3396
        %3461 = vst [vmem:[%s220 + $0x38] sm:$0xff] %v3397
        %3462 = vst [vmem:[%s220 + $0x40] sm:$0xff] %v3398
        %3463 = vst [vmem:[%s220 + $0x48] sm:$0xff] %v3399
        %3464 = vst [vmem:[%s220 + $0x50] sm:$0xff] %v3400
        %3465 = vst [vmem:[%s220 + $0x58] sm:$0xff] %v3401
        %3466 = vst [vmem:[%s220 + $0x60] sm:$0xff] %v3402
        %3467 = vst [vmem:[%s220 + $0x68] sm:$0xff] %v3403
        %3468 = vst [vmem:[%s220 + $0x70] sm:$0xff] %v3404
        %3469 = vst [vmem:[%s220 + $0x78] sm:$0xff] %v3405
        %3470 = vst [vmem:[%s220 + $0x80] sm:$0xff] %v3406
        %3471 = vst [vmem:[%s220 + $0x88] sm:$0xff] %v3407
        %3472 = vst [vmem:[%s220 + $0x90] sm:$0xff] %v3408
        %3473 = vst [vmem:[%s220 + $0x98] sm:$0xff] %v3409
        %3474 = vst [vmem:[%s220 + $0xa0] sm:$0xff] %v3410
        %3475 = vst [vmem:[%s220 + $0xa8] sm:$0xff] %v3411
        %3476 = vst [vmem:[%s220 + $0xb0] sm:$0xff] %v3412
        %3477 = vst [vmem:[%s220 + $0xb8] sm:$0xff] %v3413
        %3478 = vst [vmem:[%s220 + $0xc0] sm:$0xff] %v3414
        %3479 = vst [vmem:[%s220 + $0xc8] sm:$0xff] %v3415
        %3480 = vst [vmem:[%s220 + $0xd0] sm:$0xff] %v3416
        %3481 = vst [vmem:[%s220 + $0xd8] sm:$0xff] %v3417
        %3482 = vst [vmem:[%s220 + $0xe0] sm:$0xff] %v3418
        %3483 = vst [vmem:[%s220 + $0xe8] sm:$0xff] %v3419
        %3484 = vst [vmem:[%s220 + $0xf0] sm:$0xff] %v3420
        %3485 = vst [vmem:[%s220 + $0xf8] sm:$0xff] %v3421
        %3486 = vst [vmem:[%s220 + $0x100] sm:$0xff] %v3422
        %3487 = vst [vmem:[%s220 + $0x108] sm:$0xff] %v3423
        %3488 = vst [vmem:[%s220 + $0x110] sm:$0xff] %v3424
        %3489 = vst [vmem:[%s220 + $0x118] sm:$0xff] %v3425
        %3490 = vst [vmem:[%s220 + $0x120] sm:$0xff] %v3426
        %3491 = vst [vmem:[%s220 + $0x128] sm:$0xff] %v3427
        %3492 = vst [vmem:[%s220 + $0x130] sm:$0xff] %v3428
        %3493 = vst [vmem:[%s220 + $0x138] sm:$0xff] %v3429
        %3494 = vst [vmem:[%s220 + $0x140] sm:$0xff] %v3430
        %3495 = vst [vmem:[%s220 + $0x148] sm:$0xff] %v3431
        %3496 = vst [vmem:[%s220 + $0x150] sm:$0xff] %v3432
        %3497 = vst [vmem:[%s220 + $0x158] sm:$0xff] %v3433
        %3498 = vst [vmem:[%s220 + $0x160] sm:$0xff] %v3434
        %3499 = vst [vmem:[%s220 + $0x168] sm:$0xff] %v3435
        %3500 = vst [vmem:[%s220 + $0x170] sm:$0xff] %v3436
        %3501 = vst [vmem:[%s220 + $0x178] sm:$0xff] %v3437
        %3502 = vst [vmem:[%s220 + $0x180] sm:$0xff] %v3438
        %3503 = vst [vmem:[%s220 + $0x188] sm:$0xff] %v3439
        %3504 = vst [vmem:[%s220 + $0x190] sm:$0xff] %v3440
        %3505 = vst [vmem:[%s220 + $0x198] sm:$0xff] %v3441
        %3506 = vst [vmem:[%s220 + $0x1a0] sm:$0xff] %v3442
        %3507 = vst [vmem:[%s220 + $0x1a8] sm:$0xff] %v3443
        %3508 = vst [vmem:[%s220 + $0x1b0] sm:$0xff] %v3444
        %3509 = vst [vmem:[%s220 + $0x1b8] sm:$0xff] %v3445
        %3510 = vst [vmem:[%s220 + $0x1c0] sm:$0xff] %v3446
        %3511 = vst [vmem:[%s220 + $0x1c8] sm:$0xff] %v3447
        %3512 = vst [vmem:[%s220 + $0x1d0] sm:$0xff] %v3448
        %3513 = vst [vmem:[%s220 + $0x1d8] sm:$0xff] %v3449
        %3514 = vst [vmem:[%s220 + $0x1e0] sm:$0xff] %v3450
        %3515 = vst [vmem:[%s220 + $0x1e8] sm:$0xff] %v3451
        %3516 = vst [vmem:[%s220 + $0x1f0] sm:$0xff] %v3452
        %3517 = vst [vmem:[%s220 + $0x1f8] sm:$0xff] %v3453
        %s3518 = sand.u32 %s137, 1
        %s3519 = scalar_lea.sflag [#allocation3], %s3518
        %s3520 = sand.u32 %s137, 1
        %s3521 = smul.addr %s3520, 512
        %s3522 = scalar_lea.vmem [#allocation2], %s3521
        // Predicated region
        $region41: #{tpu_custom_call.1} parent=39 // pred_check
          %p3523 = pneg %p147
        $region42: #{tpu_custom_call.1} parent=39 // pred_check_branch
          %3525 = sbr.rel (%p3523) target = $region44
        $region43: #{tpu_custom_call.1} parent=39 // pred_region
          %s3526 = smul.u32 64, %s19
          %3528 = vsyncadd %s3519, 0
          %s3529 = smul.addr %s3526, 8
          %s3530 = scalar_lea.hbm %s5, %s3529
          %s3531 = sshll.u32 %s3522, 4
          %s3532 = int_to_ptr.vmem [resolvable:$true] %s3531
          %s3533 = sshll.u32 %s3530, 4
          %s3534 = int_to_ptr.hbm [resolvable:$true] %s3533
          %3539 = dma.vmem_to_hbm [thread:$0]  %s3532, 8192, %s3534, %s3519, 128, 128, 8
        $region44: #{tpu_custom_call.1} parent=39 // pred_fallthru
          _
      $region40: #{tpu_custom_call.1} parent=5 // pred_fallthru
        _
      %p3540 = scmp.le.s32.totalorder 2, %s14
      // Predicated region
      $region45: #{tpu_custom_call.1} parent=5 // pred_check
        %p3541 = pneg %p3540
      $region46: #{tpu_custom_call.1} parent=5 // pred_check_branch
        %3543 = sbr.rel (%p3541) target = $region48
      $region47: #{tpu_custom_call.1} parent=5 // pred_region
        %s3544 = ssub.s32 %s14, 2
        // Predicated region
        $region49: #{tpu_custom_call.1} parent=47 // pred_check
          %p3545 = pneg %p153
        $region50: #{tpu_custom_call.1} parent=47 // pred_check_branch
          %3547 = sbr.rel (%p3545) target = $region52
        $region51: #{tpu_custom_call.1} parent=47 // pred_region
          %s3548 = sand.u32 %s138, 1
          %s3549 = scalar_lea.sflag [#allocation3], %s3548
          %s3550 = sand.u32 %s138, 1
          %s3551 = smul.addr %s3550, 512
          %s3552 = scalar_lea.vmem [#allocation2], %s3551
          %3554 = dma.done %s3549, 8192
        $region52: #{tpu_custom_call.1} parent=47 // pred_fallthru
          _
      $region48: #{tpu_custom_call.1} parent=5 // pred_fallthru
        _
    $region6: #{tpu_custom_call.1} parent=1 // loop_footer
      %s18 = sadd.s32 1, %s14
    $region7: #{tpu_custom_call.1} parent=1 // loop_footer_branch
      %13 = sbr.rel target = $region3
    $region8: #{tpu_custom_call.1} parent=1 // loop_exit
      _
    %3555 = vsyncpa [#allocation3], 1
    %s3556 = scalar_lea.sflag [#allocation3], 1
    %3557 = vsyncpa %s3556, 1

</llo_original>
